<compile_context>
chip_gen: v5e
topology: v5e:2x2
jax: 0.10.0
libtpu: 0.0.40
codegen_flags: <defaults>
</compile_context>

<pallas_src>
from functools import partial

import jax
import jax.numpy as jnp
from jax.experimental import pallas as pl
from jax.experimental.pallas import tpu as pltpu


# ----------------------------------------------------------------------------
# Fused forward kernel: one batch chunk (block_batch molecules) per grid step.
#   x_ref   : (1, rows, Fp)      bf16 node features, node-major permuted rows
#   a_ref   : (1, rows, rows)    bf16 block-diagonal adjacency for the chunk
#   w*/b*   : padded weights (bf16) / biases (f32)
#   out_ref : (block_batch, Cp)  f32 sigmoid outputs (padding sliced in wrapper)
# where rows = block_batch * n_nodes and row index = n * block_batch + b.
# ----------------------------------------------------------------------------
def gcn_fused_kernel(x_ref, a_ref, w1_ref, b1_ref, w2_ref, b2_ref,
                     wl1_ref, bl1_ref, wl2_ref, bl2_ref, out_ref):
    bf16, f32 = jnp.bfloat16, jnp.float32
    n_nodes = wl1_ref.shape[0]
    rows = x_ref.shape[1]
    bb = rows // n_nodes                     # molecules in this chunk

    x = x_ref[0]                             # (rows, Fp) bf16 (cast in wrapper)
    a = a_ref[0]                             # (rows, rows) bf16 block-diagonal

    # ---- GCN layer 1: relu( A @ (X @ W1) + b1 ) ----
    xw = jnp.dot(x, w1_ref[...], preferred_element_type=f32)          # (rows,H1p)
    h = jnp.dot(a, xw.astype(bf16), preferred_element_type=f32)
    h = jnp.maximum(h + b1_ref[...], 0.0).astype(bf16)                # one cast

    # ---- GCN layer 2: relu( A @ (h1 @ W2) + b2 ) ----
    xw = jnp.dot(h, w2_ref[...], preferred_element_type=f32)
    h = jnp.dot(a, xw.astype(bf16), preferred_element_type=f32)
    h = jnp.maximum(h + b2_ref[...], 0.0).astype(bf16)                # (rows,H2p)

    # ---- flatten (node-major per molecule) + linear1 + relu ----
    # z[b] = sum_n h2[b, n, :] @ Wl1[n]; with node-major rows each node's block
    # h[n*bb:(n+1)*bb] is a contiguous, (16,128)-tile-aligned slice (bb=32).
    # h is cast to bf16 exactly once above; acc starts from the n=0 dot.
    acc = jnp.dot(h[0:bb, :], wl1_ref[0], preferred_element_type=f32)
    for n in range(1, n_nodes):              # static unroll, n_nodes is small
        acc = acc + jnp.dot(h[n * bb:(n + 1) * bb, :], wl1_ref[n],
                            preferred_element_type=f32)
    z = jnp.maximum(acc + bl1_ref[...], 0.0)                          # (bb, H3p)

    # ---- linear2 + sigmoid ----
    y = jnp.dot(z.astype(bf16), wl2_ref[...],
                preferred_element_type=f32) + bl2_ref[...]
    out_ref[...] = jax.nn.sigmoid(y)                                  # (bb, Cp)


# ----------------------------------------------------------------------------
# Parameter preparation: pad every feature dim (including the input dim) to a
# multiple of 128 (lane-dense) and cast weights to bf16. Zero padding keeps the
# math exactly equivalent; padded output lanes are sliced off in the wrapper.
# ----------------------------------------------------------------------------
def _round_up(v, m):
    return (v + m - 1) // m * m


def prepare_params(params):
    f32, bf16 = jnp.float32, jnp.bfloat16
    w1, b1 = params["w1"], params["b1"]
    w2, b2 = params["w2"], params["b2"]
    wl1, bl1 = params["wl1"], params["bl1"]
    wl2, bl2 = params["wl2"], params["bl2"]

    fin, h1 = w1.shape
    h2 = w2.shape[1]
    h3 = wl1.shape[1]
    c = wl2.shape[1]
    n_nodes = wl1.shape[0] // h2

    finp, h1p, h2p, h3p, cp = (_round_up(d, 128) for d in (fin, h1, h2, h3, c))

    def pad_to(a, shape):
        return jnp.pad(a, [(0, s - d) for s, d in zip(shape, a.shape)])

    return {
        "w1": pad_to(w1, (finp, h1p)).astype(bf16),
        "b1": pad_to(b1.reshape(1, h1), (1, h1p)).astype(f32),
        "w2": pad_to(w2, (h1p, h2p)).astype(bf16),
        "b2": pad_to(b2.reshape(1, h2), (1, h2p)).astype(f32),
        # (N*150, 100) -> (N, 256, 128): row n*150+f of Wl1 lands at [n, f, :].
        "wl1": pad_to(wl1.reshape(n_nodes, h2, h3),
                      (n_nodes, h2p, h3p)).astype(bf16),
        "bl1": pad_to(bl1.reshape(1, h3), (1, h3p)).astype(f32),
        "wl2": pad_to(wl2, (h3p, cp)).astype(bf16),
        "bl2": pad_to(bl2.reshape(1, c), (1, cp)).astype(f32),
    }


def _pick_block_batch(batch, n_nodes, target_rows=256):
    """Molecules per grid step.

    target_rows=256 is the unified sweet spot: caps the dense block-diagonal
    waste on v5e, fills the 256-wide v6e/v7x MXU, and (for the demo batch)
    yields G=2 'parallel' steps -> one per v7x TensorCore.  bb is kept a
    multiple of 16 (bf16 sublane tile) so the in-kernel per-node row slices are
    tile aligned; the batch is zero-padded up to a multiple of bb in the
    wrapper instead of shrinking bb to an awkward divisor."""
    bb = max(1, target_rows // max(n_nodes, 1))
    if bb >= 16:
        bb = (bb // 16) * 16
        bb = min(bb, max(_round_up(batch, 16), 16))
    else:
        bb = min(bb, batch)
    return max(bb, 1)


# ----------------------------------------------------------------------------
# Full model forward (single fused pallas_call; only layout permutation of the
# inputs, bf16 casts, and slicing off the zero padding are plain-JAX glue).
# ----------------------------------------------------------------------------
@partial(jax.jit, static_argnames=("output_channels",))
def gcn_forward(pp, nodes, adj, *, output_channels):
    # TODO(synk): this follows the example's dense A @ X @ W formulation; if the
    # reference GCNConv applies D^-1/2 (A+I) D^-1/2 normalization, pre-normalize
    # `adj` before calling (the kernel treats `adj` as the dense operator).
    bf16 = jnp.bfloat16
    B, N, Fin = nodes.shape
    Fp = pp["w1"].shape[0]
    h1p, h2p = pp["w2"].shape
    h3p, cp = pp["wl2"].shape

    bb = _pick_block_batch(B, N)             # molecules per grid step
    G = -(-B // bb)                          # grid steps (2 for the demo batch)
    Bp = G * bb                              # zero-padded batch
    rows = bb * N                            # rows per step (256 for the demo)

    # Zero-pad batch (padded molecules produce dummy rows, sliced off below)
    # and the input-feature dim (lane-dense first matmul operand).
    nodes_p = jnp.pad(nodes, ((0, Bp - B), (0, 0), (0, Fp - Fin)))
    adj_p = jnp.pad(adj, ((0, Bp - B), (0, 0), (0, 0)))

    # Node-major permuted rows per chunk (row = n*bb + b), already bf16.
    x_perm = jnp.transpose(nodes_p.reshape(G, bb, N, Fp),
                           (0, 2, 1, 3)).reshape(G, rows, Fp).astype(bf16)
    # Block-diagonal adjacency in the same permuted basis, built directly in
    # bf16 (exact for 0/1 adjacency) -> halves the largest per-step DMA.
    eye_b = jnp.eye(bb, dtype=bf16)
    a_perm = (jnp.transpose(adj_p.reshape(G, bb, N, N),
                            (0, 2, 1, 3)).astype(bf16)[..., None]
              * eye_b[None, None, :, None, :]).reshape(G, rows, rows)

    # Advisory cost estimate so XLA schedules surrounding glue ops sensibly.
    flops_chunk = 2 * (rows * Fp * h1p + rows * rows * h1p
                       + rows * h1p * h2p + rows * rows * h2p
                       + N * bb * h2p * h3p + bb * h3p * cp)
    weight_bytes = sum(int(v.size) * v.dtype.itemsize for v in pp.values())
    bytes_accessed = (int(x_perm.size) * 2 + int(a_perm.size) * 2
                      + weight_bytes + Bp * cp * 4)
    cost = pl.CostEstimate(flops=G * flops_chunk,
                           transcendentals=Bp * cp,
                           bytes_accessed=bytes_accessed)

    out = pl.pallas_call(
        gcn_fused_kernel,
        out_shape=jax.ShapeDtypeStruct((Bp, cp), jnp.float32),
        grid=(G,),
        in_specs=[
            pl.BlockSpec((1, rows, Fp), lambda i: (i, 0, 0)),
            pl.BlockSpec((1, rows, rows), lambda i: (i, 0, 0)),
            pl.BlockSpec(pp["w1"].shape, lambda i: (0, 0)),
            pl.BlockSpec(pp["b1"].shape, lambda i: (0, 0)),
            pl.BlockSpec(pp["w2"].shape, lambda i: (0, 0)),
            pl.BlockSpec(pp["b2"].shape, lambda i: (0, 0)),
            pl.BlockSpec(pp["wl1"].shape, lambda i: (0, 0, 0)),
            pl.BlockSpec(pp["bl1"].shape, lambda i: (0, 0)),
            pl.BlockSpec(pp["wl2"].shape, lambda i: (0, 0)),
            pl.BlockSpec(pp["bl2"].shape, lambda i: (0, 0)),
        ],
        out_specs=pl.BlockSpec((bb, cp), lambda i: (i, 0)),
        compiler_params=pltpu.CompilerParams(
            dimension_semantics=("parallel",)),
        cost_estimate=cost,
    )(x_perm, a_perm, pp["w1"], pp["b1"], pp["w2"], pp["b2"],
      pp["wl1"], pp["bl1"], pp["wl2"], pp["bl2"])

    return out[:B, :output_channels]


def init_params(key, max_atom_types, n_nodes, output_channels):
    H1, H2, H3 = 200, 150, 100
    ks = jax.random.split(key, 4)

    def w(k, fan_in, fan_out):
        return (jax.random.normal(k, (fan_in, fan_out), jnp.float32)
                * (1.0 / jnp.sqrt(fan_in)))

    return {
        "w1": w(ks[0], max_atom_types, H1),
        "b1": jnp.zeros((H1,), jnp.float32),
        "w2": w(ks[1], H1, H2),
        "b2": jnp.zeros((H2,), jnp.float32),
        "wl1": w(ks[2], n_nodes * H2, H3),
        "bl1": jnp.zeros((H3,), jnp.float32),
        "wl2": w(ks[3], H3, output_channels),
        "bl2": jnp.zeros((output_channels,), jnp.float32),
    }


if __name__ == "__main__":
    key = jax.random.PRNGKey(0)
    B = 64                   # batch of molecules (-> 2 parallel 256-row steps)
    N = 8                    # max atoms per molecule
    MAX_ATOM_TYPES = 16      # input node feature dim
    OUTPUT_CHANNELS = 12     # tox21 tasks

    k_nodes, k_adj, k_params = jax.random.split(key, 3)

    # Node features: soft one-hot-like random features (B, N, F).
    nodes = jax.random.uniform(k_nodes, (B, N, MAX_ATOM_TYPES), jnp.float32)

    # Symmetric adjacency with self-loops (B, N, N).
    raw = jax.random.uniform(k_adj, (B, N, N), jnp.float32)
    adj = (raw + jnp.swapaxes(raw, 1, 2)) * 0.5
    adj = (adj > 0.5).astype(jnp.float32)
    adj = jnp.maximum(adj, jnp.eye(N, dtype=jnp.float32)[None])

    params = init_params(k_params, MAX_ATOM_TYPES, N, OUTPUT_CHANNELS)
    prepped = prepare_params(params)

    out = gcn_forward(prepped, nodes, adj, output_channels=OUTPUT_CHANNELS)
    out = jax.block_until_ready(out)

    assert out.shape == (B, OUTPUT_CHANNELS)
    assert bool(jnp.all((out >= 0.0) & (out <= 1.0)))
    print("KERNEL_OK")
</pallas_src>

<mosaic_0001>
module attributes {stable_mosaic.version = 11 : i64} {
  func.func @gcn_fused_kernel(%arg0: i32, %arg1: memref<1x256x128xbf16, #tpu.memory_space<vmem>>, %arg2: memref<1x256x256xbf16, #tpu.memory_space<vmem>>, %arg3: memref<128x256xbf16, #tpu.memory_space<vmem>>, %arg4: memref<1x256xf32, #tpu.memory_space<vmem>>, %arg5: memref<256x256xbf16, #tpu.memory_space<vmem>>, %arg6: memref<1x256xf32, #tpu.memory_space<vmem>>, %arg7: memref<8x256x128xbf16, #tpu.memory_space<vmem>>, %arg8: memref<1x128xf32, #tpu.memory_space<vmem>>, %arg9: memref<128x128xbf16, #tpu.memory_space<vmem>>, %arg10: memref<1x128xf32, #tpu.memory_space<vmem>>, %arg11: memref<32x128xf32, #tpu.memory_space<vmem>>) attributes {dimension_semantics = [#tpu.dimension_semantics<parallel>], iteration_bounds = array<i64: 2>, scalar_prefetch = 0 : i64, scratch_operands = 0 : i64, tpu.core_type = #tpu.core_type<tc>, window_params = [{transform_indices = @transform_0, window_bounds = array<i64: 1, 256, 128>}, {transform_indices = @transform_1, window_bounds = array<i64: 1, 256, 256>}, {pipeline_mode = #tpu.pipeline_mode<synchronous>, transform_indices = @transform_2, window_bounds = array<i64: 128, 256>}, {pipeline_mode = #tpu.pipeline_mode<synchronous>, transform_indices = @transform_3, window_bounds = array<i64: 1, 256>}, {pipeline_mode = #tpu.pipeline_mode<synchronous>, transform_indices = @transform_4, window_bounds = array<i64: 256, 256>}, {pipeline_mode = #tpu.pipeline_mode<synchronous>, transform_indices = @transform_5, window_bounds = array<i64: 1, 256>}, {pipeline_mode = #tpu.pipeline_mode<synchronous>, transform_indices = @transform_6, window_bounds = array<i64: 8, 256, 128>}, {pipeline_mode = #tpu.pipeline_mode<synchronous>, transform_indices = @transform_7, window_bounds = array<i64: 1, 128>}, {pipeline_mode = #tpu.pipeline_mode<synchronous>, transform_indices = @transform_8, window_bounds = array<i64: 128, 128>}, {pipeline_mode = #tpu.pipeline_mode<synchronous>, transform_indices = @transform_9, window_bounds = array<i64: 1, 128>}, {transform_indices = @transform_10, window_bounds = array<i64: 32, 128>}]} {
    %c0 = arith.constant 0 : index
    %c0_0 = arith.constant 0 : index
    %c0_1 = arith.constant 0 : index
    %0 = vector.load %arg1[%c0, %c0_0, %c0_1] : memref<1x256x128xbf16, #tpu.memory_space<vmem>>, vector<1x256x128xbf16>
    %1 = vector.shape_cast %0 : vector<1x256x128xbf16> to vector<256x128xbf16>
    %c0_2 = arith.constant 0 : index
    %c0_3 = arith.constant 0 : index
    %c0_4 = arith.constant 0 : index
    %2 = vector.load %arg2[%c0_2, %c0_3, %c0_4] : memref<1x256x256xbf16, #tpu.memory_space<vmem>>, vector<1x256x256xbf16>
    %3 = vector.shape_cast %2 : vector<1x256x256xbf16> to vector<256x256xbf16>
    %c0_5 = arith.constant 0 : index
    %c0_6 = arith.constant 0 : index
    %4 = vector.load %arg3[%c0_5, %c0_6] : memref<128x256xbf16, #tpu.memory_space<vmem>>, vector<128x256xbf16>
    %cst = arith.constant dense<0.000000e+00> : vector<256x256xf32>
    %5 = tpu.matmul %1, %4, %cst {dimension_numbers = #tpu.dot_dimension_numbers<[1], [0], [0], [1], [0, 0, 1, 1], [], []>} : vector<256x128xbf16>, vector<128x256xbf16>, vector<256x256xf32> -> vector<256x256xf32>
    %6 = arith.truncf %5 : vector<256x256xf32> to vector<256x256xbf16>
    %cst_7 = arith.constant dense<0.000000e+00> : vector<256x256xf32>
    %7 = tpu.matmul %3, %6, %cst_7 {dimension_numbers = #tpu.dot_dimension_numbers<[1], [0], [0], [1], [0, 0, 1, 1], [], []>} : vector<256x256xbf16>, vector<256x256xbf16>, vector<256x256xf32> -> vector<256x256xf32>
    %c0_8 = arith.constant 0 : index
    %c0_9 = arith.constant 0 : index
    %8 = vector.load %arg4[%c0_8, %c0_9] : memref<1x256xf32, #tpu.memory_space<vmem>>, vector<1x256xf32>
    %9 = vector.broadcast %8 : vector<1x256xf32> to vector<256x256xf32>
    %10 = arith.addf %7, %9 : vector<256x256xf32>
    %cst_10 = arith.constant 0.000000e+00 : f32
    %11 = vector.broadcast %cst_10 : f32 to vector<256x256xf32>
    %12 = arith.maximumf %10, %11 : vector<256x256xf32>
    %13 = arith.truncf %12 : vector<256x256xf32> to vector<256x256xbf16>
    %c0_11 = arith.constant 0 : index
    %c0_12 = arith.constant 0 : index
    %14 = vector.load %arg5[%c0_11, %c0_12] : memref<256x256xbf16, #tpu.memory_space<vmem>>, vector<256x256xbf16>
    %cst_13 = arith.constant dense<0.000000e+00> : vector<256x256xf32>
    %15 = tpu.matmul %13, %14, %cst_13 {dimension_numbers = #tpu.dot_dimension_numbers<[1], [0], [0], [1], [0, 0, 1, 1], [], []>} : vector<256x256xbf16>, vector<256x256xbf16>, vector<256x256xf32> -> vector<256x256xf32>
    %16 = arith.truncf %15 : vector<256x256xf32> to vector<256x256xbf16>
    %cst_14 = arith.constant dense<0.000000e+00> : vector<256x256xf32>
    %17 = tpu.matmul %3, %16, %cst_14 {dimension_numbers = #tpu.dot_dimension_numbers<[1], [0], [0], [1], [0, 0, 1, 1], [], []>} : vector<256x256xbf16>, vector<256x256xbf16>, vector<256x256xf32> -> vector<256x256xf32>
    %c0_15 = arith.constant 0 : index
    %c0_16 = arith.constant 0 : index
    %18 = vector.load %arg6[%c0_15, %c0_16] : memref<1x256xf32, #tpu.memory_space<vmem>>, vector<1x256xf32>
    %19 = vector.broadcast %18 : vector<1x256xf32> to vector<256x256xf32>
    %20 = arith.addf %17, %19 : vector<256x256xf32>
    %cst_17 = arith.constant 0.000000e+00 : f32
    %21 = vector.broadcast %cst_17 : f32 to vector<256x256xf32>
    %22 = arith.maximumf %20, %21 : vector<256x256xf32>
    %23 = arith.truncf %22 : vector<256x256xf32> to vector<256x256xbf16>
    %24 = vector.extract_strided_slice %23 {offsets = [0, 0], sizes = [32, 256], strides = [1, 1]} : vector<256x256xbf16> to vector<32x256xbf16>
    %c0_18 = arith.constant 0 : index
    %c0_19 = arith.constant 0 : index
    %c0_20 = arith.constant 0 : index
    %25 = vector.load %arg7[%c0_18, %c0_19, %c0_20] : memref<8x256x128xbf16, #tpu.memory_space<vmem>>, vector<1x256x128xbf16>
    %26 = vector.shape_cast %25 : vector<1x256x128xbf16> to vector<256x128xbf16>
    %cst_21 = arith.constant dense<0.000000e+00> : vector<32x128xf32>
    %27 = tpu.matmul %24, %26, %cst_21 {dimension_numbers = #tpu.dot_dimension_numbers<[1], [0], [0], [1], [0, 0, 1, 1], [], []>} : vector<32x256xbf16>, vector<256x128xbf16>, vector<32x128xf32> -> vector<32x128xf32>
    %28 = vector.extract_strided_slice %23 {offsets = [32, 0], sizes = [32, 256], strides = [1, 1]} : vector<256x256xbf16> to vector<32x256xbf16>
    %c1 = arith.constant 1 : index
    %c0_22 = arith.constant 0 : index
    %c0_23 = arith.constant 0 : index
    %29 = vector.load %arg7[%c1, %c0_22, %c0_23] : memref<8x256x128xbf16, #tpu.memory_space<vmem>>, vector<1x256x128xbf16>
    %30 = vector.shape_cast %29 : vector<1x256x128xbf16> to vector<256x128xbf16>
    %cst_24 = arith.constant dense<0.000000e+00> : vector<32x128xf32>
    %31 = tpu.matmul %28, %30, %cst_24 {dimension_numbers = #tpu.dot_dimension_numbers<[1], [0], [0], [1], [0, 0, 1, 1], [], []>} : vector<32x256xbf16>, vector<256x128xbf16>, vector<32x128xf32> -> vector<32x128xf32>
    %32 = arith.addf %27, %31 : vector<32x128xf32>
    %33 = vector.extract_strided_slice %23 {offsets = [64, 0], sizes = [32, 256], strides = [1, 1]} : vector<256x256xbf16> to vector<32x256xbf16>
    %c2 = arith.constant 2 : index
    %c0_25 = arith.constant 0 : index
    %c0_26 = arith.constant 0 : index
    %34 = vector.load %arg7[%c2, %c0_25, %c0_26] : memref<8x256x128xbf16, #tpu.memory_space<vmem>>, vector<1x256x128xbf16>
    %35 = vector.shape_cast %34 : vector<1x256x128xbf16> to vector<256x128xbf16>
    %cst_27 = arith.constant dense<0.000000e+00> : vector<32x128xf32>
    %36 = tpu.matmul %33, %35, %cst_27 {dimension_numbers = #tpu.dot_dimension_numbers<[1], [0], [0], [1], [0, 0, 1, 1], [], []>} : vector<32x256xbf16>, vector<256x128xbf16>, vector<32x128xf32> -> vector<32x128xf32>
    %37 = arith.addf %32, %36 : vector<32x128xf32>
    %38 = vector.extract_strided_slice %23 {offsets = [96, 0], sizes = [32, 256], strides = [1, 1]} : vector<256x256xbf16> to vector<32x256xbf16>
    %c3 = arith.constant 3 : index
    %c0_28 = arith.constant 0 : index
    %c0_29 = arith.constant 0 : index
    %39 = vector.load %arg7[%c3, %c0_28, %c0_29] : memref<8x256x128xbf16, #tpu.memory_space<vmem>>, vector<1x256x128xbf16>
    %40 = vector.shape_cast %39 : vector<1x256x128xbf16> to vector<256x128xbf16>
    %cst_30 = arith.constant dense<0.000000e+00> : vector<32x128xf32>
    %41 = tpu.matmul %38, %40, %cst_30 {dimension_numbers = #tpu.dot_dimension_numbers<[1], [0], [0], [1], [0, 0, 1, 1], [], []>} : vector<32x256xbf16>, vector<256x128xbf16>, vector<32x128xf32> -> vector<32x128xf32>
    %42 = arith.addf %37, %41 : vector<32x128xf32>
    %43 = vector.extract_strided_slice %23 {offsets = [128, 0], sizes = [32, 256], strides = [1, 1]} : vector<256x256xbf16> to vector<32x256xbf16>
    %c4 = arith.constant 4 : index
    %c0_31 = arith.constant 0 : index
    %c0_32 = arith.constant 0 : index
    %44 = vector.load %arg7[%c4, %c0_31, %c0_32] : memref<8x256x128xbf16, #tpu.memory_space<vmem>>, vector<1x256x128xbf16>
    %45 = vector.shape_cast %44 : vector<1x256x128xbf16> to vector<256x128xbf16>
    %cst_33 = arith.constant dense<0.000000e+00> : vector<32x128xf32>
    %46 = tpu.matmul %43, %45, %cst_33 {dimension_numbers = #tpu.dot_dimension_numbers<[1], [0], [0], [1], [0, 0, 1, 1], [], []>} : vector<32x256xbf16>, vector<256x128xbf16>, vector<32x128xf32> -> vector<32x128xf32>
    %47 = arith.addf %42, %46 : vector<32x128xf32>
    %48 = vector.extract_strided_slice %23 {offsets = [160, 0], sizes = [32, 256], strides = [1, 1]} : vector<256x256xbf16> to vector<32x256xbf16>
    %c5 = arith.constant 5 : index
    %c0_34 = arith.constant 0 : index
    %c0_35 = arith.constant 0 : index
    %49 = vector.load %arg7[%c5, %c0_34, %c0_35] : memref<8x256x128xbf16, #tpu.memory_space<vmem>>, vector<1x256x128xbf16>
    %50 = vector.shape_cast %49 : vector<1x256x128xbf16> to vector<256x128xbf16>
    %cst_36 = arith.constant dense<0.000000e+00> : vector<32x128xf32>
    %51 = tpu.matmul %48, %50, %cst_36 {dimension_numbers = #tpu.dot_dimension_numbers<[1], [0], [0], [1], [0, 0, 1, 1], [], []>} : vector<32x256xbf16>, vector<256x128xbf16>, vector<32x128xf32> -> vector<32x128xf32>
    %52 = arith.addf %47, %51 : vector<32x128xf32>
    %53 = vector.extract_strided_slice %23 {offsets = [192, 0], sizes = [32, 256], strides = [1, 1]} : vector<256x256xbf16> to vector<32x256xbf16>
    %c6 = arith.constant 6 : index
    %c0_37 = arith.constant 0 : index
    %c0_38 = arith.constant 0 : index
    %54 = vector.load %arg7[%c6, %c0_37, %c0_38] : memref<8x256x128xbf16, #tpu.memory_space<vmem>>, vector<1x256x128xbf16>
    %55 = vector.shape_cast %54 : vector<1x256x128xbf16> to vector<256x128xbf16>
    %cst_39 = arith.constant dense<0.000000e+00> : vector<32x128xf32>
    %56 = tpu.matmul %53, %55, %cst_39 {dimension_numbers = #tpu.dot_dimension_numbers<[1], [0], [0], [1], [0, 0, 1, 1], [], []>} : vector<32x256xbf16>, vector<256x128xbf16>, vector<32x128xf32> -> vector<32x128xf32>
    %57 = arith.addf %52, %56 : vector<32x128xf32>
    %58 = vector.extract_strided_slice %23 {offsets = [224, 0], sizes = [32, 256], strides = [1, 1]} : vector<256x256xbf16> to vector<32x256xbf16>
    %c7 = arith.constant 7 : index
    %c0_40 = arith.constant 0 : index
    %c0_41 = arith.constant 0 : index
    %59 = vector.load %arg7[%c7, %c0_40, %c0_41] : memref<8x256x128xbf16, #tpu.memory_space<vmem>>, vector<1x256x128xbf16>
    %60 = vector.shape_cast %59 : vector<1x256x128xbf16> to vector<256x128xbf16>
    %cst_42 = arith.constant dense<0.000000e+00> : vector<32x128xf32>
    %61 = tpu.matmul %58, %60, %cst_42 {dimension_numbers = #tpu.dot_dimension_numbers<[1], [0], [0], [1], [0, 0, 1, 1], [], []>} : vector<32x256xbf16>, vector<256x128xbf16>, vector<32x128xf32> -> vector<32x128xf32>
    %62 = arith.addf %57, %61 : vector<32x128xf32>
    %c0_43 = arith.constant 0 : index
    %c0_44 = arith.constant 0 : index
    %63 = vector.load %arg8[%c0_43, %c0_44] : memref<1x128xf32, #tpu.memory_space<vmem>>, vector<1x128xf32>
    %64 = vector.broadcast %63 : vector<1x128xf32> to vector<32x128xf32>
    %65 = arith.addf %62, %64 : vector<32x128xf32>
    %cst_45 = arith.constant 0.000000e+00 : f32
    %66 = vector.broadcast %cst_45 : f32 to vector<32x128xf32>
    %67 = arith.maximumf %65, %66 : vector<32x128xf32>
    %68 = arith.truncf %67 : vector<32x128xf32> to vector<32x128xbf16>
    %c0_46 = arith.constant 0 : index
    %c0_47 = arith.constant 0 : index
    %69 = vector.load %arg9[%c0_46, %c0_47] : memref<128x128xbf16, #tpu.memory_space<vmem>>, vector<128x128xbf16>
    %cst_48 = arith.constant dense<0.000000e+00> : vector<32x128xf32>
    %70 = tpu.matmul %68, %69, %cst_48 {dimension_numbers = #tpu.dot_dimension_numbers<[1], [0], [0], [1], [0, 0, 1, 1], [], []>} : vector<32x128xbf16>, vector<128x128xbf16>, vector<32x128xf32> -> vector<32x128xf32>
    %c0_49 = arith.constant 0 : index
    %c0_50 = arith.constant 0 : index
    %71 = vector.load %arg10[%c0_49, %c0_50] : memref<1x128xf32, #tpu.memory_space<vmem>>, vector<1x128xf32>
    %72 = vector.broadcast %71 : vector<1x128xf32> to vector<32x128xf32>
    %73 = arith.addf %70, %72 : vector<32x128xf32>
    %74 = arith.negf %73 : vector<32x128xf32>
    %75 = math.exp %74 : vector<32x128xf32>
    %cst_51 = arith.constant 1.000000e+00 : f32
    %76 = vector.broadcast %cst_51 : f32 to vector<32x128xf32>
    %77 = arith.addf %76, %75 : vector<32x128xf32>
    %78 = arith.divf %76, %77 : vector<32x128xf32>
    %c0_52 = arith.constant 0 : index
    %c0_53 = arith.constant 0 : index
    %79 = vector.load %arg11[%c0_52, %c0_53] : memref<32x128xf32, #tpu.memory_space<vmem>>, vector<32x128xf32>
    tpu.vector_store %arg11[%c0_52, %c0_53], %78 {strides = array<i32>} : memref<32x128xf32, #tpu.memory_space<vmem>>, vector<32x128xf32>,
    return
  }
  func.func @transform_0(%arg0: i32) -> (i32, i32, i32) {
    %c0_i32 = arith.constant 0 : i32
    %c0_i32_0 = arith.constant 0 : i32
    %c0_i32_1 = arith.constant 0 : i32
    return %arg0, %c0_i32, %c0_i32_0 : i32, i32, i32
  }
  func.func @transform_1(%arg0: i32) -> (i32, i32, i32) {
    %c0_i32 = arith.constant 0 : i32
    %c0_i32_0 = arith.constant 0 : i32
    %c0_i32_1 = arith.constant 0 : i32
    return %arg0, %c0_i32, %c0_i32_0 : i32, i32, i32
  }
  func.func @transform_2(%arg0: i32) -> (i32, i32) {
    %c0_i32 = arith.constant 0 : i32
    %c0_i32_0 = arith.constant 0 : i32
    %c0_i32_1 = arith.constant 0 : i32
    return %c0_i32, %c0_i32_0 : i32, i32
  }
  func.func @transform_3(%arg0: i32) -> (i32, i32) {
    %c0_i32 = arith.constant 0 : i32
    %c0_i32_0 = arith.constant 0 : i32
    %c0_i32_1 = arith.constant 0 : i32
    return %c0_i32, %c0_i32_0 : i32, i32
  }
  func.func @transform_4(%arg0: i32) -> (i32, i32) {
    %c0_i32 = arith.constant 0 : i32
    %c0_i32_0 = arith.constant 0 : i32
    %c0_i32_1 = arith.constant 0 : i32
    return %c0_i32, %c0_i32_0 : i32, i32
  }
  func.func @transform_5(%arg0: i32) -> (i32, i32) {
    %c0_i32 = arith.constant 0 : i32
    %c0_i32_0 = arith.constant 0 : i32
    %c0_i32_1 = arith.constant 0 : i32
    return %c0_i32, %c0_i32_0 : i32, i32
  }
  func.func @transform_6(%arg0: i32) -> (i32, i32, i32) {
    %c0_i32 = arith.constant 0 : i32
    %c0_i32_0 = arith.constant 0 : i32
    %c0_i32_1 = arith.constant 0 : i32
    %c0_i32_2 = arith.constant 0 : i32
    return %c0_i32, %c0_i32_0, %c0_i32_1 : i32, i32, i32
  }
  func.func @transform_7(%arg0: i32) -> (i32, i32) {
    %c0_i32 = arith.constant 0 : i32
    %c0_i32_0 = arith.constant 0 : i32
    %c0_i32_1 = arith.constant 0 : i32
    return %c0_i32, %c0_i32_0 : i32, i32
  }
  func.func @transform_8(%arg0: i32) -> (i32, i32) {
    %c0_i32 = arith.constant 0 : i32
    %c0_i32_0 = arith.constant 0 : i32
    %c0_i32_1 = arith.constant 0 : i32
    return %c0_i32, %c0_i32_0 : i32, i32
  }
  func.func @transform_9(%arg0: i32) -> (i32, i32) {
    %c0_i32 = arith.constant 0 : i32
    %c0_i32_0 = arith.constant 0 : i32
    %c0_i32_1 = arith.constant 0 : i32
    return %c0_i32, %c0_i32_0 : i32, i32
  }
  func.func @transform_10(%arg0: i32) -> (i32, i32) {
    %c0_i32 = arith.constant 0 : i32
    %c0_i32_0 = arith.constant 0 : i32
    return %arg0, %c0_i32 : i32, i32
  }
}

</mosaic_0001>

<llo_original>
// kernel: gcn_forward.1
$region0: #{gcn_forward.1}
  #allocation0 [shape = 'u32[]', space=smem, size = 0x4, offset = 0x4, fixed_abs, tag = 'smem constant byte address 0x4 - core index']
  #allocation1 [shape = 'u32[72,128]{1,0:T(1,128)}', space=vmem, size = 0x9000, scoped, tag = 'internal scratch']
  %s0 = inlined_call_operand.vmem [shape: bf16[2,256,128], index: 0, kind: input, shape index: {}]
  %s1 = inlined_call_operand.vmem [shape: bf16[2,256,256], index: 1, kind: input, shape index: {}]
  %s2 = inlined_call_operand.vmem [shape: bf16[128,256], index: 2, kind: input, shape index: {}]
  %s3 = inlined_call_operand.vmem [shape: f32[1,256], index: 3, kind: input, shape index: {}]
  %s4 = inlined_call_operand.vmem [shape: bf16[256,256], index: 4, kind: input, shape index: {}]
  %s5 = inlined_call_operand.vmem [shape: f32[1,256], index: 5, kind: input, shape index: {}]
  %s6 = inlined_call_operand.vmem [shape: bf16[8,256,128], index: 6, kind: input, shape index: {}]
  %s7 = inlined_call_operand.vmem [shape: f32[1,128], index: 7, kind: input, shape index: {}]
  %s8 = inlined_call_operand.vmem [shape: bf16[128,128], index: 8, kind: input, shape index: {}]
  %s9 = inlined_call_operand.vmem [shape: f32[1,128], index: 9, kind: input, shape index: {}]
  %s10 = inlined_call_operand.vmem [shape: f32[64,128], index: 10, kind: output, shape index: {}]
  %s11 = sld [smem:[#allocation0]]
  $region73: #{gcn_forward.1} parent=0
    _
  %s13 = ssub.s32 1, %s11
  %s14 = scalar_select 0, %s13, %s11
  loop: start=0, step=1, limit=4
  $region2: #{gcn_forward.1} parent=0 // loop_pre_header
    _
  $region3: #{gcn_forward.1} parent=0 // loop_header
    %s16 = sphi 0, %s20
    %p17 = scmp.ge.s32.totalorder %s16, 4
    %s26 = sphi 0, %s28
    %s29 = sphi 0, %s26
    %s30 = sphi 0, %s29
    %s46 = sphi 0, %s30
    %s52 = sphi 0, %s54
    %s55 = sphi 0, %s52
    %s56 = sphi 0, %s55
    %s72 = sphi 0, %s56
    %s76 = sphi 0, %s76
    %s78 = sphi 0, %s76
    %s79 = sphi 0, %s78
    %s93 = sphi 0, %s79
    %s97 = sphi 0, %s97
    %s99 = sphi 0, %s97
    %s100 = sphi 0, %s99
    %s114 = sphi 0, %s100
    %s118 = sphi 0, %s118
    %s120 = sphi 0, %s118
    %s121 = sphi 0, %s120
    %s135 = sphi 0, %s121
    %s139 = sphi 0, %s139
    %s141 = sphi 0, %s139
    %s142 = sphi 0, %s141
    %s156 = sphi 0, %s142
    %s160 = sphi 0, %s160
    %s162 = sphi 0, %s160
    %s163 = sphi 0, %s162
    %s177 = sphi 0, %s163
    %s181 = sphi 0, %s181
    %s183 = sphi 0, %s181
    %s184 = sphi 0, %s183
    %s198 = sphi 0, %s184
    %s202 = sphi 0, %s202
    %s204 = sphi 0, %s202
    %s205 = sphi 0, %s204
    %s219 = sphi 0, %s205
    %s223 = sphi 0, %s223
    %s225 = sphi 0, %s223
    %s226 = sphi 0, %s225
    %s240 = sphi 0, %s226
    %s246 = sphi 0, %s248
    %s249 = sphi 0, %s246
    %s250 = sphi 0, %s249
    %s266 = sphi 0, %s250
  $region4: #{gcn_forward.1} parent=0 // loop_header_branch
    %19 = sbr.rel (%p17) target = $region8
  $region5: #{gcn_forward.1} parent=0 // loop_body
    %s21 = ssub.s32 %s16, 1
    %s22 = ssub.s32 %s16, 2
    %s23 = sadd.s32 %s16, 1
    %s24 = ssub.s32 %s16, %s23
    %p25 = scmp.eq.s32.totalorder %s24, 0
    %s27 = sadd.s32 %s26, 1
    %s28 = scalar_select %p25, %s26, %s27
    %p31 = pneg %p25
    %p32 = scmp.eq.s32.totalorder %s16, 1
    %p33 = por %p31, %p32
    %p34 = scmp.ne.s32.totalorder %s26, %s29
    %p35 = scmp.eq.s32.totalorder %s16, 0
    %p36 = por %p34, %p35
    %p37 = scmp.ne.s32.totalorder %s26, %s29
    %p38 = scmp.eq.s32.totalorder %s21, 1
    %p39 = por %p37, %p38
    %p40 = scmp.ne.s32.totalorder %s29, %s30
    %p41 = scmp.eq.s32.totalorder %s21, 0
    %p42 = por %p40, %p41
    %p43 = scmp.ne.s32.totalorder %s29, %s30
    %p44 = scmp.eq.s32.totalorder %s22, 1
    %p45 = por %p43, %p44
    %p47 = scmp.ne.s32.totalorder %s30, %s46
    %p48 = scmp.eq.s32.totalorder %s22, 0
    %p49 = por %p47, %p48
    %s50 = ssub.s32 %s16, %s23
    %p51 = scmp.eq.s32.totalorder %s50, 0
    %s53 = sadd.s32 %s52, 1
    %s54 = scalar_select %p51, %s52, %s53
    %p57 = pneg %p51
    %p58 = scmp.eq.s32.totalorder %s16, 1
    %p59 = por %p57, %p58
    %p60 = scmp.ne.s32.totalorder %s52, %s55
    %p61 = scmp.eq.s32.totalorder %s16, 0
    %p62 = por %p60, %p61
    %p63 = scmp.ne.s32.totalorder %s52, %s55
    %p64 = scmp.eq.s32.totalorder %s21, 1
    %p65 = por %p63, %p64
    %p66 = scmp.ne.s32.totalorder %s55, %s56
    %p67 = scmp.eq.s32.totalorder %s21, 0
    %p68 = por %p66, %p67
    %p69 = scmp.ne.s32.totalorder %s55, %s56
    %p70 = scmp.eq.s32.totalorder %s22, 1
    %p71 = por %p69, %p70
    %p73 = scmp.ne.s32.totalorder %s56, %s72
    %p74 = scmp.eq.s32.totalorder %s22, 0
    %p75 = por %p73, %p74
    %s77 = sadd.s32 %s76, 1
    %p80 = scmp.eq.s32.totalorder %s16, 1
    %p81 = scmp.ne.s32.totalorder %s76, %s78
    %p82 = scmp.eq.s32.totalorder %s16, 0
    %p83 = por %p81, %p82
    %p84 = scmp.ne.s32.totalorder %s76, %s78
    %p85 = scmp.eq.s32.totalorder %s21, 1
    %p86 = por %p84, %p85
    %p87 = scmp.ne.s32.totalorder %s78, %s79
    %p88 = scmp.eq.s32.totalorder %s21, 0
    %p89 = por %p87, %p88
    %p90 = scmp.ne.s32.totalorder %s78, %s79
    %p91 = scmp.eq.s32.totalorder %s22, 1
    %p92 = por %p90, %p91
    %p94 = scmp.ne.s32.totalorder %s79, %s93
    %p95 = scmp.eq.s32.totalorder %s22, 0
    %p96 = por %p94, %p95
    %s98 = sadd.s32 %s97, 1
    %p101 = scmp.eq.s32.totalorder %s16, 1
    %p102 = scmp.ne.s32.totalorder %s97, %s99
    %p103 = scmp.eq.s32.totalorder %s16, 0
    %p104 = por %p102, %p103
    %p105 = scmp.ne.s32.totalorder %s97, %s99
    %p106 = scmp.eq.s32.totalorder %s21, 1
    %p107 = por %p105, %p106
    %p108 = scmp.ne.s32.totalorder %s99, %s100
    %p109 = scmp.eq.s32.totalorder %s21, 0
    %p110 = por %p108, %p109
    %p111 = scmp.ne.s32.totalorder %s99, %s100
    %p112 = scmp.eq.s32.totalorder %s22, 1
    %p113 = por %p111, %p112
    %p115 = scmp.ne.s32.totalorder %s100, %s114
    %p116 = scmp.eq.s32.totalorder %s22, 0
    %p117 = por %p115, %p116
    %s119 = sadd.s32 %s118, 1
    %p122 = scmp.eq.s32.totalorder %s16, 1
    %p123 = scmp.ne.s32.totalorder %s118, %s120
    %p124 = scmp.eq.s32.totalorder %s16, 0
    %p125 = por %p123, %p124
    %p126 = scmp.ne.s32.totalorder %s118, %s120
    %p127 = scmp.eq.s32.totalorder %s21, 1
    %p128 = por %p126, %p127
    %p129 = scmp.ne.s32.totalorder %s120, %s121
    %p130 = scmp.eq.s32.totalorder %s21, 0
    %p131 = por %p129, %p130
    %p132 = scmp.ne.s32.totalorder %s120, %s121
    %p133 = scmp.eq.s32.totalorder %s22, 1
    %p134 = por %p132, %p133
    %p136 = scmp.ne.s32.totalorder %s121, %s135
    %p137 = scmp.eq.s32.totalorder %s22, 0
    %p138 = por %p136, %p137
    %s140 = sadd.s32 %s139, 1
    %p143 = scmp.eq.s32.totalorder %s16, 1
    %p144 = scmp.ne.s32.totalorder %s139, %s141
    %p145 = scmp.eq.s32.totalorder %s16, 0
    %p146 = por %p144, %p145
    %p147 = scmp.ne.s32.totalorder %s139, %s141
    %p148 = scmp.eq.s32.totalorder %s21, 1
    %p149 = por %p147, %p148
    %p150 = scmp.ne.s32.totalorder %s141, %s142
    %p151 = scmp.eq.s32.totalorder %s21, 0
    %p152 = por %p150, %p151
    %p153 = scmp.ne.s32.totalorder %s141, %s142
    %p154 = scmp.eq.s32.totalorder %s22, 1
    %p155 = por %p153, %p154
    %p157 = scmp.ne.s32.totalorder %s142, %s156
    %p158 = scmp.eq.s32.totalorder %s22, 0
    %p159 = por %p157, %p158
    %s161 = sadd.s32 %s160, 1
    %p164 = scmp.eq.s32.totalorder %s16, 1
    %p165 = scmp.ne.s32.totalorder %s160, %s162
    %p166 = scmp.eq.s32.totalorder %s16, 0
    %p167 = por %p165, %p166
    %p168 = scmp.ne.s32.totalorder %s160, %s162
    %p169 = scmp.eq.s32.totalorder %s21, 1
    %p170 = por %p168, %p169
    %p171 = scmp.ne.s32.totalorder %s162, %s163
    %p172 = scmp.eq.s32.totalorder %s21, 0
    %p173 = por %p171, %p172
    %p174 = scmp.ne.s32.totalorder %s162, %s163
    %p175 = scmp.eq.s32.totalorder %s22, 1
    %p176 = por %p174, %p175
    %p178 = scmp.ne.s32.totalorder %s163, %s177
    %p179 = scmp.eq.s32.totalorder %s22, 0
    %p180 = por %p178, %p179
    %s182 = sadd.s32 %s181, 1
    %p185 = scmp.eq.s32.totalorder %s16, 1
    %p186 = scmp.ne.s32.totalorder %s181, %s183
    %p187 = scmp.eq.s32.totalorder %s16, 0
    %p188 = por %p186, %p187
    %p189 = scmp.ne.s32.totalorder %s181, %s183
    %p190 = scmp.eq.s32.totalorder %s21, 1
    %p191 = por %p189, %p190
    %p192 = scmp.ne.s32.totalorder %s183, %s184
    %p193 = scmp.eq.s32.totalorder %s21, 0
    %p194 = por %p192, %p193
    %p195 = scmp.ne.s32.totalorder %s183, %s184
    %p196 = scmp.eq.s32.totalorder %s22, 1
    %p197 = por %p195, %p196
    %p199 = scmp.ne.s32.totalorder %s184, %s198
    %p200 = scmp.eq.s32.totalorder %s22, 0
    %p201 = por %p199, %p200
    %s203 = sadd.s32 %s202, 1
    %p206 = scmp.eq.s32.totalorder %s16, 1
    %p207 = scmp.ne.s32.totalorder %s202, %s204
    %p208 = scmp.eq.s32.totalorder %s16, 0
    %p209 = por %p207, %p208
    %p210 = scmp.ne.s32.totalorder %s202, %s204
    %p211 = scmp.eq.s32.totalorder %s21, 1
    %p212 = por %p210, %p211
    %p213 = scmp.ne.s32.totalorder %s204, %s205
    %p214 = scmp.eq.s32.totalorder %s21, 0
    %p215 = por %p213, %p214
    %p216 = scmp.ne.s32.totalorder %s204, %s205
    %p217 = scmp.eq.s32.totalorder %s22, 1
    %p218 = por %p216, %p217
    %p220 = scmp.ne.s32.totalorder %s205, %s219
    %p221 = scmp.eq.s32.totalorder %s22, 0
    %p222 = por %p220, %p221
    %s224 = sadd.s32 %s223, 1
    %p227 = scmp.eq.s32.totalorder %s16, 1
    %p228 = scmp.ne.s32.totalorder %s223, %s225
    %p229 = scmp.eq.s32.totalorder %s16, 0
    %p230 = por %p228, %p229
    %p231 = scmp.ne.s32.totalorder %s223, %s225
    %p232 = scmp.eq.s32.totalorder %s21, 1
    %p233 = por %p231, %p232
    %p234 = scmp.ne.s32.totalorder %s225, %s226
    %p235 = scmp.eq.s32.totalorder %s21, 0
    %p236 = por %p234, %p235
    %p237 = scmp.ne.s32.totalorder %s225, %s226
    %p238 = scmp.eq.s32.totalorder %s22, 1
    %p239 = por %p237, %p238
    %p241 = scmp.ne.s32.totalorder %s226, %s240
    %p242 = scmp.eq.s32.totalorder %s22, 0
    %p243 = por %p241, %p242
    %s244 = ssub.s32 %s16, %s23
    %p245 = scmp.eq.s32.totalorder %s244, 0
    %s247 = sadd.s32 %s246, 1
    %s248 = scalar_select %p245, %s246, %s247
    %p251 = pneg %p245
    %p252 = scmp.eq.s32.totalorder %s16, 1
    %p253 = por %p251, %p252
    %p254 = scmp.ne.s32.totalorder %s246, %s249
    %p255 = scmp.eq.s32.totalorder %s16, 0
    %p256 = por %p254, %p255
    %p257 = scmp.ne.s32.totalorder %s246, %s249
    %p258 = scmp.eq.s32.totalorder %s21, 1
    %p259 = por %p257, %p258
    %p260 = scmp.ne.s32.totalorder %s249, %s250
    %p261 = scmp.eq.s32.totalorder %s21, 0
    %p262 = por %p260, %p261
    %p263 = scmp.ne.s32.totalorder %s249, %s250
    %p264 = scmp.eq.s32.totalorder %s22, 1
    %p265 = por %p263, %p264
    %p267 = scmp.ne.s32.totalorder %s250, %s266
    %p268 = scmp.eq.s32.totalorder %s22, 0
    %p269 = por %p267, %p268
    %p270 = scmp.le.s32.totalorder 1, %s16
    %p271 = scmp.lt.s32.totalorder %s16, 3
    %p272 = pnand %p270, %p271
    %p273 = pneg %p272
    // Predicated region
    $region9: #{gcn_forward.1} parent=5 // pred_check
      _
    $region10: #{gcn_forward.1} parent=5 // pred_check_branch
      %275 = sbr.rel (%p272) target = $region12
    $region11: #{gcn_forward.1} parent=5 // pred_region
      %s276 = ssub.s32 %s16, 1
      // Predicated region
      $region13: #{gcn_forward.1} parent=11 // pred_check
        %p277 = pneg %p89
      $region14: #{gcn_forward.1} parent=11 // pred_check_branch
        %279 = sbr.rel (%p277) target = $region16
      $region15: #{gcn_forward.1} parent=11 // pred_region
        _
      $region16: #{gcn_forward.1} parent=11 // pred_fallthru
        _
      // Predicated region
      $region17: #{gcn_forward.1} parent=11 // pred_check
        %p280 = pneg %p110
      $region18: #{gcn_forward.1} parent=11 // pred_check_branch
        %282 = sbr.rel (%p280) target = $region20
      $region19: #{gcn_forward.1} parent=11 // pred_region
        _
      $region20: #{gcn_forward.1} parent=11 // pred_fallthru
        _
      // Predicated region
      $region21: #{gcn_forward.1} parent=11 // pred_check
        %p283 = pneg %p131
      $region22: #{gcn_forward.1} parent=11 // pred_check_branch
        %285 = sbr.rel (%p283) target = $region24
      $region23: #{gcn_forward.1} parent=11 // pred_region
        _
      $region24: #{gcn_forward.1} parent=11 // pred_fallthru
        _
      // Predicated region
      $region25: #{gcn_forward.1} parent=11 // pred_check
        %p286 = pneg %p152
      $region26: #{gcn_forward.1} parent=11 // pred_check_branch
        %288 = sbr.rel (%p286) target = $region28
      $region27: #{gcn_forward.1} parent=11 // pred_region
        _
      $region28: #{gcn_forward.1} parent=11 // pred_fallthru
        _
      // Predicated region
      $region29: #{gcn_forward.1} parent=11 // pred_check
        %p289 = pneg %p173
      $region30: #{gcn_forward.1} parent=11 // pred_check_branch
        %291 = sbr.rel (%p289) target = $region32
      $region31: #{gcn_forward.1} parent=11 // pred_region
        _
      $region32: #{gcn_forward.1} parent=11 // pred_fallthru
        _
      // Predicated region
      $region33: #{gcn_forward.1} parent=11 // pred_check
        %p292 = pneg %p194
      $region34: #{gcn_forward.1} parent=11 // pred_check_branch
        %294 = sbr.rel (%p292) target = $region36
      $region35: #{gcn_forward.1} parent=11 // pred_region
        _
      $region36: #{gcn_forward.1} parent=11 // pred_fallthru
        _
      // Predicated region
      $region37: #{gcn_forward.1} parent=11 // pred_check
        %p295 = pneg %p215
      $region38: #{gcn_forward.1} parent=11 // pred_check_branch
        %297 = sbr.rel (%p295) target = $region40
      $region39: #{gcn_forward.1} parent=11 // pred_region
        _
      $region40: #{gcn_forward.1} parent=11 // pred_fallthru
        _
      // Predicated region
      $region41: #{gcn_forward.1} parent=11 // pred_check
        %p298 = pneg %p236
      $region42: #{gcn_forward.1} parent=11 // pred_check_branch
        %300 = sbr.rel (%p298) target = $region44
      $region43: #{gcn_forward.1} parent=11 // pred_region
        _
      $region44: #{gcn_forward.1} parent=11 // pred_fallthru
        _
    $region12: #{gcn_forward.1} parent=5 // pred_fallthru
      _
    %p301 = scmp.lt.s32.totalorder %s16, 2
    // Predicated region
    $region45: #{gcn_forward.1} parent=5 // pred_check
      %p302 = pneg %p301
    $region46: #{gcn_forward.1} parent=5 // pred_check_branch
      %304 = sbr.rel (%p302) target = $region48
    $region47: #{gcn_forward.1} parent=5 // pred_region
      // Predicated region
      $region49: #{gcn_forward.1} parent=47 // pred_check
        %p305 = pneg %p36
      $region50: #{gcn_forward.1} parent=47 // pred_check_branch
        %307 = sbr.rel (%p305) target = $region52
      $region51: #{gcn_forward.1} parent=47 // pred_region
        %p308 = scmp.lt.s32.totalorder %s16, 1
        %s309 = scalar_select %p308, %s16, 1
        %s310 = smul.addr %s309, 32
        %s311 = smul.addr %s310, 4
        %s312 = scalar_lea.vmem %s0, %s311
      $region52: #{gcn_forward.1} parent=47 // pred_fallthru
        _
      // Predicated region
      $region53: #{gcn_forward.1} parent=47 // pred_check
        %p313 = pneg %p62
      $region54: #{gcn_forward.1} parent=47 // pred_check_branch
        %315 = sbr.rel (%p313) target = $region56
      $region55: #{gcn_forward.1} parent=47 // pred_region
        %p316 = scmp.lt.s32.totalorder %s16, 1
        %s317 = scalar_select %p316, %s16, 1
        %s318 = smul.addr %s317, 64
        %s319 = smul.addr %s318, 4
        %s320 = scalar_lea.vmem %s1, %s319
      $region56: #{gcn_forward.1} parent=47 // pred_fallthru
        _
    $region48: #{gcn_forward.1} parent=5 // pred_fallthru
      _
    %p321 = scmp.le.s32.totalorder 1, %s16
    %p322 = scmp.lt.s32.totalorder %s16, 3
    %p323 = pnand %p321, %p322
    %p324 = pneg %p323
    // Predicated region
    $region57: #{gcn_forward.1} parent=5 // pred_check
      _
    $region58: #{gcn_forward.1} parent=5 // pred_check_branch
      %326 = sbr.rel (%p323) target = $region60
    $region59: #{gcn_forward.1} parent=5 // pred_region
      %s327 = ssub.s32 %s16, 1
      %p328 = scmp.lt.s32.totalorder %s21, 1
      %s329 = scalar_select %p328, %s21, 1
      %s330 = smul.addr %s329, 32
      %s331 = smul.addr %s330, 4
      %s332 = scalar_lea.vmem %s0, %s331
      %p333 = pneg %p42
      %p334 = pneg %p39
      %p335 = scmp.lt.s32.totalorder %s21, 1
      %s336 = scalar_select %p335, %s21, 1
      %s337 = smul.addr %s336, 64
      %s338 = smul.addr %s337, 4
      %s339 = scalar_lea.vmem %s1, %s338
      %p340 = pneg %p68
      %p341 = pneg %p65
      %p342 = pneg %p89
      %p343 = pneg %p86
      %p344 = pneg %p110
      %p345 = pneg %p107
      %p346 = pneg %p131
      %p347 = pneg %p128
      %p348 = pneg %p152
      %p349 = pneg %p149
      %p350 = pneg %p173
      %p351 = pneg %p170
      %p352 = pneg %p194
      %p353 = pneg %p191
      %p354 = pneg %p215
      %p355 = pneg %p212
      %p356 = pneg %p236
      %p357 = pneg %p233
      %p358 = pneg %p262
      %p359 = pneg %p259
      %s360 = smul.u32 4, %s21
      %p361 = scmp.lt.s32.totalorder %s360, 7
      %s362 = scalar_select %p361, %s360, 7
      %s363 = smul.addr %s362, 8
      %s364 = scalar_lea.vmem %s10, %s363
      %p365 = scmp.lt.s32.totalorder %s21, 1
      %s366 = scalar_select %p365, %s21, 1
      %s367 = smul.addr %s366, 32
      %s368 = smul.addr %s367, 4
      %s369 = scalar_lea.vmem %s0, %s368
      %p370 = scmp.lt.s32.totalorder %s21, 1
      %s371 = scalar_select %p370, %s21, 1
      %s372 = smul.addr %s371, 64
      %s373 = smul.addr %s372, 4
      %s374 = scalar_lea.vmem %s1, %s373
      %s375 = smul.u32 4, %s21
      %p376 = scmp.lt.s32.totalorder %s375, 7
      %s377 = scalar_select %p376, %s375, 7
      %s378 = smul.addr %s377, 8
      %s379 = scalar_lea.vmem %s10, %s378
      %s380 = smul.u32 4, %s21
      %v381 = vld [vmem:[%s369] sm:$0xf]
      %v382 = vld [vmem:[%s369 + $0x4] sm:$0xf]
      %v383 = vld [vmem:[%s369 + $0x8] sm:$0xf]
      %v384 = vld [vmem:[%s369 + $0xc] sm:$0xf]
      %v385 = vld [vmem:[%s369 + $0x10] sm:$0xf]
      %v386 = vld [vmem:[%s369 + $0x14] sm:$0xf]
      %v387 = vld [vmem:[%s369 + $0x18] sm:$0xf]
      %v388 = vld [vmem:[%s369 + $0x1c] sm:$0xf]
      %v389 = vld [vmem:[%s369 + $0x20] sm:$0xf]
      %v390 = vld [vmem:[%s369 + $0x24] sm:$0xf]
      %v391 = vld [vmem:[%s369 + $0x28] sm:$0xf]
      %v392 = vld [vmem:[%s369 + $0x2c] sm:$0xf]
      %v393 = vld [vmem:[%s369 + $0x30] sm:$0xf]
      %v394 = vld [vmem:[%s369 + $0x34] sm:$0xf]
      %v395 = vld [vmem:[%s369 + $0x38] sm:$0xf]
      %v396 = vld [vmem:[%s369 + $0x3c] sm:$0xf]
      %v397 = vld [vmem:[%s369 + $0x40] sm:$0xf]
      %v398 = vld [vmem:[%s369 + $0x44] sm:$0xf]
      %v399 = vld [vmem:[%s369 + $0x48] sm:$0xf]
      %v400 = vld [vmem:[%s369 + $0x4c] sm:$0xf]
      %v401 = vld [vmem:[%s369 + $0x50] sm:$0xf]
      %v402 = vld [vmem:[%s369 + $0x54] sm:$0xf]
      %v403 = vld [vmem:[%s369 + $0x58] sm:$0xf]
      %v404 = vld [vmem:[%s369 + $0x5c] sm:$0xf]
      %v405 = vld [vmem:[%s369 + $0x60] sm:$0xf]
      %v406 = vld [vmem:[%s369 + $0x64] sm:$0xf]
      %v407 = vld [vmem:[%s369 + $0x68] sm:$0xf]
      %v408 = vld [vmem:[%s369 + $0x6c] sm:$0xf]
      %v409 = vld [vmem:[%s369 + $0x70] sm:$0xf]
      %v410 = vld [vmem:[%s369 + $0x74] sm:$0xf]
      %v411 = vld [vmem:[%s369 + $0x78] sm:$0xf]
      %v412 = vld [vmem:[%s369 + $0x7c] sm:$0xf]
      %v413 = vld [vmem:[%s374] sm:$0xff]
      %v414 = vld [vmem:[%s374 + $0x8] sm:$0xff]
      %v415 = vld [vmem:[%s374 + $0x10] sm:$0xff]
      %v416 = vld [vmem:[%s374 + $0x18] sm:$0xff]
      %v417 = vld [vmem:[%s374 + $0x20] sm:$0xff]
      %v418 = vld [vmem:[%s374 + $0x28] sm:$0xff]
      %v419 = vld [vmem:[%s374 + $0x30] sm:$0xff]
      %v420 = vld [vmem:[%s374 + $0x38] sm:$0xff]
      %v421 = vld [vmem:[%s374 + $0x40] sm:$0xff]
      %v422 = vld [vmem:[%s374 + $0x48] sm:$0xff]
      %v423 = vld [vmem:[%s374 + $0x50] sm:$0xff]
      %v424 = vld [vmem:[%s374 + $0x58] sm:$0xff]
      %v425 = vld [vmem:[%s374 + $0x60] sm:$0xff]
      %v426 = vld [vmem:[%s374 + $0x68] sm:$0xff]
      %v427 = vld [vmem:[%s374 + $0x70] sm:$0xff]
      %v428 = vld [vmem:[%s374 + $0x78] sm:$0xff]
      %v429 = vld [vmem:[%s374 + $0x80] sm:$0xff]
      %v430 = vld [vmem:[%s374 + $0x88] sm:$0xff]
      %v431 = vld [vmem:[%s374 + $0x90] sm:$0xff]
      %v432 = vld [vmem:[%s374 + $0x98] sm:$0xff]
      %v433 = vld [vmem:[%s374 + $0xa0] sm:$0xff]
      %v434 = vld [vmem:[%s374 + $0xa8] sm:$0xff]
      %v435 = vld [vmem:[%s374 + $0xb0] sm:$0xff]
      %v436 = vld [vmem:[%s374 + $0xb8] sm:$0xff]
      %v437 = vld [vmem:[%s374 + $0xc0] sm:$0xff]
      %v438 = vld [vmem:[%s374 + $0xc8] sm:$0xff]
      %v439 = vld [vmem:[%s374 + $0xd0] sm:$0xff]
      %v440 = vld [vmem:[%s374 + $0xd8] sm:$0xff]
      %v441 = vld [vmem:[%s374 + $0xe0] sm:$0xff]
      %v442 = vld [vmem:[%s374 + $0xe8] sm:$0xff]
      %v443 = vld [vmem:[%s374 + $0xf0] sm:$0xff]
      %v444 = vld [vmem:[%s374 + $0xf8] sm:$0xff]
      %v445 = vld [vmem:[%s2] sm:$0xff]
      %v446 = vld [vmem:[%s2 + $0x8] sm:$0xff]
      %v447 = vld [vmem:[%s2 + $0x10] sm:$0xff]
      %v448 = vld [vmem:[%s2 + $0x18] sm:$0xff]
      %v449 = vld [vmem:[%s2 + $0x20] sm:$0xff]
      %v450 = vld [vmem:[%s2 + $0x28] sm:$0xff]
      %v451 = vld [vmem:[%s2 + $0x30] sm:$0xff]
      %v452 = vld [vmem:[%s2 + $0x38] sm:$0xff]
      %v453 = vld [vmem:[%s2 + $0x40] sm:$0xff]
      %v454 = vld [vmem:[%s2 + $0x48] sm:$0xff]
      %v455 = vld [vmem:[%s2 + $0x50] sm:$0xff]
      %v456 = vld [vmem:[%s2 + $0x58] sm:$0xff]
      %v457 = vld [vmem:[%s2 + $0x60] sm:$0xff]
      %v458 = vld [vmem:[%s2 + $0x68] sm:$0xff]
      %v459 = vld [vmem:[%s2 + $0x70] sm:$0xff]
      %v460 = vld [vmem:[%s2 + $0x78] sm:$0xff]
      %v493 = vunpack.c.l.b16 %v381
      %v494 = vunpack.c.l.b16 %v382
      %v495 = vunpack.c.l.b16 %v383
      %v496 = vunpack.c.l.b16 %v384
      %v497 = vunpack.c.l.b16 %v385
      %v498 = vunpack.c.l.b16 %v386
      %v499 = vunpack.c.l.b16 %v387
      %v500 = vunpack.c.l.b16 %v388
      %v501 = vunpack.c.l.b16 %v389
      %v502 = vunpack.c.l.b16 %v390
      %v503 = vunpack.c.l.b16 %v391
      %v504 = vunpack.c.l.b16 %v392
      %v505 = vunpack.c.l.b16 %v393
      %v506 = vunpack.c.l.b16 %v394
      %v507 = vunpack.c.l.b16 %v395
      %v508 = vunpack.c.l.b16 %v396
      %v509 = vunpack.c.l.b16 %v397
      %v510 = vunpack.c.l.b16 %v398
      %v511 = vunpack.c.l.b16 %v399
      %v512 = vunpack.c.l.b16 %v400
      %v513 = vunpack.c.l.b16 %v401
      %v514 = vunpack.c.l.b16 %v402
      %v515 = vunpack.c.l.b16 %v403
      %v516 = vunpack.c.l.b16 %v404
      %v517 = vunpack.c.l.b16 %v405
      %v518 = vunpack.c.l.b16 %v406
      %v519 = vunpack.c.l.b16 %v407
      %v520 = vunpack.c.l.b16 %v408
      %v521 = vunpack.c.l.b16 %v409
      %v522 = vunpack.c.l.b16 %v410
      %v523 = vunpack.c.l.b16 %v411
      %v524 = vunpack.c.l.b16 %v412
      %v525 = vpack.c.b16 %v494, %v493
      %v526 = vpack.c.b16 %v496, %v495
      %v527 = vpack.c.b16 %v498, %v497
      %v528 = vpack.c.b16 %v500, %v499
      %v529 = vpack.c.b16 %v502, %v501
      %v530 = vpack.c.b16 %v504, %v503
      %v531 = vpack.c.b16 %v506, %v505
      %v532 = vpack.c.b16 %v508, %v507
      %v533 = vpack.c.b16 %v510, %v509
      %v534 = vpack.c.b16 %v512, %v511
      %v535 = vpack.c.b16 %v514, %v513
      %v536 = vpack.c.b16 %v516, %v515
      %v537 = vpack.c.b16 %v518, %v517
      %v538 = vpack.c.b16 %v520, %v519
      %v539 = vpack.c.b16 %v522, %v521
      %v540 = vpack.c.b16 %v524, %v523
      %v573 = vunpack.c.l.b16 %v445
      %v574 = vunpack.c.h.b16 %v445
      %v575 = vunpack.c.l.b16 %v446
      %v576 = vunpack.c.h.b16 %v446
      %v577 = vunpack.c.l.b16 %v447
      %v578 = vunpack.c.h.b16 %v447
      %v579 = vunpack.c.l.b16 %v448
      %v580 = vunpack.c.h.b16 %v448
      %v581 = vunpack.c.l.b16 %v449
      %v582 = vunpack.c.h.b16 %v449
      %v583 = vunpack.c.l.b16 %v450
      %v584 = vunpack.c.h.b16 %v450
      %v585 = vunpack.c.l.b16 %v451
      %v586 = vunpack.c.h.b16 %v451
      %v587 = vunpack.c.l.b16 %v452
      %v588 = vunpack.c.h.b16 %v452
      %v589 = vunpack.c.l.b16 %v453
      %v590 = vunpack.c.h.b16 %v453
      %v591 = vunpack.c.l.b16 %v454
      %v592 = vunpack.c.h.b16 %v454
      %v593 = vunpack.c.l.b16 %v455
      %v594 = vunpack.c.h.b16 %v455
      %v595 = vunpack.c.l.b16 %v456
      %v596 = vunpack.c.h.b16 %v456
      %v597 = vunpack.c.l.b16 %v457
      %v598 = vunpack.c.h.b16 %v457
      %v599 = vunpack.c.l.b16 %v458
      %v600 = vunpack.c.h.b16 %v458
      %v601 = vunpack.c.l.b16 %v459
      %v602 = vunpack.c.h.b16 %v459
      %v603 = vunpack.c.l.b16 %v460
      %v604 = vunpack.c.h.b16 %v460
      %v605 = vpack.c.b16 %v575, %v573
      %v606 = vpack.c.b16 %v576, %v574
      %v607 = vpack.c.b16 %v579, %v577
      %v608 = vpack.c.b16 %v580, %v578
      %v609 = vpack.c.b16 %v583, %v581
      %v610 = vpack.c.b16 %v584, %v582
      %v611 = vpack.c.b16 %v587, %v585
      %v612 = vpack.c.b16 %v588, %v586
      %v613 = vpack.c.b16 %v591, %v589
      %v614 = vpack.c.b16 %v592, %v590
      %v615 = vpack.c.b16 %v595, %v593
      %v616 = vpack.c.b16 %v596, %v594
      %v617 = vpack.c.b16 %v599, %v597
      %v618 = vpack.c.b16 %v600, %v598
      %v619 = vpack.c.b16 %v603, %v601
      %v620 = vpack.c.b16 %v604, %v602
      %637 = vmatpush.bf16.msra.mxu0 %v619
      %638 = vmatpush.bf16.msra.mxu0 %v617
      %639 = vmatpush.bf16.msra.mxu0 %v615
      %640 = vmatpush.bf16.msra.mxu0 %v613
      %641 = vmatpush.bf16.msra.mxu0 %v611
      %642 = vmatpush.bf16.msra.mxu0 %v609
      %643 = vmatpush.bf16.msra.mxu0 %v607
      %644 = vmatpush.bf16.msra.mxu0 %v605
      %645 = vmatmul.bf16.gmra.mxu0 %v525
      %v646 = vpop.f32.mrf.mxu0
      %v647 = vadd.f32 0.0, %v646
      %v648 = vpop.f32.mrf.mxu0
      %v649 = vadd.f32 0.0, %v648
      %650 = vmatmul.bf16.gmra.mxu0 %v526
      %v651 = vpop.f32.mrf.mxu0
      %v652 = vadd.f32 0.0, %v651
      %v653 = vpop.f32.mrf.mxu0
      %v654 = vadd.f32 0.0, %v653
      %655 = vmatmul.bf16.gmra.mxu0 %v527
      %v656 = vpop.f32.mrf.mxu0
      %v657 = vadd.f32 0.0, %v656
      %v658 = vpop.f32.mrf.mxu0
      %v659 = vadd.f32 0.0, %v658
      %660 = vmatmul.bf16.gmra.mxu0 %v528
      %v661 = vpop.f32.mrf.mxu0
      %v662 = vadd.f32 0.0, %v661
      %v663 = vpop.f32.mrf.mxu0
      %v664 = vadd.f32 0.0, %v663
      %665 = vmatmul.bf16.gmra.mxu0 %v529
      %v666 = vpop.f32.mrf.mxu0
      %v667 = vadd.f32 0.0, %v666
      %v668 = vpop.f32.mrf.mxu0
      %v669 = vadd.f32 0.0, %v668
      %670 = vmatmul.bf16.gmra.mxu0 %v530
      %v671 = vpop.f32.mrf.mxu0
      %v672 = vadd.f32 0.0, %v671
      %v673 = vpop.f32.mrf.mxu0
      %v674 = vadd.f32 0.0, %v673
      %675 = vmatmul.bf16.gmra.mxu0 %v531
      %v676 = vpop.f32.mrf.mxu0
      %v677 = vadd.f32 0.0, %v676
      %v678 = vpop.f32.mrf.mxu0
      %v679 = vadd.f32 0.0, %v678
      %680 = vmatmul.bf16.gmra.mxu0 %v532
      %v681 = vpop.f32.mrf.mxu0
      %v682 = vadd.f32 0.0, %v681
      %v683 = vpop.f32.mrf.mxu0
      %v684 = vadd.f32 0.0, %v683
      %685 = vmatmul.bf16.gmra.mxu0 %v533
      %v686 = vpop.f32.mrf.mxu0
      %v687 = vadd.f32 0.0, %v686
      %v688 = vpop.f32.mrf.mxu0
      %v689 = vadd.f32 0.0, %v688
      %690 = vmatmul.bf16.gmra.mxu0 %v534
      %v691 = vpop.f32.mrf.mxu0
      %v692 = vadd.f32 0.0, %v691
      %v693 = vpop.f32.mrf.mxu0
      %v694 = vadd.f32 0.0, %v693
      %695 = vmatmul.bf16.gmra.mxu0 %v535
      %v696 = vpop.f32.mrf.mxu0
      %v697 = vadd.f32 0.0, %v696
      %v698 = vpop.f32.mrf.mxu0
      %v699 = vadd.f32 0.0, %v698
      %700 = vmatmul.bf16.gmra.mxu0 %v536
      %v701 = vpop.f32.mrf.mxu0
      %v702 = vadd.f32 0.0, %v701
      %v703 = vpop.f32.mrf.mxu0
      %v704 = vadd.f32 0.0, %v703
      %705 = vmatmul.bf16.gmra.mxu0 %v537
      %v706 = vpop.f32.mrf.mxu0
      %v707 = vadd.f32 0.0, %v706
      %v708 = vpop.f32.mrf.mxu0
      %v709 = vadd.f32 0.0, %v708
      %710 = vmatmul.bf16.gmra.mxu0 %v538
      %v711 = vpop.f32.mrf.mxu0
      %v712 = vadd.f32 0.0, %v711
      %v713 = vpop.f32.mrf.mxu0
      %v714 = vadd.f32 0.0, %v713
      %715 = vmatmul.bf16.gmra.mxu0 %v539
      %v716 = vpop.f32.mrf.mxu0
      %v717 = vadd.f32 0.0, %v716
      %v718 = vpop.f32.mrf.mxu0
      %v719 = vadd.f32 0.0, %v718
      %720 = vmatmul.bf16.gmra.mxu0 %v540
      %v721 = vpop.f32.mrf.mxu0
      %v722 = vadd.f32 0.0, %v721
      %v723 = vpop.f32.mrf.mxu0
      %v724 = vadd.f32 0.0, %v723
      %725 = vdwg.mxu0
      %726 = vmatpush.bf16.msra.mxu0 %v620
      %727 = vmatpush.bf16.msra.mxu0 %v618
      %728 = vmatpush.bf16.msra.mxu0 %v616
      %729 = vmatpush.bf16.msra.mxu0 %v614
      %730 = vmatpush.bf16.msra.mxu0 %v612
      %731 = vmatpush.bf16.msra.mxu0 %v610
      %732 = vmatpush.bf16.msra.mxu0 %v608
      %733 = vmatpush.bf16.msra.mxu0 %v606
      %734 = vmatmul.bf16.gmra.mxu0 %v525
      %v735 = vpop.f32.mrf.mxu0
      %v736 = vadd.f32 0.0, %v735
      %v737 = vpop.f32.mrf.mxu0
      %v738 = vadd.f32 0.0, %v737
      %739 = vmatmul.bf16.gmra.mxu0 %v526
      %v740 = vpop.f32.mrf.mxu0
      %v741 = vadd.f32 0.0, %v740
      %v742 = vpop.f32.mrf.mxu0
      %v743 = vadd.f32 0.0, %v742
      %744 = vmatmul.bf16.gmra.mxu0 %v527
      %v745 = vpop.f32.mrf.mxu0
      %v746 = vadd.f32 0.0, %v745
      %v747 = vpop.f32.mrf.mxu0
      %v748 = vadd.f32 0.0, %v747
      %749 = vmatmul.bf16.gmra.mxu0 %v528
      %v750 = vpop.f32.mrf.mxu0
      %v751 = vadd.f32 0.0, %v750
      %v752 = vpop.f32.mrf.mxu0
      %v753 = vadd.f32 0.0, %v752
      %754 = vmatmul.bf16.gmra.mxu0 %v529
      %v755 = vpop.f32.mrf.mxu0
      %v756 = vadd.f32 0.0, %v755
      %v757 = vpop.f32.mrf.mxu0
      %v758 = vadd.f32 0.0, %v757
      %759 = vmatmul.bf16.gmra.mxu0 %v530
      %v760 = vpop.f32.mrf.mxu0
      %v761 = vadd.f32 0.0, %v760
      %v762 = vpop.f32.mrf.mxu0
      %v763 = vadd.f32 0.0, %v762
      %764 = vmatmul.bf16.gmra.mxu0 %v531
      %v765 = vpop.f32.mrf.mxu0
      %v766 = vadd.f32 0.0, %v765
      %v767 = vpop.f32.mrf.mxu0
      %v768 = vadd.f32 0.0, %v767
      %769 = vmatmul.bf16.gmra.mxu0 %v532
      %v770 = vpop.f32.mrf.mxu0
      %v771 = vadd.f32 0.0, %v770
      %v772 = vpop.f32.mrf.mxu0
      %v773 = vadd.f32 0.0, %v772
      %774 = vmatmul.bf16.gmra.mxu0 %v533
      %v775 = vpop.f32.mrf.mxu0
      %v776 = vadd.f32 0.0, %v775
      %v777 = vpop.f32.mrf.mxu0
      %v778 = vadd.f32 0.0, %v777
      %779 = vmatmul.bf16.gmra.mxu0 %v534
      %v780 = vpop.f32.mrf.mxu0
      %v781 = vadd.f32 0.0, %v780
      %v782 = vpop.f32.mrf.mxu0
      %v783 = vadd.f32 0.0, %v782
      %784 = vmatmul.bf16.gmra.mxu0 %v535
      %v785 = vpop.f32.mrf.mxu0
      %v786 = vadd.f32 0.0, %v785
      %v787 = vpop.f32.mrf.mxu0
      %v788 = vadd.f32 0.0, %v787
      %789 = vmatmul.bf16.gmra.mxu0 %v536
      %v790 = vpop.f32.mrf.mxu0
      %v791 = vadd.f32 0.0, %v790
      %v792 = vpop.f32.mrf.mxu0
      %v793 = vadd.f32 0.0, %v792
      %794 = vmatmul.bf16.gmra.mxu0 %v537
      %v795 = vpop.f32.mrf.mxu0
      %v796 = vadd.f32 0.0, %v795
      %v797 = vpop.f32.mrf.mxu0
      %v798 = vadd.f32 0.0, %v797
      %799 = vmatmul.bf16.gmra.mxu0 %v538
      %v800 = vpop.f32.mrf.mxu0
      %v801 = vadd.f32 0.0, %v800
      %v802 = vpop.f32.mrf.mxu0
      %v803 = vadd.f32 0.0, %v802
      %804 = vmatmul.bf16.gmra.mxu0 %v539
      %v805 = vpop.f32.mrf.mxu0
      %v806 = vadd.f32 0.0, %v805
      %v807 = vpop.f32.mrf.mxu0
      %v808 = vadd.f32 0.0, %v807
      %809 = vmatmul.bf16.gmra.mxu0 %v540
      %v810 = vpop.f32.mrf.mxu0
      %v811 = vadd.f32 0.0, %v810
      %v812 = vpop.f32.mrf.mxu0
      %v813 = vadd.f32 0.0, %v812
      %814 = vdwg.mxu0
      %v815 = vpack.c.bf16 %v649, %v647
      %v816 = vpack.c.bf16 %v738, %v736
      %v817 = vpack.c.bf16 %v654, %v652
      %v818 = vpack.c.bf16 %v743, %v741
      %v819 = vpack.c.bf16 %v659, %v657
      %v820 = vpack.c.bf16 %v748, %v746
      %v821 = vpack.c.bf16 %v664, %v662
      %v822 = vpack.c.bf16 %v753, %v751
      %v823 = vpack.c.bf16 %v669, %v667
      %v824 = vpack.c.bf16 %v758, %v756
      %v825 = vpack.c.bf16 %v674, %v672
      %v826 = vpack.c.bf16 %v763, %v761
      %v827 = vpack.c.bf16 %v679, %v677
      %v828 = vpack.c.bf16 %v768, %v766
      %v829 = vpack.c.bf16 %v684, %v682
      %v830 = vpack.c.bf16 %v773, %v771
      %v831 = vpack.c.bf16 %v689, %v687
      %v832 = vpack.c.bf16 %v778, %v776
      %v833 = vpack.c.bf16 %v694, %v692
      %v834 = vpack.c.bf16 %v783, %v781
      %v835 = vpack.c.bf16 %v699, %v697
      %v836 = vpack.c.bf16 %v788, %v786
      %v837 = vpack.c.bf16 %v704, %v702
      %v838 = vpack.c.bf16 %v793, %v791
      %v839 = vpack.c.bf16 %v709, %v707
      %v840 = vpack.c.bf16 %v798, %v796
      %v841 = vpack.c.bf16 %v714, %v712
      %v842 = vpack.c.bf16 %v803, %v801
      %v843 = vpack.c.bf16 %v719, %v717
      %v844 = vpack.c.bf16 %v808, %v806
      %v845 = vpack.c.bf16 %v724, %v722
      %v846 = vpack.c.bf16 %v813, %v811
      %v847 = vld [vmem:[%s3] sm:$0x3]
      %v849 = vperm.slane %v847, 0
      %v850 = vperm.slane %v847, 1
      %v885 = vunpack.c.l.b16 %v413
      %v886 = vunpack.c.h.b16 %v413
      %v887 = vunpack.c.l.b16 %v414
      %v888 = vunpack.c.h.b16 %v414
      %v889 = vunpack.c.l.b16 %v415
      %v890 = vunpack.c.h.b16 %v415
      %v891 = vunpack.c.l.b16 %v416
      %v892 = vunpack.c.h.b16 %v416
      %v893 = vunpack.c.l.b16 %v417
      %v894 = vunpack.c.h.b16 %v417
      %v895 = vunpack.c.l.b16 %v418
      %v896 = vunpack.c.h.b16 %v418
      %v897 = vunpack.c.l.b16 %v419
      %v898 = vunpack.c.h.b16 %v419
      %v899 = vunpack.c.l.b16 %v420
      %v900 = vunpack.c.h.b16 %v420
      %v901 = vunpack.c.l.b16 %v421
      %v902 = vunpack.c.h.b16 %v421
      %v903 = vunpack.c.l.b16 %v422
      %v904 = vunpack.c.h.b16 %v422
      %v905 = vunpack.c.l.b16 %v423
      %v906 = vunpack.c.h.b16 %v423
      %v907 = vunpack.c.l.b16 %v424
      %v908 = vunpack.c.h.b16 %v424
      %v909 = vunpack.c.l.b16 %v425
      %v910 = vunpack.c.h.b16 %v425
      %v911 = vunpack.c.l.b16 %v426
      %v912 = vunpack.c.h.b16 %v426
      %v913 = vunpack.c.l.b16 %v427
      %v914 = vunpack.c.h.b16 %v427
      %v915 = vunpack.c.l.b16 %v428
      %v916 = vunpack.c.h.b16 %v428
      %v917 = vunpack.c.l.b16 %v429
      %v918 = vunpack.c.h.b16 %v429
      %v919 = vunpack.c.l.b16 %v430
      %v920 = vunpack.c.h.b16 %v430
      %v921 = vunpack.c.l.b16 %v431
      %v922 = vunpack.c.h.b16 %v431
      %v923 = vunpack.c.l.b16 %v432
      %v924 = vunpack.c.h.b16 %v432
      %v925 = vunpack.c.l.b16 %v433
      %v926 = vunpack.c.h.b16 %v433
      %v927 = vunpack.c.l.b16 %v434
      %v928 = vunpack.c.h.b16 %v434
      %v929 = vunpack.c.l.b16 %v435
      %v930 = vunpack.c.h.b16 %v435
      %v931 = vunpack.c.l.b16 %v436
      %v932 = vunpack.c.h.b16 %v436
      %v933 = vunpack.c.l.b16 %v437
      %v934 = vunpack.c.h.b16 %v437
      %v935 = vunpack.c.l.b16 %v438
      %v936 = vunpack.c.h.b16 %v438
      %v937 = vunpack.c.l.b16 %v439
      %v938 = vunpack.c.h.b16 %v439
      %v939 = vunpack.c.l.b16 %v440
      %v940 = vunpack.c.h.b16 %v440
      %v941 = vunpack.c.l.b16 %v441
      %v942 = vunpack.c.h.b16 %v441
      %v943 = vunpack.c.l.b16 %v442
      %v944 = vunpack.c.h.b16 %v442
      %v945 = vunpack.c.l.b16 %v443
      %v946 = vunpack.c.h.b16 %v443
      %v947 = vunpack.c.l.b16 %v444
      %v948 = vunpack.c.h.b16 %v444
      %v949 = vpack.c.b16 %v887, %v885
      %v950 = vpack.c.b16 %v888, %v886
      %v951 = vpack.c.b16 %v891, %v889
      %v952 = vpack.c.b16 %v892, %v890
      %v953 = vpack.c.b16 %v895, %v893
      %v954 = vpack.c.b16 %v896, %v894
      %v955 = vpack.c.b16 %v899, %v897
      %v956 = vpack.c.b16 %v900, %v898
      %v957 = vpack.c.b16 %v903, %v901
      %v958 = vpack.c.b16 %v904, %v902
      %v959 = vpack.c.b16 %v907, %v905
      %v960 = vpack.c.b16 %v908, %v906
      %v961 = vpack.c.b16 %v911, %v909
      %v962 = vpack.c.b16 %v912, %v910
      %v963 = vpack.c.b16 %v915, %v913
      %v964 = vpack.c.b16 %v916, %v914
      %v965 = vpack.c.b16 %v919, %v917
      %v966 = vpack.c.b16 %v920, %v918
      %v967 = vpack.c.b16 %v923, %v921
      %v968 = vpack.c.b16 %v924, %v922
      %v969 = vpack.c.b16 %v927, %v925
      %v970 = vpack.c.b16 %v928, %v926
      %v971 = vpack.c.b16 %v931, %v929
      %v972 = vpack.c.b16 %v932, %v930
      %v973 = vpack.c.b16 %v935, %v933
      %v974 = vpack.c.b16 %v936, %v934
      %v975 = vpack.c.b16 %v939, %v937
      %v976 = vpack.c.b16 %v940, %v938
      %v977 = vpack.c.b16 %v943, %v941
      %v978 = vpack.c.b16 %v944, %v942
      %v979 = vpack.c.b16 %v947, %v945
      %v980 = vpack.c.b16 %v948, %v946
      %1013 = vmatpush.bf16.msra.mxu0 %v829
      %1014 = vmatpush.bf16.msra.mxu0 %v827
      %1015 = vmatpush.bf16.msra.mxu0 %v825
      %1016 = vmatpush.bf16.msra.mxu0 %v823
      %1017 = vmatpush.bf16.msra.mxu0 %v821
      %1018 = vmatpush.bf16.msra.mxu0 %v819
      %1019 = vmatpush.bf16.msra.mxu0 %v817
      %1020 = vmatpush.bf16.msra.mxu0 %v815
      %1021 = vmatmul.bf16.gmra.mxu0 %v949
      %v1022 = vpop.f32.mrf.mxu0
      %v1023 = vadd.f32 %v849, %v1022
      %v1024 = vpop.f32.mrf.mxu0
      %v1025 = vadd.f32 %v849, %v1024
      %1026 = vmatmul.bf16.gmra.mxu0 %v951
      %v1027 = vpop.f32.mrf.mxu0
      %v1028 = vadd.f32 %v849, %v1027
      %v1029 = vpop.f32.mrf.mxu0
      %v1030 = vadd.f32 %v849, %v1029
      %1031 = vmatmul.bf16.gmra.mxu0 %v953
      %v1032 = vpop.f32.mrf.mxu0
      %v1033 = vadd.f32 %v849, %v1032
      %v1034 = vpop.f32.mrf.mxu0
      %v1035 = vadd.f32 %v849, %v1034
      %1036 = vmatmul.bf16.gmra.mxu0 %v955
      %v1037 = vpop.f32.mrf.mxu0
      %v1038 = vadd.f32 %v849, %v1037
      %v1039 = vpop.f32.mrf.mxu0
      %v1040 = vadd.f32 %v849, %v1039
      %1041 = vmatmul.bf16.gmra.mxu0 %v957
      %v1042 = vpop.f32.mrf.mxu0
      %v1043 = vadd.f32 %v849, %v1042
      %v1044 = vpop.f32.mrf.mxu0
      %v1045 = vadd.f32 %v849, %v1044
      %1046 = vmatmul.bf16.gmra.mxu0 %v959
      %v1047 = vpop.f32.mrf.mxu0
      %v1048 = vadd.f32 %v849, %v1047
      %v1049 = vpop.f32.mrf.mxu0
      %v1050 = vadd.f32 %v849, %v1049
      %1051 = vmatmul.bf16.gmra.mxu0 %v961
      %v1052 = vpop.f32.mrf.mxu0
      %v1053 = vadd.f32 %v849, %v1052
      %v1054 = vpop.f32.mrf.mxu0
      %v1055 = vadd.f32 %v849, %v1054
      %1056 = vmatmul.bf16.gmra.mxu0 %v963
      %v1057 = vpop.f32.mrf.mxu0
      %v1058 = vadd.f32 %v849, %v1057
      %v1059 = vpop.f32.mrf.mxu0
      %v1060 = vadd.f32 %v849, %v1059
      %1061 = vmatmul.bf16.gmra.mxu0 %v965
      %v1062 = vpop.f32.mrf.mxu0
      %v1063 = vadd.f32 %v849, %v1062
      %v1064 = vpop.f32.mrf.mxu0
      %v1065 = vadd.f32 %v849, %v1064
      %1066 = vmatmul.bf16.gmra.mxu0 %v967
      %v1067 = vpop.f32.mrf.mxu0
      %v1068 = vadd.f32 %v849, %v1067
      %v1069 = vpop.f32.mrf.mxu0
      %v1070 = vadd.f32 %v849, %v1069
      %1071 = vmatmul.bf16.gmra.mxu0 %v969
      %v1072 = vpop.f32.mrf.mxu0
      %v1073 = vadd.f32 %v849, %v1072
      %v1074 = vpop.f32.mrf.mxu0
      %v1075 = vadd.f32 %v849, %v1074
      %1076 = vmatmul.bf16.gmra.mxu0 %v971
      %v1077 = vpop.f32.mrf.mxu0
      %v1078 = vadd.f32 %v849, %v1077
      %v1079 = vpop.f32.mrf.mxu0
      %v1080 = vadd.f32 %v849, %v1079
      %1081 = vmatmul.bf16.gmra.mxu0 %v973
      %v1082 = vpop.f32.mrf.mxu0
      %v1083 = vadd.f32 %v849, %v1082
      %v1084 = vpop.f32.mrf.mxu0
      %v1085 = vadd.f32 %v849, %v1084
      %1086 = vmatmul.bf16.gmra.mxu0 %v975
      %v1087 = vpop.f32.mrf.mxu0
      %v1088 = vadd.f32 %v849, %v1087
      %v1089 = vpop.f32.mrf.mxu0
      %v1090 = vadd.f32 %v849, %v1089
      %1091 = vmatmul.bf16.gmra.mxu0 %v977
      %v1092 = vpop.f32.mrf.mxu0
      %v1093 = vadd.f32 %v849, %v1092
      %v1094 = vpop.f32.mrf.mxu0
      %v1095 = vadd.f32 %v849, %v1094
      %1096 = vmatmul.bf16.gmra.mxu0 %v979
      %v1097 = vpop.f32.mrf.mxu0
      %v1098 = vadd.f32 %v849, %v1097
      %v1099 = vpop.f32.mrf.mxu0
      %v1100 = vadd.f32 %v849, %v1099
      %1101 = vdwg.mxu0
      %1102 = vmatpush.bf16.msra.mxu0 %v845
      %1103 = vmatpush.bf16.msra.mxu0 %v843
      %1104 = vmatpush.bf16.msra.mxu0 %v841
      %1105 = vmatpush.bf16.msra.mxu0 %v839
      %1106 = vmatpush.bf16.msra.mxu0 %v837
      %1107 = vmatpush.bf16.msra.mxu0 %v835
      %1108 = vmatpush.bf16.msra.mxu0 %v833
      %1109 = vmatpush.bf16.msra.mxu0 %v831
      %1110 = vmatmul.bf16.gmra.mxu0 %v950
      %v1111 = vpop.f32.mrf.mxu0
      %v1112 = vadd.f32 %v1023, %v1111
      %v1113 = vpop.f32.mrf.mxu0
      %v1114 = vadd.f32 %v1025, %v1113
      %1115 = vmatmul.bf16.gmra.mxu0 %v952
      %v1116 = vpop.f32.mrf.mxu0
      %v1117 = vadd.f32 %v1028, %v1116
      %v1118 = vpop.f32.mrf.mxu0
      %v1119 = vadd.f32 %v1030, %v1118
      %1120 = vmatmul.bf16.gmra.mxu0 %v954
      %v1121 = vpop.f32.mrf.mxu0
      %v1122 = vadd.f32 %v1033, %v1121
      %v1123 = vpop.f32.mrf.mxu0
      %v1124 = vadd.f32 %v1035, %v1123
      %1125 = vmatmul.bf16.gmra.mxu0 %v956
      %v1126 = vpop.f32.mrf.mxu0
      %v1127 = vadd.f32 %v1038, %v1126
      %v1128 = vpop.f32.mrf.mxu0
      %v1129 = vadd.f32 %v1040, %v1128
      %1130 = vmatmul.bf16.gmra.mxu0 %v958
      %v1131 = vpop.f32.mrf.mxu0
      %v1132 = vadd.f32 %v1043, %v1131
      %v1133 = vpop.f32.mrf.mxu0
      %v1134 = vadd.f32 %v1045, %v1133
      %1135 = vmatmul.bf16.gmra.mxu0 %v960
      %v1136 = vpop.f32.mrf.mxu0
      %v1137 = vadd.f32 %v1048, %v1136
      %v1138 = vpop.f32.mrf.mxu0
      %v1139 = vadd.f32 %v1050, %v1138
      %1140 = vmatmul.bf16.gmra.mxu0 %v962
      %v1141 = vpop.f32.mrf.mxu0
      %v1142 = vadd.f32 %v1053, %v1141
      %v1143 = vpop.f32.mrf.mxu0
      %v1144 = vadd.f32 %v1055, %v1143
      %1145 = vmatmul.bf16.gmra.mxu0 %v964
      %v1146 = vpop.f32.mrf.mxu0
      %v1147 = vadd.f32 %v1058, %v1146
      %v1148 = vpop.f32.mrf.mxu0
      %v1149 = vadd.f32 %v1060, %v1148
      %1150 = vmatmul.bf16.gmra.mxu0 %v966
      %v1151 = vpop.f32.mrf.mxu0
      %v1152 = vadd.f32 %v1063, %v1151
      %v1153 = vpop.f32.mrf.mxu0
      %v1154 = vadd.f32 %v1065, %v1153
      %1155 = vmatmul.bf16.gmra.mxu0 %v968
      %v1156 = vpop.f32.mrf.mxu0
      %v1157 = vadd.f32 %v1068, %v1156
      %v1158 = vpop.f32.mrf.mxu0
      %v1159 = vadd.f32 %v1070, %v1158
      %1160 = vmatmul.bf16.gmra.mxu0 %v970
      %v1161 = vpop.f32.mrf.mxu0
      %v1162 = vadd.f32 %v1073, %v1161
      %v1163 = vpop.f32.mrf.mxu0
      %v1164 = vadd.f32 %v1075, %v1163
      %1165 = vmatmul.bf16.gmra.mxu0 %v972
      %v1166 = vpop.f32.mrf.mxu0
      %v1167 = vadd.f32 %v1078, %v1166
      %v1168 = vpop.f32.mrf.mxu0
      %v1169 = vadd.f32 %v1080, %v1168
      %1170 = vmatmul.bf16.gmra.mxu0 %v974
      %v1171 = vpop.f32.mrf.mxu0
      %v1172 = vadd.f32 %v1083, %v1171
      %v1173 = vpop.f32.mrf.mxu0
      %v1174 = vadd.f32 %v1085, %v1173
      %1175 = vmatmul.bf16.gmra.mxu0 %v976
      %v1176 = vpop.f32.mrf.mxu0
      %v1177 = vadd.f32 %v1088, %v1176
      %v1178 = vpop.f32.mrf.mxu0
      %v1179 = vadd.f32 %v1090, %v1178
      %1180 = vmatmul.bf16.gmra.mxu0 %v978
      %v1181 = vpop.f32.mrf.mxu0
      %v1182 = vadd.f32 %v1093, %v1181
      %v1183 = vpop.f32.mrf.mxu0
      %v1184 = vadd.f32 %v1095, %v1183
      %1185 = vmatmul.bf16.gmra.mxu0 %v980
      %v1186 = vpop.f32.mrf.mxu0
      %v1187 = vadd.f32 %v1098, %v1186
      %v1188 = vpop.f32.mrf.mxu0
      %v1189 = vadd.f32 %v1100, %v1188
      %1190 = vdwg.mxu0
      %1191 = vmatpush.bf16.msra.mxu0 %v830
      %1192 = vmatpush.bf16.msra.mxu0 %v828
      %1193 = vmatpush.bf16.msra.mxu0 %v826
      %1194 = vmatpush.bf16.msra.mxu0 %v824
      %1195 = vmatpush.bf16.msra.mxu0 %v822
      %1196 = vmatpush.bf16.msra.mxu0 %v820
      %1197 = vmatpush.bf16.msra.mxu0 %v818
      %1198 = vmatpush.bf16.msra.mxu0 %v816
      %1199 = vmatmul.bf16.gmra.mxu0 %v949
      %v1200 = vpop.f32.mrf.mxu0
      %v1201 = vadd.f32 %v850, %v1200
      %v1202 = vpop.f32.mrf.mxu0
      %v1203 = vadd.f32 %v850, %v1202
      %1204 = vmatmul.bf16.gmra.mxu0 %v951
      %v1205 = vpop.f32.mrf.mxu0
      %v1206 = vadd.f32 %v850, %v1205
      %v1207 = vpop.f32.mrf.mxu0
      %v1208 = vadd.f32 %v850, %v1207
      %1209 = vmatmul.bf16.gmra.mxu0 %v953
      %v1210 = vpop.f32.mrf.mxu0
      %v1211 = vadd.f32 %v850, %v1210
      %v1212 = vpop.f32.mrf.mxu0
      %v1213 = vadd.f32 %v850, %v1212
      %1214 = vmatmul.bf16.gmra.mxu0 %v955
      %v1215 = vpop.f32.mrf.mxu0
      %v1216 = vadd.f32 %v850, %v1215
      %v1217 = vpop.f32.mrf.mxu0
      %v1218 = vadd.f32 %v850, %v1217
      %1219 = vmatmul.bf16.gmra.mxu0 %v957
      %v1220 = vpop.f32.mrf.mxu0
      %v1221 = vadd.f32 %v850, %v1220
      %v1222 = vpop.f32.mrf.mxu0
      %v1223 = vadd.f32 %v850, %v1222
      %1224 = vmatmul.bf16.gmra.mxu0 %v959
      %v1225 = vpop.f32.mrf.mxu0
      %v1226 = vadd.f32 %v850, %v1225
      %v1227 = vpop.f32.mrf.mxu0
      %v1228 = vadd.f32 %v850, %v1227
      %1229 = vmatmul.bf16.gmra.mxu0 %v961
      %v1230 = vpop.f32.mrf.mxu0
      %v1231 = vadd.f32 %v850, %v1230
      %v1232 = vpop.f32.mrf.mxu0
      %v1233 = vadd.f32 %v850, %v1232
      %1234 = vmatmul.bf16.gmra.mxu0 %v963
      %v1235 = vpop.f32.mrf.mxu0
      %v1236 = vadd.f32 %v850, %v1235
      %v1237 = vpop.f32.mrf.mxu0
      %v1238 = vadd.f32 %v850, %v1237
      %1239 = vmatmul.bf16.gmra.mxu0 %v965
      %v1240 = vpop.f32.mrf.mxu0
      %v1241 = vadd.f32 %v850, %v1240
      %v1242 = vpop.f32.mrf.mxu0
      %v1243 = vadd.f32 %v850, %v1242
      %1244 = vmatmul.bf16.gmra.mxu0 %v967
      %v1245 = vpop.f32.mrf.mxu0
      %v1246 = vadd.f32 %v850, %v1245
      %v1247 = vpop.f32.mrf.mxu0
      %v1248 = vadd.f32 %v850, %v1247
      %1249 = vmatmul.bf16.gmra.mxu0 %v969
      %v1250 = vpop.f32.mrf.mxu0
      %v1251 = vadd.f32 %v850, %v1250
      %v1252 = vpop.f32.mrf.mxu0
      %v1253 = vadd.f32 %v850, %v1252
      %1254 = vmatmul.bf16.gmra.mxu0 %v971
      %v1255 = vpop.f32.mrf.mxu0
      %v1256 = vadd.f32 %v850, %v1255
      %v1257 = vpop.f32.mrf.mxu0
      %v1258 = vadd.f32 %v850, %v1257
      %1259 = vmatmul.bf16.gmra.mxu0 %v973
      %v1260 = vpop.f32.mrf.mxu0
      %v1261 = vadd.f32 %v850, %v1260
      %v1262 = vpop.f32.mrf.mxu0
      %v1263 = vadd.f32 %v850, %v1262
      %1264 = vmatmul.bf16.gmra.mxu0 %v975
      %v1265 = vpop.f32.mrf.mxu0
      %v1266 = vadd.f32 %v850, %v1265
      %v1267 = vpop.f32.mrf.mxu0
      %v1268 = vadd.f32 %v850, %v1267
      %1269 = vmatmul.bf16.gmra.mxu0 %v977
      %v1270 = vpop.f32.mrf.mxu0
      %v1271 = vadd.f32 %v850, %v1270
      %v1272 = vpop.f32.mrf.mxu0
      %v1273 = vadd.f32 %v850, %v1272
      %1274 = vmatmul.bf16.gmra.mxu0 %v979
      %v1275 = vpop.f32.mrf.mxu0
      %v1276 = vadd.f32 %v850, %v1275
      %v1277 = vpop.f32.mrf.mxu0
      %v1278 = vadd.f32 %v850, %v1277
      %1279 = vdwg.mxu0
      %1280 = vmatpush.bf16.msra.mxu0 %v846
      %1281 = vmatpush.bf16.msra.mxu0 %v844
      %1282 = vmatpush.bf16.msra.mxu0 %v842
      %1283 = vmatpush.bf16.msra.mxu0 %v840
      %1284 = vmatpush.bf16.msra.mxu0 %v838
      %1285 = vmatpush.bf16.msra.mxu0 %v836
      %1286 = vmatpush.bf16.msra.mxu0 %v834
      %1287 = vmatpush.bf16.msra.mxu0 %v832
      %1288 = vmatmul.bf16.gmra.mxu0 %v950
      %v1289 = vpop.f32.mrf.mxu0
      %v1290 = vadd.f32 %v1201, %v1289
      %v1291 = vpop.f32.mrf.mxu0
      %v1292 = vadd.f32 %v1203, %v1291
      %1293 = vmatmul.bf16.gmra.mxu0 %v952
      %v1294 = vpop.f32.mrf.mxu0
      %v1295 = vadd.f32 %v1206, %v1294
      %v1296 = vpop.f32.mrf.mxu0
      %v1297 = vadd.f32 %v1208, %v1296
      %1298 = vmatmul.bf16.gmra.mxu0 %v954
      %v1299 = vpop.f32.mrf.mxu0
      %v1300 = vadd.f32 %v1211, %v1299
      %v1301 = vpop.f32.mrf.mxu0
      %v1302 = vadd.f32 %v1213, %v1301
      %1303 = vmatmul.bf16.gmra.mxu0 %v956
      %v1304 = vpop.f32.mrf.mxu0
      %v1305 = vadd.f32 %v1216, %v1304
      %v1306 = vpop.f32.mrf.mxu0
      %v1307 = vadd.f32 %v1218, %v1306
      %1308 = vmatmul.bf16.gmra.mxu0 %v958
      %v1309 = vpop.f32.mrf.mxu0
      %v1310 = vadd.f32 %v1221, %v1309
      %v1311 = vpop.f32.mrf.mxu0
      %v1312 = vadd.f32 %v1223, %v1311
      %1313 = vmatmul.bf16.gmra.mxu0 %v960
      %v1314 = vpop.f32.mrf.mxu0
      %v1315 = vadd.f32 %v1226, %v1314
      %v1316 = vpop.f32.mrf.mxu0
      %v1317 = vadd.f32 %v1228, %v1316
      %1318 = vmatmul.bf16.gmra.mxu0 %v962
      %v1319 = vpop.f32.mrf.mxu0
      %v1320 = vadd.f32 %v1231, %v1319
      %v1321 = vpop.f32.mrf.mxu0
      %v1322 = vadd.f32 %v1233, %v1321
      %1323 = vmatmul.bf16.gmra.mxu0 %v964
      %v1324 = vpop.f32.mrf.mxu0
      %v1325 = vadd.f32 %v1236, %v1324
      %v1326 = vpop.f32.mrf.mxu0
      %v1327 = vadd.f32 %v1238, %v1326
      %1328 = vmatmul.bf16.gmra.mxu0 %v966
      %v1329 = vpop.f32.mrf.mxu0
      %v1330 = vadd.f32 %v1241, %v1329
      %v1331 = vpop.f32.mrf.mxu0
      %v1332 = vadd.f32 %v1243, %v1331
      %1333 = vmatmul.bf16.gmra.mxu0 %v968
      %v1334 = vpop.f32.mrf.mxu0
      %v1335 = vadd.f32 %v1246, %v1334
      %v1336 = vpop.f32.mrf.mxu0
      %v1337 = vadd.f32 %v1248, %v1336
      %1338 = vmatmul.bf16.gmra.mxu0 %v970
      %v1339 = vpop.f32.mrf.mxu0
      %v1340 = vadd.f32 %v1251, %v1339
      %v1341 = vpop.f32.mrf.mxu0
      %v1342 = vadd.f32 %v1253, %v1341
      %1343 = vmatmul.bf16.gmra.mxu0 %v972
      %v1344 = vpop.f32.mrf.mxu0
      %v1345 = vadd.f32 %v1256, %v1344
      %v1346 = vpop.f32.mrf.mxu0
      %v1347 = vadd.f32 %v1258, %v1346
      %1348 = vmatmul.bf16.gmra.mxu0 %v974
      %v1349 = vpop.f32.mrf.mxu0
      %v1350 = vadd.f32 %v1261, %v1349
      %v1351 = vpop.f32.mrf.mxu0
      %v1352 = vadd.f32 %v1263, %v1351
      %1353 = vmatmul.bf16.gmra.mxu0 %v976
      %v1354 = vpop.f32.mrf.mxu0
      %v1355 = vadd.f32 %v1266, %v1354
      %v1356 = vpop.f32.mrf.mxu0
      %v1357 = vadd.f32 %v1268, %v1356
      %1358 = vmatmul.bf16.gmra.mxu0 %v978
      %v1359 = vpop.f32.mrf.mxu0
      %v1360 = vadd.f32 %v1271, %v1359
      %v1361 = vpop.f32.mrf.mxu0
      %v1362 = vadd.f32 %v1273, %v1361
      %1363 = vmatmul.bf16.gmra.mxu0 %v980
      %v1364 = vpop.f32.mrf.mxu0
      %v1365 = vadd.f32 %v1276, %v1364
      %v1366 = vpop.f32.mrf.mxu0
      %v1367 = vadd.f32 %v1278, %v1366
      %1368 = vdwg.mxu0
      %v1369 = vmax.f32 %v1112, 0.0
      %v1370 = vmax.f32 %v1290, 0.0
      %v1371 = vmax.f32 %v1114, 0.0
      %v1372 = vmax.f32 %v1292, 0.0
      %v1373 = vmax.f32 %v1117, 0.0
      %v1374 = vmax.f32 %v1295, 0.0
      %v1375 = vmax.f32 %v1119, 0.0
      %v1376 = vmax.f32 %v1297, 0.0
      %v1377 = vmax.f32 %v1122, 0.0
      %v1378 = vmax.f32 %v1300, 0.0
      %v1379 = vmax.f32 %v1124, 0.0
      %v1380 = vmax.f32 %v1302, 0.0
      %v1381 = vmax.f32 %v1127, 0.0
      %v1382 = vmax.f32 %v1305, 0.0
      %v1383 = vmax.f32 %v1129, 0.0
      %v1384 = vmax.f32 %v1307, 0.0
      %v1385 = vmax.f32 %v1132, 0.0
      %v1386 = vmax.f32 %v1310, 0.0
      %v1387 = vmax.f32 %v1134, 0.0
      %v1388 = vmax.f32 %v1312, 0.0
      %v1389 = vmax.f32 %v1137, 0.0
      %v1390 = vmax.f32 %v1315, 0.0
      %v1391 = vmax.f32 %v1139, 0.0
      %v1392 = vmax.f32 %v1317, 0.0
      %v1393 = vmax.f32 %v1142, 0.0
      %v1394 = vmax.f32 %v1320, 0.0
      %v1395 = vmax.f32 %v1144, 0.0
      %v1396 = vmax.f32 %v1322, 0.0
      %v1397 = vmax.f32 %v1147, 0.0
      %v1398 = vmax.f32 %v1325, 0.0
      %v1399 = vmax.f32 %v1149, 0.0
      %v1400 = vmax.f32 %v1327, 0.0
      %v1401 = vmax.f32 %v1152, 0.0
      %v1402 = vmax.f32 %v1330, 0.0
      %v1403 = vmax.f32 %v1154, 0.0
      %v1404 = vmax.f32 %v1332, 0.0
      %v1405 = vmax.f32 %v1157, 0.0
      %v1406 = vmax.f32 %v1335, 0.0
      %v1407 = vmax.f32 %v1159, 0.0
      %v1408 = vmax.f32 %v1337, 0.0
      %v1409 = vmax.f32 %v1162, 0.0
      %v1410 = vmax.f32 %v1340, 0.0
      %v1411 = vmax.f32 %v1164, 0.0
      %v1412 = vmax.f32 %v1342, 0.0
      %v1413 = vmax.f32 %v1167, 0.0
      %v1414 = vmax.f32 %v1345, 0.0
      %v1415 = vmax.f32 %v1169, 0.0
      %v1416 = vmax.f32 %v1347, 0.0
      %v1417 = vmax.f32 %v1172, 0.0
      %v1418 = vmax.f32 %v1350, 0.0
      %v1419 = vmax.f32 %v1174, 0.0
      %v1420 = vmax.f32 %v1352, 0.0
      %v1421 = vmax.f32 %v1177, 0.0
      %v1422 = vmax.f32 %v1355, 0.0
      %v1423 = vmax.f32 %v1179, 0.0
      %v1424 = vmax.f32 %v1357, 0.0
      %v1425 = vmax.f32 %v1182, 0.0
      %v1426 = vmax.f32 %v1360, 0.0
      %v1427 = vmax.f32 %v1184, 0.0
      %v1428 = vmax.f32 %v1362, 0.0
      %v1429 = vmax.f32 %v1187, 0.0
      %v1430 = vmax.f32 %v1365, 0.0
      %v1431 = vmax.f32 %v1189, 0.0
      %v1432 = vmax.f32 %v1367, 0.0
      %v1433 = vpack.c.bf16 %v1371, %v1369
      %v1434 = vpack.c.bf16 %v1372, %v1370
      %v1435 = vpack.c.bf16 %v1375, %v1373
      %v1436 = vpack.c.bf16 %v1376, %v1374
      %v1437 = vpack.c.bf16 %v1379, %v1377
      %v1438 = vpack.c.bf16 %v1380, %v1378
      %v1439 = vpack.c.bf16 %v1383, %v1381
      %v1440 = vpack.c.bf16 %v1384, %v1382
      %v1441 = vpack.c.bf16 %v1387, %v1385
      %v1442 = vpack.c.bf16 %v1388, %v1386
      %v1443 = vpack.c.bf16 %v1391, %v1389
      %v1444 = vpack.c.bf16 %v1392, %v1390
      %v1445 = vpack.c.bf16 %v1395, %v1393
      %v1446 = vpack.c.bf16 %v1396, %v1394
      %v1447 = vpack.c.bf16 %v1399, %v1397
      %v1448 = vpack.c.bf16 %v1400, %v1398
      %v1449 = vpack.c.bf16 %v1403, %v1401
      %v1450 = vpack.c.bf16 %v1404, %v1402
      %v1451 = vpack.c.bf16 %v1407, %v1405
      %v1452 = vpack.c.bf16 %v1408, %v1406
      %v1453 = vpack.c.bf16 %v1411, %v1409
      %v1454 = vpack.c.bf16 %v1412, %v1410
      %v1455 = vpack.c.bf16 %v1415, %v1413
      %v1456 = vpack.c.bf16 %v1416, %v1414
      %v1457 = vpack.c.bf16 %v1419, %v1417
      %v1458 = vpack.c.bf16 %v1420, %v1418
      %v1459 = vpack.c.bf16 %v1423, %v1421
      %v1460 = vpack.c.bf16 %v1424, %v1422
      %v1461 = vpack.c.bf16 %v1427, %v1425
      %v1462 = vpack.c.bf16 %v1428, %v1426
      %v1463 = vpack.c.bf16 %v1431, %v1429
      %v1464 = vpack.c.bf16 %v1432, %v1430
      %v1465 = vld [vmem:[%s4] sm:$0xff]
      %v1466 = vld [vmem:[%s4 + $0x8] sm:$0xff]
      %v1467 = vld [vmem:[%s4 + $0x10] sm:$0xff]
      %v1468 = vld [vmem:[%s4 + $0x18] sm:$0xff]
      %v1469 = vld [vmem:[%s4 + $0x20] sm:$0xff]
      %v1470 = vld [vmem:[%s4 + $0x28] sm:$0xff]
      %v1471 = vld [vmem:[%s4 + $0x30] sm:$0xff]
      %v1472 = vld [vmem:[%s4 + $0x38] sm:$0xff]
      %v1473 = vld [vmem:[%s4 + $0x40] sm:$0xff]
      %v1474 = vld [vmem:[%s4 + $0x48] sm:$0xff]
      %v1475 = vld [vmem:[%s4 + $0x50] sm:$0xff]
      %v1476 = vld [vmem:[%s4 + $0x58] sm:$0xff]
      %v1477 = vld [vmem:[%s4 + $0x60] sm:$0xff]
      %v1478 = vld [vmem:[%s4 + $0x68] sm:$0xff]
      %v1479 = vld [vmem:[%s4 + $0x70] sm:$0xff]
      %v1480 = vld [vmem:[%s4 + $0x78] sm:$0xff]
      %v1481 = vld [vmem:[%s4 + $0x80] sm:$0xff]
      %v1482 = vld [vmem:[%s4 + $0x88] sm:$0xff]
      %v1483 = vld [vmem:[%s4 + $0x90] sm:$0xff]
      %v1484 = vld [vmem:[%s4 + $0x98] sm:$0xff]
      %v1485 = vld [vmem:[%s4 + $0xa0] sm:$0xff]
      %v1486 = vld [vmem:[%s4 + $0xa8] sm:$0xff]
      %v1487 = vld [vmem:[%s4 + $0xb0] sm:$0xff]
      %v1488 = vld [vmem:[%s4 + $0xb8] sm:$0xff]
      %v1489 = vld [vmem:[%s4 + $0xc0] sm:$0xff]
      %v1490 = vld [vmem:[%s4 + $0xc8] sm:$0xff]
      %v1491 = vld [vmem:[%s4 + $0xd0] sm:$0xff]
      %v1492 = vld [vmem:[%s4 + $0xd8] sm:$0xff]
      %v1493 = vld [vmem:[%s4 + $0xe0] sm:$0xff]
      %v1494 = vld [vmem:[%s4 + $0xe8] sm:$0xff]
      %v1495 = vld [vmem:[%s4 + $0xf0] sm:$0xff]
      %v1496 = vld [vmem:[%s4 + $0xf8] sm:$0xff]
      %v1529 = vunpack.c.l.b16 %v1465
      %v1530 = vunpack.c.h.b16 %v1465
      %v1531 = vunpack.c.l.b16 %v1466
      %v1532 = vunpack.c.h.b16 %v1466
      %v1533 = vunpack.c.l.b16 %v1467
      %v1534 = vunpack.c.h.b16 %v1467
      %v1535 = vunpack.c.l.b16 %v1468
      %v1536 = vunpack.c.h.b16 %v1468
      %v1537 = vunpack.c.l.b16 %v1469
      %v1538 = vunpack.c.h.b16 %v1469
      %v1539 = vunpack.c.l.b16 %v1470
      %v1540 = vunpack.c.h.b16 %v1470
      %v1541 = vunpack.c.l.b16 %v1471
      %v1542 = vunpack.c.h.b16 %v1471
      %v1543 = vunpack.c.l.b16 %v1472
      %v1544 = vunpack.c.h.b16 %v1472
      %v1545 = vunpack.c.l.b16 %v1473
      %v1546 = vunpack.c.h.b16 %v1473
      %v1547 = vunpack.c.l.b16 %v1474
      %v1548 = vunpack.c.h.b16 %v1474
      %v1549 = vunpack.c.l.b16 %v1475
      %v1550 = vunpack.c.h.b16 %v1475
      %v1551 = vunpack.c.l.b16 %v1476
      %v1552 = vunpack.c.h.b16 %v1476
      %v1553 = vunpack.c.l.b16 %v1477
      %v1554 = vunpack.c.h.b16 %v1477
      %v1555 = vunpack.c.l.b16 %v1478
      %v1556 = vunpack.c.h.b16 %v1478
      %v1557 = vunpack.c.l.b16 %v1479
      %v1558 = vunpack.c.h.b16 %v1479
      %v1559 = vunpack.c.l.b16 %v1480
      %v1560 = vunpack.c.h.b16 %v1480
      %v1561 = vunpack.c.l.b16 %v1481
      %v1562 = vunpack.c.h.b16 %v1481
      %v1563 = vunpack.c.l.b16 %v1482
      %v1564 = vunpack.c.h.b16 %v1482
      %v1565 = vunpack.c.l.b16 %v1483
      %v1566 = vunpack.c.h.b16 %v1483
      %v1567 = vunpack.c.l.b16 %v1484
      %v1568 = vunpack.c.h.b16 %v1484
      %v1569 = vunpack.c.l.b16 %v1485
      %v1570 = vunpack.c.h.b16 %v1485
      %v1571 = vunpack.c.l.b16 %v1486
      %v1572 = vunpack.c.h.b16 %v1486
      %v1573 = vunpack.c.l.b16 %v1487
      %v1574 = vunpack.c.h.b16 %v1487
      %v1575 = vunpack.c.l.b16 %v1488
      %v1576 = vunpack.c.h.b16 %v1488
      %v1577 = vunpack.c.l.b16 %v1489
      %v1578 = vunpack.c.h.b16 %v1489
      %v1579 = vunpack.c.l.b16 %v1490
      %v1580 = vunpack.c.h.b16 %v1490
      %v1581 = vunpack.c.l.b16 %v1491
      %v1582 = vunpack.c.h.b16 %v1491
      %v1583 = vunpack.c.l.b16 %v1492
      %v1584 = vunpack.c.h.b16 %v1492
      %v1585 = vunpack.c.l.b16 %v1493
      %v1586 = vunpack.c.h.b16 %v1493
      %v1587 = vunpack.c.l.b16 %v1494
      %v1588 = vunpack.c.h.b16 %v1494
      %v1589 = vunpack.c.l.b16 %v1495
      %v1590 = vunpack.c.h.b16 %v1495
      %v1591 = vunpack.c.l.b16 %v1496
      %v1592 = vunpack.c.h.b16 %v1496
      %v1593 = vpack.c.b16 %v1531, %v1529
      %v1594 = vpack.c.b16 %v1532, %v1530
      %v1595 = vpack.c.b16 %v1535, %v1533
      %v1596 = vpack.c.b16 %v1536, %v1534
      %v1597 = vpack.c.b16 %v1539, %v1537
      %v1598 = vpack.c.b16 %v1540, %v1538
      %v1599 = vpack.c.b16 %v1543, %v1541
      %v1600 = vpack.c.b16 %v1544, %v1542
      %v1601 = vpack.c.b16 %v1547, %v1545
      %v1602 = vpack.c.b16 %v1548, %v1546
      %v1603 = vpack.c.b16 %v1551, %v1549
      %v1604 = vpack.c.b16 %v1552, %v1550
      %v1605 = vpack.c.b16 %v1555, %v1553
      %v1606 = vpack.c.b16 %v1556, %v1554
      %v1607 = vpack.c.b16 %v1559, %v1557
      %v1608 = vpack.c.b16 %v1560, %v1558
      %v1609 = vpack.c.b16 %v1563, %v1561
      %v1610 = vpack.c.b16 %v1564, %v1562
      %v1611 = vpack.c.b16 %v1567, %v1565
      %v1612 = vpack.c.b16 %v1568, %v1566
      %v1613 = vpack.c.b16 %v1571, %v1569
      %v1614 = vpack.c.b16 %v1572, %v1570
      %v1615 = vpack.c.b16 %v1575, %v1573
      %v1616 = vpack.c.b16 %v1576, %v1574
      %v1617 = vpack.c.b16 %v1579, %v1577
      %v1618 = vpack.c.b16 %v1580, %v1578
      %v1619 = vpack.c.b16 %v1583, %v1581
      %v1620 = vpack.c.b16 %v1584, %v1582
      %v1621 = vpack.c.b16 %v1587, %v1585
      %v1622 = vpack.c.b16 %v1588, %v1586
      %v1623 = vpack.c.b16 %v1591, %v1589
      %v1624 = vpack.c.b16 %v1592, %v1590
      %1657 = vmatpush.bf16.msra.mxu0 %v1607
      %1658 = vmatpush.bf16.msra.mxu0 %v1605
      %1659 = vmatpush.bf16.msra.mxu0 %v1603
      %1660 = vmatpush.bf16.msra.mxu0 %v1601
      %1661 = vmatpush.bf16.msra.mxu0 %v1599
      %1662 = vmatpush.bf16.msra.mxu0 %v1597
      %1663 = vmatpush.bf16.msra.mxu0 %v1595
      %1664 = vmatpush.bf16.msra.mxu0 %v1593
      %1665 = vmatmul.bf16.gmra.mxu0 %v1433
      %v1666 = vpop.f32.mrf.mxu0
      %v1667 = vadd.f32 0.0, %v1666
      %v1668 = vpop.f32.mrf.mxu0
      %v1669 = vadd.f32 0.0, %v1668
      %1670 = vmatmul.bf16.gmra.mxu0 %v1435
      %v1671 = vpop.f32.mrf.mxu0
      %v1672 = vadd.f32 0.0, %v1671
      %v1673 = vpop.f32.mrf.mxu0
      %v1674 = vadd.f32 0.0, %v1673
      %1675 = vmatmul.bf16.gmra.mxu0 %v1437
      %v1676 = vpop.f32.mrf.mxu0
      %v1677 = vadd.f32 0.0, %v1676
      %v1678 = vpop.f32.mrf.mxu0
      %v1679 = vadd.f32 0.0, %v1678
      %1680 = vmatmul.bf16.gmra.mxu0 %v1439
      %v1681 = vpop.f32.mrf.mxu0
      %v1682 = vadd.f32 0.0, %v1681
      %v1683 = vpop.f32.mrf.mxu0
      %v1684 = vadd.f32 0.0, %v1683
      %1685 = vmatmul.bf16.gmra.mxu0 %v1441
      %v1686 = vpop.f32.mrf.mxu0
      %v1687 = vadd.f32 0.0, %v1686
      %v1688 = vpop.f32.mrf.mxu0
      %v1689 = vadd.f32 0.0, %v1688
      %1690 = vmatmul.bf16.gmra.mxu0 %v1443
      %v1691 = vpop.f32.mrf.mxu0
      %v1692 = vadd.f32 0.0, %v1691
      %v1693 = vpop.f32.mrf.mxu0
      %v1694 = vadd.f32 0.0, %v1693
      %1695 = vmatmul.bf16.gmra.mxu0 %v1445
      %v1696 = vpop.f32.mrf.mxu0
      %v1697 = vadd.f32 0.0, %v1696
      %v1698 = vpop.f32.mrf.mxu0
      %v1699 = vadd.f32 0.0, %v1698
      %1700 = vmatmul.bf16.gmra.mxu0 %v1447
      %v1701 = vpop.f32.mrf.mxu0
      %v1702 = vadd.f32 0.0, %v1701
      %v1703 = vpop.f32.mrf.mxu0
      %v1704 = vadd.f32 0.0, %v1703
      %1705 = vmatmul.bf16.gmra.mxu0 %v1449
      %v1706 = vpop.f32.mrf.mxu0
      %v1707 = vadd.f32 0.0, %v1706
      %v1708 = vpop.f32.mrf.mxu0
      %v1709 = vadd.f32 0.0, %v1708
      %1710 = vmatmul.bf16.gmra.mxu0 %v1451
      %v1711 = vpop.f32.mrf.mxu0
      %v1712 = vadd.f32 0.0, %v1711
      %v1713 = vpop.f32.mrf.mxu0
      %v1714 = vadd.f32 0.0, %v1713
      %1715 = vmatmul.bf16.gmra.mxu0 %v1453
      %v1716 = vpop.f32.mrf.mxu0
      %v1717 = vadd.f32 0.0, %v1716
      %v1718 = vpop.f32.mrf.mxu0
      %v1719 = vadd.f32 0.0, %v1718
      %1720 = vmatmul.bf16.gmra.mxu0 %v1455
      %v1721 = vpop.f32.mrf.mxu0
      %v1722 = vadd.f32 0.0, %v1721
      %v1723 = vpop.f32.mrf.mxu0
      %v1724 = vadd.f32 0.0, %v1723
      %1725 = vmatmul.bf16.gmra.mxu0 %v1457
      %v1726 = vpop.f32.mrf.mxu0
      %v1727 = vadd.f32 0.0, %v1726
      %v1728 = vpop.f32.mrf.mxu0
      %v1729 = vadd.f32 0.0, %v1728
      %1730 = vmatmul.bf16.gmra.mxu0 %v1459
      %v1731 = vpop.f32.mrf.mxu0
      %v1732 = vadd.f32 0.0, %v1731
      %v1733 = vpop.f32.mrf.mxu0
      %v1734 = vadd.f32 0.0, %v1733
      %1735 = vmatmul.bf16.gmra.mxu0 %v1461
      %v1736 = vpop.f32.mrf.mxu0
      %v1737 = vadd.f32 0.0, %v1736
      %v1738 = vpop.f32.mrf.mxu0
      %v1739 = vadd.f32 0.0, %v1738
      %1740 = vmatmul.bf16.gmra.mxu0 %v1463
      %v1741 = vpop.f32.mrf.mxu0
      %v1742 = vadd.f32 0.0, %v1741
      %v1743 = vpop.f32.mrf.mxu0
      %v1744 = vadd.f32 0.0, %v1743
      %1745 = vdwg.mxu0
      %1746 = vmatpush.bf16.msra.mxu0 %v1623
      %1747 = vmatpush.bf16.msra.mxu0 %v1621
      %1748 = vmatpush.bf16.msra.mxu0 %v1619
      %1749 = vmatpush.bf16.msra.mxu0 %v1617
      %1750 = vmatpush.bf16.msra.mxu0 %v1615
      %1751 = vmatpush.bf16.msra.mxu0 %v1613
      %1752 = vmatpush.bf16.msra.mxu0 %v1611
      %1753 = vmatpush.bf16.msra.mxu0 %v1609
      %1754 = vmatmul.bf16.gmra.mxu0 %v1434
      %v1755 = vpop.f32.mrf.mxu0
      %v1756 = vadd.f32 %v1667, %v1755
      %v1757 = vpop.f32.mrf.mxu0
      %v1758 = vadd.f32 %v1669, %v1757
      %1759 = vmatmul.bf16.gmra.mxu0 %v1436
      %v1760 = vpop.f32.mrf.mxu0
      %v1761 = vadd.f32 %v1672, %v1760
      %v1762 = vpop.f32.mrf.mxu0
      %v1763 = vadd.f32 %v1674, %v1762
      %1764 = vmatmul.bf16.gmra.mxu0 %v1438
      %v1765 = vpop.f32.mrf.mxu0
      %v1766 = vadd.f32 %v1677, %v1765
      %v1767 = vpop.f32.mrf.mxu0
      %v1768 = vadd.f32 %v1679, %v1767
      %1769 = vmatmul.bf16.gmra.mxu0 %v1440
      %v1770 = vpop.f32.mrf.mxu0
      %v1771 = vadd.f32 %v1682, %v1770
      %v1772 = vpop.f32.mrf.mxu0
      %v1773 = vadd.f32 %v1684, %v1772
      %1774 = vmatmul.bf16.gmra.mxu0 %v1442
      %v1775 = vpop.f32.mrf.mxu0
      %v1776 = vadd.f32 %v1687, %v1775
      %v1777 = vpop.f32.mrf.mxu0
      %v1778 = vadd.f32 %v1689, %v1777
      %1779 = vmatmul.bf16.gmra.mxu0 %v1444
      %v1780 = vpop.f32.mrf.mxu0
      %v1781 = vadd.f32 %v1692, %v1780
      %v1782 = vpop.f32.mrf.mxu0
      %v1783 = vadd.f32 %v1694, %v1782
      %1784 = vmatmul.bf16.gmra.mxu0 %v1446
      %v1785 = vpop.f32.mrf.mxu0
      %v1786 = vadd.f32 %v1697, %v1785
      %v1787 = vpop.f32.mrf.mxu0
      %v1788 = vadd.f32 %v1699, %v1787
      %1789 = vmatmul.bf16.gmra.mxu0 %v1448
      %v1790 = vpop.f32.mrf.mxu0
      %v1791 = vadd.f32 %v1702, %v1790
      %v1792 = vpop.f32.mrf.mxu0
      %v1793 = vadd.f32 %v1704, %v1792
      %1794 = vmatmul.bf16.gmra.mxu0 %v1450
      %v1795 = vpop.f32.mrf.mxu0
      %v1796 = vadd.f32 %v1707, %v1795
      %v1797 = vpop.f32.mrf.mxu0
      %v1798 = vadd.f32 %v1709, %v1797
      %1799 = vmatmul.bf16.gmra.mxu0 %v1452
      %v1800 = vpop.f32.mrf.mxu0
      %v1801 = vadd.f32 %v1712, %v1800
      %v1802 = vpop.f32.mrf.mxu0
      %v1803 = vadd.f32 %v1714, %v1802
      %1804 = vmatmul.bf16.gmra.mxu0 %v1454
      %v1805 = vpop.f32.mrf.mxu0
      %v1806 = vadd.f32 %v1717, %v1805
      %v1807 = vpop.f32.mrf.mxu0
      %v1808 = vadd.f32 %v1719, %v1807
      %1809 = vmatmul.bf16.gmra.mxu0 %v1456
      %v1810 = vpop.f32.mrf.mxu0
      %v1811 = vadd.f32 %v1722, %v1810
      %v1812 = vpop.f32.mrf.mxu0
      %v1813 = vadd.f32 %v1724, %v1812
      %1814 = vmatmul.bf16.gmra.mxu0 %v1458
      %v1815 = vpop.f32.mrf.mxu0
      %v1816 = vadd.f32 %v1727, %v1815
      %v1817 = vpop.f32.mrf.mxu0
      %v1818 = vadd.f32 %v1729, %v1817
      %1819 = vmatmul.bf16.gmra.mxu0 %v1460
      %v1820 = vpop.f32.mrf.mxu0
      %v1821 = vadd.f32 %v1732, %v1820
      %v1822 = vpop.f32.mrf.mxu0
      %v1823 = vadd.f32 %v1734, %v1822
      %1824 = vmatmul.bf16.gmra.mxu0 %v1462
      %v1825 = vpop.f32.mrf.mxu0
      %v1826 = vadd.f32 %v1737, %v1825
      %v1827 = vpop.f32.mrf.mxu0
      %v1828 = vadd.f32 %v1739, %v1827
      %1829 = vmatmul.bf16.gmra.mxu0 %v1464
      %v1830 = vpop.f32.mrf.mxu0
      %v1831 = vadd.f32 %v1742, %v1830
      %v1832 = vpop.f32.mrf.mxu0
      %v1833 = vadd.f32 %v1744, %v1832
      %1834 = vdwg.mxu0
      %1835 = vmatpush.bf16.msra.mxu0 %v1608
      %1836 = vmatpush.bf16.msra.mxu0 %v1606
      %1837 = vmatpush.bf16.msra.mxu0 %v1604
      %1838 = vmatpush.bf16.msra.mxu0 %v1602
      %1839 = vmatpush.bf16.msra.mxu0 %v1600
      %1840 = vmatpush.bf16.msra.mxu0 %v1598
      %1841 = vmatpush.bf16.msra.mxu0 %v1596
      %1842 = vmatpush.bf16.msra.mxu0 %v1594
      %1843 = vmatmul.bf16.gmra.mxu0 %v1433
      %v1844 = vpop.f32.mrf.mxu0
      %v1845 = vadd.f32 0.0, %v1844
      %v1846 = vpop.f32.mrf.mxu0
      %v1847 = vadd.f32 0.0, %v1846
      %1848 = vmatmul.bf16.gmra.mxu0 %v1435
      %v1849 = vpop.f32.mrf.mxu0
      %v1850 = vadd.f32 0.0, %v1849
      %v1851 = vpop.f32.mrf.mxu0
      %v1852 = vadd.f32 0.0, %v1851
      %1853 = vmatmul.bf16.gmra.mxu0 %v1437
      %v1854 = vpop.f32.mrf.mxu0
      %v1855 = vadd.f32 0.0, %v1854
      %v1856 = vpop.f32.mrf.mxu0
      %v1857 = vadd.f32 0.0, %v1856
      %1858 = vmatmul.bf16.gmra.mxu0 %v1439
      %v1859 = vpop.f32.mrf.mxu0
      %v1860 = vadd.f32 0.0, %v1859
      %v1861 = vpop.f32.mrf.mxu0
      %v1862 = vadd.f32 0.0, %v1861
      %1863 = vmatmul.bf16.gmra.mxu0 %v1441
      %v1864 = vpop.f32.mrf.mxu0
      %v1865 = vadd.f32 0.0, %v1864
      %v1866 = vpop.f32.mrf.mxu0
      %v1867 = vadd.f32 0.0, %v1866
      %1868 = vmatmul.bf16.gmra.mxu0 %v1443
      %v1869 = vpop.f32.mrf.mxu0
      %v1870 = vadd.f32 0.0, %v1869
      %v1871 = vpop.f32.mrf.mxu0
      %v1872 = vadd.f32 0.0, %v1871
      %1873 = vmatmul.bf16.gmra.mxu0 %v1445
      %v1874 = vpop.f32.mrf.mxu0
      %v1875 = vadd.f32 0.0, %v1874
      %v1876 = vpop.f32.mrf.mxu0
      %v1877 = vadd.f32 0.0, %v1876
      %1878 = vmatmul.bf16.gmra.mxu0 %v1447
      %v1879 = vpop.f32.mrf.mxu0
      %v1880 = vadd.f32 0.0, %v1879
      %v1881 = vpop.f32.mrf.mxu0
      %v1882 = vadd.f32 0.0, %v1881
      %1883 = vmatmul.bf16.gmra.mxu0 %v1449
      %v1884 = vpop.f32.mrf.mxu0
      %v1885 = vadd.f32 0.0, %v1884
      %v1886 = vpop.f32.mrf.mxu0
      %v1887 = vadd.f32 0.0, %v1886
      %1888 = vmatmul.bf16.gmra.mxu0 %v1451
      %v1889 = vpop.f32.mrf.mxu0
      %v1890 = vadd.f32 0.0, %v1889
      %v1891 = vpop.f32.mrf.mxu0
      %v1892 = vadd.f32 0.0, %v1891
      %1893 = vmatmul.bf16.gmra.mxu0 %v1453
      %v1894 = vpop.f32.mrf.mxu0
      %v1895 = vadd.f32 0.0, %v1894
      %v1896 = vpop.f32.mrf.mxu0
      %v1897 = vadd.f32 0.0, %v1896
      %1898 = vmatmul.bf16.gmra.mxu0 %v1455
      %v1899 = vpop.f32.mrf.mxu0
      %v1900 = vadd.f32 0.0, %v1899
      %v1901 = vpop.f32.mrf.mxu0
      %v1902 = vadd.f32 0.0, %v1901
      %1903 = vmatmul.bf16.gmra.mxu0 %v1457
      %v1904 = vpop.f32.mrf.mxu0
      %v1905 = vadd.f32 0.0, %v1904
      %v1906 = vpop.f32.mrf.mxu0
      %v1907 = vadd.f32 0.0, %v1906
      %1908 = vmatmul.bf16.gmra.mxu0 %v1459
      %v1909 = vpop.f32.mrf.mxu0
      %v1910 = vadd.f32 0.0, %v1909
      %v1911 = vpop.f32.mrf.mxu0
      %v1912 = vadd.f32 0.0, %v1911
      %1913 = vmatmul.bf16.gmra.mxu0 %v1461
      %v1914 = vpop.f32.mrf.mxu0
      %v1915 = vadd.f32 0.0, %v1914
      %v1916 = vpop.f32.mrf.mxu0
      %v1917 = vadd.f32 0.0, %v1916
      %1918 = vmatmul.bf16.gmra.mxu0 %v1463
      %v1919 = vpop.f32.mrf.mxu0
      %v1920 = vadd.f32 0.0, %v1919
      %v1921 = vpop.f32.mrf.mxu0
      %v1922 = vadd.f32 0.0, %v1921
      %1923 = vdwg.mxu0
      %1924 = vmatpush.bf16.msra.mxu0 %v1624
      %1925 = vmatpush.bf16.msra.mxu0 %v1622
      %1926 = vmatpush.bf16.msra.mxu0 %v1620
      %1927 = vmatpush.bf16.msra.mxu0 %v1618
      %1928 = vmatpush.bf16.msra.mxu0 %v1616
      %1929 = vmatpush.bf16.msra.mxu0 %v1614
      %1930 = vmatpush.bf16.msra.mxu0 %v1612
      %1931 = vmatpush.bf16.msra.mxu0 %v1610
      %1932 = vmatmul.bf16.gmra.mxu0 %v1434
      %v1933 = vpop.f32.mrf.mxu0
      %v1934 = vadd.f32 %v1845, %v1933
      %v1935 = vpop.f32.mrf.mxu0
      %v1936 = vadd.f32 %v1847, %v1935
      %1937 = vmatmul.bf16.gmra.mxu0 %v1436
      %v1938 = vpop.f32.mrf.mxu0
      %v1939 = vadd.f32 %v1850, %v1938
      %v1940 = vpop.f32.mrf.mxu0
      %v1941 = vadd.f32 %v1852, %v1940
      %1942 = vmatmul.bf16.gmra.mxu0 %v1438
      %v1943 = vpop.f32.mrf.mxu0
      %v1944 = vadd.f32 %v1855, %v1943
      %v1945 = vpop.f32.mrf.mxu0
      %v1946 = vadd.f32 %v1857, %v1945
      %1947 = vmatmul.bf16.gmra.mxu0 %v1440
      %v1948 = vpop.f32.mrf.mxu0
      %v1949 = vadd.f32 %v1860, %v1948
      %v1950 = vpop.f32.mrf.mxu0
      %v1951 = vadd.f32 %v1862, %v1950
      %1952 = vmatmul.bf16.gmra.mxu0 %v1442
      %v1953 = vpop.f32.mrf.mxu0
      %v1954 = vadd.f32 %v1865, %v1953
      %v1955 = vpop.f32.mrf.mxu0
      %v1956 = vadd.f32 %v1867, %v1955
      %1957 = vmatmul.bf16.gmra.mxu0 %v1444
      %v1958 = vpop.f32.mrf.mxu0
      %v1959 = vadd.f32 %v1870, %v1958
      %v1960 = vpop.f32.mrf.mxu0
      %v1961 = vadd.f32 %v1872, %v1960
      %1962 = vmatmul.bf16.gmra.mxu0 %v1446
      %v1963 = vpop.f32.mrf.mxu0
      %v1964 = vadd.f32 %v1875, %v1963
      %v1965 = vpop.f32.mrf.mxu0
      %v1966 = vadd.f32 %v1877, %v1965
      %1967 = vmatmul.bf16.gmra.mxu0 %v1448
      %v1968 = vpop.f32.mrf.mxu0
      %v1969 = vadd.f32 %v1880, %v1968
      %v1970 = vpop.f32.mrf.mxu0
      %v1971 = vadd.f32 %v1882, %v1970
      %1972 = vmatmul.bf16.gmra.mxu0 %v1450
      %v1973 = vpop.f32.mrf.mxu0
      %v1974 = vadd.f32 %v1885, %v1973
      %v1975 = vpop.f32.mrf.mxu0
      %v1976 = vadd.f32 %v1887, %v1975
      %1977 = vmatmul.bf16.gmra.mxu0 %v1452
      %v1978 = vpop.f32.mrf.mxu0
      %v1979 = vadd.f32 %v1890, %v1978
      %v1980 = vpop.f32.mrf.mxu0
      %v1981 = vadd.f32 %v1892, %v1980
      %1982 = vmatmul.bf16.gmra.mxu0 %v1454
      %v1983 = vpop.f32.mrf.mxu0
      %v1984 = vadd.f32 %v1895, %v1983
      %v1985 = vpop.f32.mrf.mxu0
      %v1986 = vadd.f32 %v1897, %v1985
      %1987 = vmatmul.bf16.gmra.mxu0 %v1456
      %v1988 = vpop.f32.mrf.mxu0
      %v1989 = vadd.f32 %v1900, %v1988
      %v1990 = vpop.f32.mrf.mxu0
      %v1991 = vadd.f32 %v1902, %v1990
      %1992 = vmatmul.bf16.gmra.mxu0 %v1458
      %v1993 = vpop.f32.mrf.mxu0
      %v1994 = vadd.f32 %v1905, %v1993
      %v1995 = vpop.f32.mrf.mxu0
      %v1996 = vadd.f32 %v1907, %v1995
      %1997 = vmatmul.bf16.gmra.mxu0 %v1460
      %v1998 = vpop.f32.mrf.mxu0
      %v1999 = vadd.f32 %v1910, %v1998
      %v2000 = vpop.f32.mrf.mxu0
      %v2001 = vadd.f32 %v1912, %v2000
      %2002 = vmatmul.bf16.gmra.mxu0 %v1462
      %v2003 = vpop.f32.mrf.mxu0
      %v2004 = vadd.f32 %v1915, %v2003
      %v2005 = vpop.f32.mrf.mxu0
      %v2006 = vadd.f32 %v1917, %v2005
      %2007 = vmatmul.bf16.gmra.mxu0 %v1464
      %v2008 = vpop.f32.mrf.mxu0
      %v2009 = vadd.f32 %v1920, %v2008
      %v2010 = vpop.f32.mrf.mxu0
      %v2011 = vadd.f32 %v1922, %v2010
      %2012 = vdwg.mxu0
      %v2013 = vpack.c.bf16 %v1758, %v1756
      %v2014 = vpack.c.bf16 %v1936, %v1934
      %v2015 = vpack.c.bf16 %v1763, %v1761
      %v2016 = vpack.c.bf16 %v1941, %v1939
      %v2017 = vpack.c.bf16 %v1768, %v1766
      %v2018 = vpack.c.bf16 %v1946, %v1944
      %v2019 = vpack.c.bf16 %v1773, %v1771
      %v2020 = vpack.c.bf16 %v1951, %v1949
      %v2021 = vpack.c.bf16 %v1778, %v1776
      %v2022 = vpack.c.bf16 %v1956, %v1954
      %v2023 = vpack.c.bf16 %v1783, %v1781
      %v2024 = vpack.c.bf16 %v1961, %v1959
      %v2025 = vpack.c.bf16 %v1788, %v1786
      %v2026 = vpack.c.bf16 %v1966, %v1964
      %v2027 = vpack.c.bf16 %v1793, %v1791
      %v2028 = vpack.c.bf16 %v1971, %v1969
      %v2029 = vpack.c.bf16 %v1798, %v1796
      %v2030 = vpack.c.bf16 %v1976, %v1974
      %v2031 = vpack.c.bf16 %v1803, %v1801
      %v2032 = vpack.c.bf16 %v1981, %v1979
      %v2033 = vpack.c.bf16 %v1808, %v1806
      %v2034 = vpack.c.bf16 %v1986, %v1984
      %v2035 = vpack.c.bf16 %v1813, %v1811
      %v2036 = vpack.c.bf16 %v1991, %v1989
      %v2037 = vpack.c.bf16 %v1818, %v1816
      %v2038 = vpack.c.bf16 %v1996, %v1994
      %v2039 = vpack.c.bf16 %v1823, %v1821
      %v2040 = vpack.c.bf16 %v2001, %v1999
      %v2041 = vpack.c.bf16 %v1828, %v1826
      %v2042 = vpack.c.bf16 %v2006, %v2004
      %v2043 = vpack.c.bf16 %v1833, %v1831
      %v2044 = vpack.c.bf16 %v2011, %v2009
      %v2045 = vld [vmem:[%s5] sm:$0x3]
      %v2047 = vperm.slane %v2045, 0
      %v2048 = vperm.slane %v2045, 1
      %2051 = vmatpush.bf16.msra.mxu0 %v2027
      %2052 = vmatpush.bf16.msra.mxu0 %v2025
      %2053 = vmatpush.bf16.msra.mxu0 %v2023
      %2054 = vmatpush.bf16.msra.mxu0 %v2021
      %2055 = vmatpush.bf16.msra.mxu0 %v2019
      %2056 = vmatpush.bf16.msra.mxu0 %v2017
      %2057 = vmatpush.bf16.msra.mxu0 %v2015
      %2058 = vmatpush.bf16.msra.mxu0 %v2013
      %2059 = vmatmul.bf16.gmra.mxu0 %v949
      %v2060 = vpop.f32.mrf.mxu0
      %v2061 = vadd.f32 %v2047, %v2060
      %v2062 = vpop.f32.mrf.mxu0
      %v2063 = vadd.f32 %v2047, %v2062
      %2064 = vmatmul.bf16.gmra.mxu0 %v951
      %v2065 = vpop.f32.mrf.mxu0
      %v2066 = vadd.f32 %v2047, %v2065
      %v2067 = vpop.f32.mrf.mxu0
      %v2068 = vadd.f32 %v2047, %v2067
      %2069 = vmatmul.bf16.gmra.mxu0 %v953
      %v2070 = vpop.f32.mrf.mxu0
      %v2071 = vadd.f32 %v2047, %v2070
      %v2072 = vpop.f32.mrf.mxu0
      %v2073 = vadd.f32 %v2047, %v2072
      %2074 = vmatmul.bf16.gmra.mxu0 %v955
      %v2075 = vpop.f32.mrf.mxu0
      %v2076 = vadd.f32 %v2047, %v2075
      %v2077 = vpop.f32.mrf.mxu0
      %v2078 = vadd.f32 %v2047, %v2077
      %2079 = vmatmul.bf16.gmra.mxu0 %v957
      %v2080 = vpop.f32.mrf.mxu0
      %v2081 = vadd.f32 %v2047, %v2080
      %v2082 = vpop.f32.mrf.mxu0
      %v2083 = vadd.f32 %v2047, %v2082
      %2084 = vmatmul.bf16.gmra.mxu0 %v959
      %v2085 = vpop.f32.mrf.mxu0
      %v2086 = vadd.f32 %v2047, %v2085
      %v2087 = vpop.f32.mrf.mxu0
      %v2088 = vadd.f32 %v2047, %v2087
      %2089 = vmatmul.bf16.gmra.mxu0 %v961
      %v2090 = vpop.f32.mrf.mxu0
      %v2091 = vadd.f32 %v2047, %v2090
      %v2092 = vpop.f32.mrf.mxu0
      %v2093 = vadd.f32 %v2047, %v2092
      %2094 = vmatmul.bf16.gmra.mxu0 %v963
      %v2095 = vpop.f32.mrf.mxu0
      %v2096 = vadd.f32 %v2047, %v2095
      %v2097 = vpop.f32.mrf.mxu0
      %v2098 = vadd.f32 %v2047, %v2097
      %2099 = vmatmul.bf16.gmra.mxu0 %v965
      %v2100 = vpop.f32.mrf.mxu0
      %v2101 = vadd.f32 %v2047, %v2100
      %v2102 = vpop.f32.mrf.mxu0
      %v2103 = vadd.f32 %v2047, %v2102
      %2104 = vmatmul.bf16.gmra.mxu0 %v967
      %v2105 = vpop.f32.mrf.mxu0
      %v2106 = vadd.f32 %v2047, %v2105
      %v2107 = vpop.f32.mrf.mxu0
      %v2108 = vadd.f32 %v2047, %v2107
      %2109 = vmatmul.bf16.gmra.mxu0 %v969
      %v2110 = vpop.f32.mrf.mxu0
      %v2111 = vadd.f32 %v2047, %v2110
      %v2112 = vpop.f32.mrf.mxu0
      %v2113 = vadd.f32 %v2047, %v2112
      %2114 = vmatmul.bf16.gmra.mxu0 %v971
      %v2115 = vpop.f32.mrf.mxu0
      %v2116 = vadd.f32 %v2047, %v2115
      %v2117 = vpop.f32.mrf.mxu0
      %v2118 = vadd.f32 %v2047, %v2117
      %2119 = vmatmul.bf16.gmra.mxu0 %v973
      %v2120 = vpop.f32.mrf.mxu0
      %v2121 = vadd.f32 %v2047, %v2120
      %v2122 = vpop.f32.mrf.mxu0
      %v2123 = vadd.f32 %v2047, %v2122
      %2124 = vmatmul.bf16.gmra.mxu0 %v975
      %v2125 = vpop.f32.mrf.mxu0
      %v2126 = vadd.f32 %v2047, %v2125
      %v2127 = vpop.f32.mrf.mxu0
      %v2128 = vadd.f32 %v2047, %v2127
      %2129 = vmatmul.bf16.gmra.mxu0 %v977
      %v2130 = vpop.f32.mrf.mxu0
      %v2131 = vadd.f32 %v2047, %v2130
      %v2132 = vpop.f32.mrf.mxu0
      %v2133 = vadd.f32 %v2047, %v2132
      %2134 = vmatmul.bf16.gmra.mxu0 %v979
      %v2135 = vpop.f32.mrf.mxu0
      %v2136 = vadd.f32 %v2047, %v2135
      %v2137 = vpop.f32.mrf.mxu0
      %v2138 = vadd.f32 %v2047, %v2137
      %2139 = vdwg.mxu0
      %2140 = vmatpush.bf16.msra.mxu0 %v2043
      %2141 = vmatpush.bf16.msra.mxu0 %v2041
      %2142 = vmatpush.bf16.msra.mxu0 %v2039
      %2143 = vmatpush.bf16.msra.mxu0 %v2037
      %2144 = vmatpush.bf16.msra.mxu0 %v2035
      %2145 = vmatpush.bf16.msra.mxu0 %v2033
      %2146 = vmatpush.bf16.msra.mxu0 %v2031
      %2147 = vmatpush.bf16.msra.mxu0 %v2029
      %2148 = vmatmul.bf16.gmra.mxu0 %v950
      %v2149 = vpop.f32.mrf.mxu0
      %v2150 = vadd.f32 %v2061, %v2149
      %v2151 = vpop.f32.mrf.mxu0
      %v2152 = vadd.f32 %v2063, %v2151
      %2153 = vmatmul.bf16.gmra.mxu0 %v952
      %v2154 = vpop.f32.mrf.mxu0
      %v2155 = vadd.f32 %v2066, %v2154
      %v2156 = vpop.f32.mrf.mxu0
      %v2157 = vadd.f32 %v2068, %v2156
      %2158 = vmatmul.bf16.gmra.mxu0 %v954
      %v2159 = vpop.f32.mrf.mxu0
      %v2160 = vadd.f32 %v2071, %v2159
      %v2161 = vpop.f32.mrf.mxu0
      %v2162 = vadd.f32 %v2073, %v2161
      %2163 = vmatmul.bf16.gmra.mxu0 %v956
      %v2164 = vpop.f32.mrf.mxu0
      %v2165 = vadd.f32 %v2076, %v2164
      %v2166 = vpop.f32.mrf.mxu0
      %v2167 = vadd.f32 %v2078, %v2166
      %2168 = vmatmul.bf16.gmra.mxu0 %v958
      %v2169 = vpop.f32.mrf.mxu0
      %v2170 = vadd.f32 %v2081, %v2169
      %v2171 = vpop.f32.mrf.mxu0
      %v2172 = vadd.f32 %v2083, %v2171
      %2173 = vmatmul.bf16.gmra.mxu0 %v960
      %v2174 = vpop.f32.mrf.mxu0
      %v2175 = vadd.f32 %v2086, %v2174
      %v2176 = vpop.f32.mrf.mxu0
      %v2177 = vadd.f32 %v2088, %v2176
      %2178 = vmatmul.bf16.gmra.mxu0 %v962
      %v2179 = vpop.f32.mrf.mxu0
      %v2180 = vadd.f32 %v2091, %v2179
      %v2181 = vpop.f32.mrf.mxu0
      %v2182 = vadd.f32 %v2093, %v2181
      %2183 = vmatmul.bf16.gmra.mxu0 %v964
      %v2184 = vpop.f32.mrf.mxu0
      %v2185 = vadd.f32 %v2096, %v2184
      %v2186 = vpop.f32.mrf.mxu0
      %v2187 = vadd.f32 %v2098, %v2186
      %2188 = vmatmul.bf16.gmra.mxu0 %v966
      %v2189 = vpop.f32.mrf.mxu0
      %v2190 = vadd.f32 %v2101, %v2189
      %v2191 = vpop.f32.mrf.mxu0
      %v2192 = vadd.f32 %v2103, %v2191
      %2193 = vmatmul.bf16.gmra.mxu0 %v968
      %v2194 = vpop.f32.mrf.mxu0
      %v2195 = vadd.f32 %v2106, %v2194
      %v2196 = vpop.f32.mrf.mxu0
      %v2197 = vadd.f32 %v2108, %v2196
      %2198 = vmatmul.bf16.gmra.mxu0 %v970
      %v2199 = vpop.f32.mrf.mxu0
      %v2200 = vadd.f32 %v2111, %v2199
      %v2201 = vpop.f32.mrf.mxu0
      %v2202 = vadd.f32 %v2113, %v2201
      %2203 = vmatmul.bf16.gmra.mxu0 %v972
      %v2204 = vpop.f32.mrf.mxu0
      %v2205 = vadd.f32 %v2116, %v2204
      %v2206 = vpop.f32.mrf.mxu0
      %v2207 = vadd.f32 %v2118, %v2206
      %2208 = vmatmul.bf16.gmra.mxu0 %v974
      %v2209 = vpop.f32.mrf.mxu0
      %v2210 = vadd.f32 %v2121, %v2209
      %v2211 = vpop.f32.mrf.mxu0
      %v2212 = vadd.f32 %v2123, %v2211
      %2213 = vmatmul.bf16.gmra.mxu0 %v976
      %v2214 = vpop.f32.mrf.mxu0
      %v2215 = vadd.f32 %v2126, %v2214
      %v2216 = vpop.f32.mrf.mxu0
      %v2217 = vadd.f32 %v2128, %v2216
      %2218 = vmatmul.bf16.gmra.mxu0 %v978
      %v2219 = vpop.f32.mrf.mxu0
      %v2220 = vadd.f32 %v2131, %v2219
      %v2221 = vpop.f32.mrf.mxu0
      %v2222 = vadd.f32 %v2133, %v2221
      %2223 = vmatmul.bf16.gmra.mxu0 %v980
      %v2224 = vpop.f32.mrf.mxu0
      %v2225 = vadd.f32 %v2136, %v2224
      %v2226 = vpop.f32.mrf.mxu0
      %v2227 = vadd.f32 %v2138, %v2226
      %2228 = vdwg.mxu0
      %2229 = vmatpush.bf16.msra.mxu0 %v2028
      %2230 = vmatpush.bf16.msra.mxu0 %v2026
      %2231 = vmatpush.bf16.msra.mxu0 %v2024
      %2232 = vmatpush.bf16.msra.mxu0 %v2022
      %2233 = vmatpush.bf16.msra.mxu0 %v2020
      %2234 = vmatpush.bf16.msra.mxu0 %v2018
      %2235 = vmatpush.bf16.msra.mxu0 %v2016
      %2236 = vmatpush.bf16.msra.mxu0 %v2014
      %2237 = vmatmul.bf16.gmra.mxu0 %v949
      %v2238 = vpop.f32.mrf.mxu0
      %v2239 = vadd.f32 %v2048, %v2238
      %v2240 = vpop.f32.mrf.mxu0
      %v2241 = vadd.f32 %v2048, %v2240
      %2242 = vmatmul.bf16.gmra.mxu0 %v951
      %v2243 = vpop.f32.mrf.mxu0
      %v2244 = vadd.f32 %v2048, %v2243
      %v2245 = vpop.f32.mrf.mxu0
      %v2246 = vadd.f32 %v2048, %v2245
      %2247 = vmatmul.bf16.gmra.mxu0 %v953
      %v2248 = vpop.f32.mrf.mxu0
      %v2249 = vadd.f32 %v2048, %v2248
      %v2250 = vpop.f32.mrf.mxu0
      %v2251 = vadd.f32 %v2048, %v2250
      %2252 = vmatmul.bf16.gmra.mxu0 %v955
      %v2253 = vpop.f32.mrf.mxu0
      %v2254 = vadd.f32 %v2048, %v2253
      %v2255 = vpop.f32.mrf.mxu0
      %v2256 = vadd.f32 %v2048, %v2255
      %2257 = vmatmul.bf16.gmra.mxu0 %v957
      %v2258 = vpop.f32.mrf.mxu0
      %v2259 = vadd.f32 %v2048, %v2258
      %v2260 = vpop.f32.mrf.mxu0
      %v2261 = vadd.f32 %v2048, %v2260
      %2262 = vmatmul.bf16.gmra.mxu0 %v959
      %v2263 = vpop.f32.mrf.mxu0
      %v2264 = vadd.f32 %v2048, %v2263
      %v2265 = vpop.f32.mrf.mxu0
      %v2266 = vadd.f32 %v2048, %v2265
      %2267 = vmatmul.bf16.gmra.mxu0 %v961
      %v2268 = vpop.f32.mrf.mxu0
      %v2269 = vadd.f32 %v2048, %v2268
      %v2270 = vpop.f32.mrf.mxu0
      %v2271 = vadd.f32 %v2048, %v2270
      %2272 = vmatmul.bf16.gmra.mxu0 %v963
      %v2273 = vpop.f32.mrf.mxu0
      %v2274 = vadd.f32 %v2048, %v2273
      %v2275 = vpop.f32.mrf.mxu0
      %v2276 = vadd.f32 %v2048, %v2275
      %2277 = vmatmul.bf16.gmra.mxu0 %v965
      %v2278 = vpop.f32.mrf.mxu0
      %v2279 = vadd.f32 %v2048, %v2278
      %v2280 = vpop.f32.mrf.mxu0
      %v2281 = vadd.f32 %v2048, %v2280
      %2282 = vmatmul.bf16.gmra.mxu0 %v967
      %v2283 = vpop.f32.mrf.mxu0
      %v2284 = vadd.f32 %v2048, %v2283
      %v2285 = vpop.f32.mrf.mxu0
      %v2286 = vadd.f32 %v2048, %v2285
      %2287 = vmatmul.bf16.gmra.mxu0 %v969
      %v2288 = vpop.f32.mrf.mxu0
      %v2289 = vadd.f32 %v2048, %v2288
      %v2290 = vpop.f32.mrf.mxu0
      %v2291 = vadd.f32 %v2048, %v2290
      %2292 = vmatmul.bf16.gmra.mxu0 %v971
      %v2293 = vpop.f32.mrf.mxu0
      %v2294 = vadd.f32 %v2048, %v2293
      %v2295 = vpop.f32.mrf.mxu0
      %v2296 = vadd.f32 %v2048, %v2295
      %2297 = vmatmul.bf16.gmra.mxu0 %v973
      %v2298 = vpop.f32.mrf.mxu0
      %v2299 = vadd.f32 %v2048, %v2298
      %v2300 = vpop.f32.mrf.mxu0
      %v2301 = vadd.f32 %v2048, %v2300
      %2302 = vmatmul.bf16.gmra.mxu0 %v975
      %v2303 = vpop.f32.mrf.mxu0
      %v2304 = vadd.f32 %v2048, %v2303
      %v2305 = vpop.f32.mrf.mxu0
      %v2306 = vadd.f32 %v2048, %v2305
      %2307 = vmatmul.bf16.gmra.mxu0 %v977
      %v2308 = vpop.f32.mrf.mxu0
      %v2309 = vadd.f32 %v2048, %v2308
      %v2310 = vpop.f32.mrf.mxu0
      %v2311 = vadd.f32 %v2048, %v2310
      %2312 = vmatmul.bf16.gmra.mxu0 %v979
      %v2313 = vpop.f32.mrf.mxu0
      %v2314 = vadd.f32 %v2048, %v2313
      %v2315 = vpop.f32.mrf.mxu0
      %v2316 = vadd.f32 %v2048, %v2315
      %2317 = vdwg.mxu0
      %2318 = vmatpush.bf16.msra.mxu0 %v2044
      %2319 = vmatpush.bf16.msra.mxu0 %v2042
      %2320 = vmatpush.bf16.msra.mxu0 %v2040
      %2321 = vmatpush.bf16.msra.mxu0 %v2038
      %2322 = vmatpush.bf16.msra.mxu0 %v2036
      %2323 = vmatpush.bf16.msra.mxu0 %v2034
      %2324 = vmatpush.bf16.msra.mxu0 %v2032
      %2325 = vmatpush.bf16.msra.mxu0 %v2030
      %2326 = vmatmul.bf16.gmra.mxu0 %v950
      %v2327 = vpop.f32.mrf.mxu0
      %v2328 = vadd.f32 %v2239, %v2327
      %v2329 = vpop.f32.mrf.mxu0
      %v2330 = vadd.f32 %v2241, %v2329
      %2331 = vmatmul.bf16.gmra.mxu0 %v952
      %v2332 = vpop.f32.mrf.mxu0
      %v2333 = vadd.f32 %v2244, %v2332
      %v2334 = vpop.f32.mrf.mxu0
      %v2335 = vadd.f32 %v2246, %v2334
      %2336 = vmatmul.bf16.gmra.mxu0 %v954
      %v2337 = vpop.f32.mrf.mxu0
      %v2338 = vadd.f32 %v2249, %v2337
      %v2339 = vpop.f32.mrf.mxu0
      %v2340 = vadd.f32 %v2251, %v2339
      %2341 = vmatmul.bf16.gmra.mxu0 %v956
      %v2342 = vpop.f32.mrf.mxu0
      %v2343 = vadd.f32 %v2254, %v2342
      %v2344 = vpop.f32.mrf.mxu0
      %v2345 = vadd.f32 %v2256, %v2344
      %2346 = vmatmul.bf16.gmra.mxu0 %v958
      %v2347 = vpop.f32.mrf.mxu0
      %v2348 = vadd.f32 %v2259, %v2347
      %v2349 = vpop.f32.mrf.mxu0
      %v2350 = vadd.f32 %v2261, %v2349
      %2351 = vmatmul.bf16.gmra.mxu0 %v960
      %v2352 = vpop.f32.mrf.mxu0
      %v2353 = vadd.f32 %v2264, %v2352
      %v2354 = vpop.f32.mrf.mxu0
      %v2355 = vadd.f32 %v2266, %v2354
      %2356 = vmatmul.bf16.gmra.mxu0 %v962
      %v2357 = vpop.f32.mrf.mxu0
      %v2358 = vadd.f32 %v2269, %v2357
      %v2359 = vpop.f32.mrf.mxu0
      %v2360 = vadd.f32 %v2271, %v2359
      %2361 = vmatmul.bf16.gmra.mxu0 %v964
      %v2362 = vpop.f32.mrf.mxu0
      %v2363 = vadd.f32 %v2274, %v2362
      %v2364 = vpop.f32.mrf.mxu0
      %v2365 = vadd.f32 %v2276, %v2364
      %2366 = vmatmul.bf16.gmra.mxu0 %v966
      %v2367 = vpop.f32.mrf.mxu0
      %v2368 = vadd.f32 %v2279, %v2367
      %v2369 = vpop.f32.mrf.mxu0
      %v2370 = vadd.f32 %v2281, %v2369
      %2371 = vmatmul.bf16.gmra.mxu0 %v968
      %v2372 = vpop.f32.mrf.mxu0
      %v2373 = vadd.f32 %v2284, %v2372
      %v2374 = vpop.f32.mrf.mxu0
      %v2375 = vadd.f32 %v2286, %v2374
      %2376 = vmatmul.bf16.gmra.mxu0 %v970
      %v2377 = vpop.f32.mrf.mxu0
      %v2378 = vadd.f32 %v2289, %v2377
      %v2379 = vpop.f32.mrf.mxu0
      %v2380 = vadd.f32 %v2291, %v2379
      %2381 = vmatmul.bf16.gmra.mxu0 %v972
      %v2382 = vpop.f32.mrf.mxu0
      %v2383 = vadd.f32 %v2294, %v2382
      %v2384 = vpop.f32.mrf.mxu0
      %v2385 = vadd.f32 %v2296, %v2384
      %2386 = vmatmul.bf16.gmra.mxu0 %v974
      %v2387 = vpop.f32.mrf.mxu0
      %v2388 = vadd.f32 %v2299, %v2387
      %v2389 = vpop.f32.mrf.mxu0
      %v2390 = vadd.f32 %v2301, %v2389
      %2391 = vmatmul.bf16.gmra.mxu0 %v976
      %v2392 = vpop.f32.mrf.mxu0
      %v2393 = vadd.f32 %v2304, %v2392
      %v2394 = vpop.f32.mrf.mxu0
      %v2395 = vadd.f32 %v2306, %v2394
      %2396 = vmatmul.bf16.gmra.mxu0 %v978
      %v2397 = vpop.f32.mrf.mxu0
      %v2398 = vadd.f32 %v2309, %v2397
      %v2399 = vpop.f32.mrf.mxu0
      %v2400 = vadd.f32 %v2311, %v2399
      %2401 = vmatmul.bf16.gmra.mxu0 %v980
      %v2402 = vpop.f32.mrf.mxu0
      %v2403 = vadd.f32 %v2314, %v2402
      %v2404 = vpop.f32.mrf.mxu0
      %v2405 = vadd.f32 %v2316, %v2404
      %2406 = vdwg.mxu0
      %v2407 = vmax.f32 %v2150, 0.0
      %v2408 = vmax.f32 %v2328, 0.0
      %v2409 = vmax.f32 %v2152, 0.0
      %v2410 = vmax.f32 %v2330, 0.0
      %v2411 = vmax.f32 %v2155, 0.0
      %v2412 = vmax.f32 %v2333, 0.0
      %v2413 = vmax.f32 %v2157, 0.0
      %v2414 = vmax.f32 %v2335, 0.0
      %v2415 = vmax.f32 %v2160, 0.0
      %v2416 = vmax.f32 %v2338, 0.0
      %v2417 = vmax.f32 %v2162, 0.0
      %v2418 = vmax.f32 %v2340, 0.0
      %v2419 = vmax.f32 %v2165, 0.0
      %v2420 = vmax.f32 %v2343, 0.0
      %v2421 = vmax.f32 %v2167, 0.0
      %v2422 = vmax.f32 %v2345, 0.0
      %v2423 = vmax.f32 %v2170, 0.0
      %v2424 = vmax.f32 %v2348, 0.0
      %v2425 = vmax.f32 %v2172, 0.0
      %v2426 = vmax.f32 %v2350, 0.0
      %v2427 = vmax.f32 %v2175, 0.0
      %v2428 = vmax.f32 %v2353, 0.0
      %v2429 = vmax.f32 %v2177, 0.0
      %v2430 = vmax.f32 %v2355, 0.0
      %v2431 = vmax.f32 %v2180, 0.0
      %v2432 = vmax.f32 %v2358, 0.0
      %v2433 = vmax.f32 %v2182, 0.0
      %v2434 = vmax.f32 %v2360, 0.0
      %v2435 = vmax.f32 %v2185, 0.0
      %v2436 = vmax.f32 %v2363, 0.0
      %v2437 = vmax.f32 %v2187, 0.0
      %v2438 = vmax.f32 %v2365, 0.0
      %v2439 = vmax.f32 %v2190, 0.0
      %v2440 = vmax.f32 %v2368, 0.0
      %v2441 = vmax.f32 %v2192, 0.0
      %v2442 = vmax.f32 %v2370, 0.0
      %v2443 = vmax.f32 %v2195, 0.0
      %v2444 = vmax.f32 %v2373, 0.0
      %v2445 = vmax.f32 %v2197, 0.0
      %v2446 = vmax.f32 %v2375, 0.0
      %v2447 = vmax.f32 %v2200, 0.0
      %v2448 = vmax.f32 %v2378, 0.0
      %v2449 = vmax.f32 %v2202, 0.0
      %v2450 = vmax.f32 %v2380, 0.0
      %v2451 = vmax.f32 %v2205, 0.0
      %v2452 = vmax.f32 %v2383, 0.0
      %v2453 = vmax.f32 %v2207, 0.0
      %v2454 = vmax.f32 %v2385, 0.0
      %v2455 = vmax.f32 %v2210, 0.0
      %v2456 = vmax.f32 %v2388, 0.0
      %v2457 = vmax.f32 %v2212, 0.0
      %v2458 = vmax.f32 %v2390, 0.0
      %v2459 = vmax.f32 %v2215, 0.0
      %v2460 = vmax.f32 %v2393, 0.0
      %v2461 = vmax.f32 %v2217, 0.0
      %v2462 = vmax.f32 %v2395, 0.0
      %v2463 = vmax.f32 %v2220, 0.0
      %v2464 = vmax.f32 %v2398, 0.0
      %v2465 = vmax.f32 %v2222, 0.0
      %v2466 = vmax.f32 %v2400, 0.0
      %v2467 = vmax.f32 %v2225, 0.0
      %v2468 = vmax.f32 %v2403, 0.0
      %v2469 = vmax.f32 %v2227, 0.0
      %v2470 = vmax.f32 %v2405, 0.0
      %v2471 = vpack.c.bf16 %v2408, %v2407
      %v2472 = vpack.c.bf16 %v2410, %v2409
      %v2473 = vpack.c.bf16 %v2412, %v2411
      %v2474 = vpack.c.bf16 %v2414, %v2413
      %v2475 = vpack.c.bf16 %v2416, %v2415
      %v2476 = vpack.c.bf16 %v2418, %v2417
      %v2477 = vpack.c.bf16 %v2420, %v2419
      %v2478 = vpack.c.bf16 %v2422, %v2421
      %v2479 = vpack.c.bf16 %v2424, %v2423
      %v2480 = vpack.c.bf16 %v2426, %v2425
      %v2481 = vpack.c.bf16 %v2428, %v2427
      %v2482 = vpack.c.bf16 %v2430, %v2429
      %v2483 = vpack.c.bf16 %v2432, %v2431
      %v2484 = vpack.c.bf16 %v2434, %v2433
      %v2485 = vpack.c.bf16 %v2436, %v2435
      %v2486 = vpack.c.bf16 %v2438, %v2437
      %v2487 = vpack.c.bf16 %v2440, %v2439
      %v2488 = vpack.c.bf16 %v2442, %v2441
      %v2489 = vpack.c.bf16 %v2444, %v2443
      %v2490 = vpack.c.bf16 %v2446, %v2445
      %v2491 = vpack.c.bf16 %v2448, %v2447
      %v2492 = vpack.c.bf16 %v2450, %v2449
      %v2493 = vpack.c.bf16 %v2452, %v2451
      %v2494 = vpack.c.bf16 %v2454, %v2453
      %v2495 = vpack.c.bf16 %v2456, %v2455
      %v2496 = vpack.c.bf16 %v2458, %v2457
      %v2497 = vpack.c.bf16 %v2460, %v2459
      %v2498 = vpack.c.bf16 %v2462, %v2461
      %v2499 = vpack.c.bf16 %v2464, %v2463
      %v2500 = vpack.c.bf16 %v2466, %v2465
      %v2501 = vpack.c.bf16 %v2468, %v2467
      %v2502 = vpack.c.bf16 %v2470, %v2469
      %v2503 = vld [vmem:[%s6] sm:$0xf]
      %v2504 = vld [vmem:[%s6 + $0x4] sm:$0xf]
      %v2505 = vld [vmem:[%s6 + $0x8] sm:$0xf]
      %v2506 = vld [vmem:[%s6 + $0xc] sm:$0xf]
      %v2507 = vld [vmem:[%s6 + $0x10] sm:$0xf]
      %v2508 = vld [vmem:[%s6 + $0x14] sm:$0xf]
      %v2509 = vld [vmem:[%s6 + $0x18] sm:$0xf]
      %v2510 = vld [vmem:[%s6 + $0x1c] sm:$0xf]
      %v2511 = vld [vmem:[%s6 + $0x20] sm:$0xf]
      %v2512 = vld [vmem:[%s6 + $0x24] sm:$0xf]
      %v2513 = vld [vmem:[%s6 + $0x28] sm:$0xf]
      %v2514 = vld [vmem:[%s6 + $0x2c] sm:$0xf]
      %v2515 = vld [vmem:[%s6 + $0x30] sm:$0xf]
      %v2516 = vld [vmem:[%s6 + $0x34] sm:$0xf]
      %v2517 = vld [vmem:[%s6 + $0x38] sm:$0xf]
      %v2518 = vld [vmem:[%s6 + $0x3c] sm:$0xf]
      %v2519 = vld [vmem:[%s6 + $0x40] sm:$0xf]
      %v2520 = vld [vmem:[%s6 + $0x44] sm:$0xf]
      %v2521 = vld [vmem:[%s6 + $0x48] sm:$0xf]
      %v2522 = vld [vmem:[%s6 + $0x4c] sm:$0xf]
      %v2523 = vld [vmem:[%s6 + $0x50] sm:$0xf]
      %v2524 = vld [vmem:[%s6 + $0x54] sm:$0xf]
      %v2525 = vld [vmem:[%s6 + $0x58] sm:$0xf]
      %v2526 = vld [vmem:[%s6 + $0x5c] sm:$0xf]
      %v2527 = vld [vmem:[%s6 + $0x60] sm:$0xf]
      %v2528 = vld [vmem:[%s6 + $0x64] sm:$0xf]
      %v2529 = vld [vmem:[%s6 + $0x68] sm:$0xf]
      %v2530 = vld [vmem:[%s6 + $0x6c] sm:$0xf]
      %v2531 = vld [vmem:[%s6 + $0x70] sm:$0xf]
      %v2532 = vld [vmem:[%s6 + $0x74] sm:$0xf]
      %v2533 = vld [vmem:[%s6 + $0x78] sm:$0xf]
      %v2534 = vld [vmem:[%s6 + $0x7c] sm:$0xf]
      %s2535 = scalar_lea.vmem %s6, 128
      %v2536 = vld [vmem:[%s2535] sm:$0xf]
      %v2537 = vld [vmem:[%s2535 + $0x4] sm:$0xf]
      %v2538 = vld [vmem:[%s2535 + $0x8] sm:$0xf]
      %v2539 = vld [vmem:[%s2535 + $0xc] sm:$0xf]
      %v2540 = vld [vmem:[%s2535 + $0x10] sm:$0xf]
      %v2541 = vld [vmem:[%s2535 + $0x14] sm:$0xf]
      %v2542 = vld [vmem:[%s2535 + $0x18] sm:$0xf]
      %v2543 = vld [vmem:[%s2535 + $0x1c] sm:$0xf]
      %v2544 = vld [vmem:[%s2535 + $0x20] sm:$0xf]
      %v2545 = vld [vmem:[%s2535 + $0x24] sm:$0xf]
      %v2546 = vld [vmem:[%s2535 + $0x28] sm:$0xf]
      %v2547 = vld [vmem:[%s2535 + $0x2c] sm:$0xf]
      %v2548 = vld [vmem:[%s2535 + $0x30] sm:$0xf]
      %v2549 = vld [vmem:[%s2535 + $0x34] sm:$0xf]
      %v2550 = vld [vmem:[%s2535 + $0x38] sm:$0xf]
      %v2551 = vld [vmem:[%s2535 + $0x3c] sm:$0xf]
      %v2552 = vld [vmem:[%s2535 + $0x40] sm:$0xf]
      %v2553 = vld [vmem:[%s2535 + $0x44] sm:$0xf]
      %v2554 = vld [vmem:[%s2535 + $0x48] sm:$0xf]
      %v2555 = vld [vmem:[%s2535 + $0x4c] sm:$0xf]
      %v2556 = vld [vmem:[%s2535 + $0x50] sm:$0xf]
      %v2557 = vld [vmem:[%s2535 + $0x54] sm:$0xf]
      %v2558 = vld [vmem:[%s2535 + $0x58] sm:$0xf]
      %v2559 = vld [vmem:[%s2535 + $0x5c] sm:$0xf]
      %v2560 = vld [vmem:[%s2535 + $0x60] sm:$0xf]
      %v2561 = vld [vmem:[%s2535 + $0x64] sm:$0xf]
      %v2562 = vld [vmem:[%s2535 + $0x68] sm:$0xf]
      %v2563 = vld [vmem:[%s2535 + $0x6c] sm:$0xf]
      %v2564 = vld [vmem:[%s2535 + $0x70] sm:$0xf]
      %v2565 = vld [vmem:[%s2535 + $0x74] sm:$0xf]
      %v2566 = vld [vmem:[%s2535 + $0x78] sm:$0xf]
      %v2567 = vld [vmem:[%s2535 + $0x7c] sm:$0xf]
      %v2572 = vunpack.c.l.b16 %v2475
      %v2573 = vunpack.c.h.b16 %v2475
      %v2574 = vunpack.c.l.b16 %v2476
      %v2575 = vunpack.c.h.b16 %v2476
      %v2576 = vunpack.c.l.b16 %v2477
      %v2577 = vunpack.c.h.b16 %v2477
      %v2578 = vunpack.c.l.b16 %v2478
      %v2579 = vunpack.c.h.b16 %v2478
      %v2580 = vpack.c.b16 %v2574, %v2572
      %v2581 = vpack.c.b16 %v2575, %v2573
      %v2582 = vpack.c.b16 %v2578, %v2576
      %v2583 = vpack.c.b16 %v2579, %v2577
      %v2620 = vunpack.c.l.b16 %v2536
      %v2621 = vunpack.c.l.b16 %v2537
      %v2622 = vunpack.c.l.b16 %v2538
      %v2623 = vunpack.c.l.b16 %v2539
      %v2624 = vunpack.c.l.b16 %v2540
      %v2625 = vunpack.c.l.b16 %v2541
      %v2626 = vunpack.c.l.b16 %v2542
      %v2627 = vunpack.c.l.b16 %v2543
      %v2628 = vunpack.c.l.b16 %v2544
      %v2629 = vunpack.c.l.b16 %v2545
      %v2630 = vunpack.c.l.b16 %v2546
      %v2631 = vunpack.c.l.b16 %v2547
      %v2632 = vunpack.c.l.b16 %v2548
      %v2633 = vunpack.c.l.b16 %v2549
      %v2634 = vunpack.c.l.b16 %v2550
      %v2635 = vunpack.c.l.b16 %v2551
      %v2636 = vunpack.c.l.b16 %v2552
      %v2637 = vunpack.c.l.b16 %v2553
      %v2638 = vunpack.c.l.b16 %v2554
      %v2639 = vunpack.c.l.b16 %v2555
      %v2640 = vunpack.c.l.b16 %v2556
      %v2641 = vunpack.c.l.b16 %v2557
      %v2642 = vunpack.c.l.b16 %v2558
      %v2643 = vunpack.c.l.b16 %v2559
      %v2644 = vunpack.c.l.b16 %v2560
      %v2645 = vunpack.c.l.b16 %v2561
      %v2646 = vunpack.c.l.b16 %v2562
      %v2647 = vunpack.c.l.b16 %v2563
      %v2648 = vunpack.c.l.b16 %v2564
      %v2649 = vunpack.c.l.b16 %v2565
      %v2650 = vunpack.c.l.b16 %v2566
      %v2651 = vunpack.c.l.b16 %v2567
      %v2652 = vpack.c.b16 %v2621, %v2620
      %v2653 = vpack.c.b16 %v2623, %v2622
      %v2654 = vpack.c.b16 %v2625, %v2624
      %v2655 = vpack.c.b16 %v2627, %v2626
      %v2656 = vpack.c.b16 %v2629, %v2628
      %v2657 = vpack.c.b16 %v2631, %v2630
      %v2658 = vpack.c.b16 %v2633, %v2632
      %v2659 = vpack.c.b16 %v2635, %v2634
      %v2660 = vpack.c.b16 %v2637, %v2636
      %v2661 = vpack.c.b16 %v2639, %v2638
      %v2662 = vpack.c.b16 %v2641, %v2640
      %v2663 = vpack.c.b16 %v2643, %v2642
      %v2664 = vpack.c.b16 %v2645, %v2644
      %v2665 = vpack.c.b16 %v2647, %v2646
      %v2666 = vpack.c.b16 %v2649, %v2648
      %v2667 = vpack.c.b16 %v2651, %v2650
      %2684 = vmatpush.bf16.msra.mxu0 %v2659
      %2685 = vmatpush.bf16.msra.mxu0 %v2658
      %2686 = vmatpush.bf16.msra.mxu0 %v2657
      %2687 = vmatpush.bf16.msra.mxu0 %v2656
      %2688 = vmatpush.bf16.msra.mxu0 %v2655
      %2689 = vmatpush.bf16.msra.mxu0 %v2654
      %2690 = vmatpush.bf16.msra.mxu0 %v2653
      %2691 = vmatpush.bf16.msra.mxu0 %v2652
      %2692 = vmatmul.bf16.gmra.mxu0 %v2580
      %v2693 = vpop.f32.mrf.mxu0
      %v2694 = vadd.f32 0.0, %v2693
      %v2695 = vpop.f32.mrf.mxu0
      %v2696 = vadd.f32 0.0, %v2695
      %2697 = vmatmul.bf16.gmra.mxu0 %v2582
      %v2698 = vpop.f32.mrf.mxu0
      %v2699 = vadd.f32 0.0, %v2698
      %v2700 = vpop.f32.mrf.mxu0
      %v2701 = vadd.f32 0.0, %v2700
      %2702 = vdwg.mxu0
      %2703 = vmatpush.bf16.msra.mxu0 %v2667
      %2704 = vmatpush.bf16.msra.mxu0 %v2666
      %2705 = vmatpush.bf16.msra.mxu0 %v2665
      %2706 = vmatpush.bf16.msra.mxu0 %v2664
      %2707 = vmatpush.bf16.msra.mxu0 %v2663
      %2708 = vmatpush.bf16.msra.mxu0 %v2662
      %2709 = vmatpush.bf16.msra.mxu0 %v2661
      %2710 = vmatpush.bf16.msra.mxu0 %v2660
      %2711 = vmatmul.bf16.gmra.mxu0 %v2581
      %v2712 = vpop.f32.mrf.mxu0
      %v2713 = vadd.f32 %v2694, %v2712
      %v2714 = vpop.f32.mrf.mxu0
      %v2715 = vadd.f32 %v2696, %v2714
      %2716 = vmatmul.bf16.gmra.mxu0 %v2583
      %v2717 = vpop.f32.mrf.mxu0
      %v2718 = vadd.f32 %v2699, %v2717
      %v2719 = vpop.f32.mrf.mxu0
      %v2720 = vadd.f32 %v2701, %v2719
      %2721 = vdwg.mxu0
      %v2726 = vunpack.c.l.b16 %v2471
      %v2727 = vunpack.c.h.b16 %v2471
      %v2728 = vunpack.c.l.b16 %v2472
      %v2729 = vunpack.c.h.b16 %v2472
      %v2730 = vunpack.c.l.b16 %v2473
      %v2731 = vunpack.c.h.b16 %v2473
      %v2732 = vunpack.c.l.b16 %v2474
      %v2733 = vunpack.c.h.b16 %v2474
      %v2734 = vpack.c.b16 %v2728, %v2726
      %v2735 = vpack.c.b16 %v2729, %v2727
      %v2736 = vpack.c.b16 %v2732, %v2730
      %v2737 = vpack.c.b16 %v2733, %v2731
      %v2774 = vunpack.c.l.b16 %v2503
      %v2775 = vunpack.c.l.b16 %v2504
      %v2776 = vunpack.c.l.b16 %v2505
      %v2777 = vunpack.c.l.b16 %v2506
      %v2778 = vunpack.c.l.b16 %v2507
      %v2779 = vunpack.c.l.b16 %v2508
      %v2780 = vunpack.c.l.b16 %v2509
      %v2781 = vunpack.c.l.b16 %v2510
      %v2782 = vunpack.c.l.b16 %v2511
      %v2783 = vunpack.c.l.b16 %v2512
      %v2784 = vunpack.c.l.b16 %v2513
      %v2785 = vunpack.c.l.b16 %v2514
      %v2786 = vunpack.c.l.b16 %v2515
      %v2787 = vunpack.c.l.b16 %v2516
      %v2788 = vunpack.c.l.b16 %v2517
      %v2789 = vunpack.c.l.b16 %v2518
      %v2790 = vunpack.c.l.b16 %v2519
      %v2791 = vunpack.c.l.b16 %v2520
      %v2792 = vunpack.c.l.b16 %v2521
      %v2793 = vunpack.c.l.b16 %v2522
      %v2794 = vunpack.c.l.b16 %v2523
      %v2795 = vunpack.c.l.b16 %v2524
      %v2796 = vunpack.c.l.b16 %v2525
      %v2797 = vunpack.c.l.b16 %v2526
      %v2798 = vunpack.c.l.b16 %v2527
      %v2799 = vunpack.c.l.b16 %v2528
      %v2800 = vunpack.c.l.b16 %v2529
      %v2801 = vunpack.c.l.b16 %v2530
      %v2802 = vunpack.c.l.b16 %v2531
      %v2803 = vunpack.c.l.b16 %v2532
      %v2804 = vunpack.c.l.b16 %v2533
      %v2805 = vunpack.c.l.b16 %v2534
      %v2806 = vpack.c.b16 %v2775, %v2774
      %v2807 = vpack.c.b16 %v2777, %v2776
      %v2808 = vpack.c.b16 %v2779, %v2778
      %v2809 = vpack.c.b16 %v2781, %v2780
      %v2810 = vpack.c.b16 %v2783, %v2782
      %v2811 = vpack.c.b16 %v2785, %v2784
      %v2812 = vpack.c.b16 %v2787, %v2786
      %v2813 = vpack.c.b16 %v2789, %v2788
      %v2814 = vpack.c.b16 %v2791, %v2790
      %v2815 = vpack.c.b16 %v2793, %v2792
      %v2816 = vpack.c.b16 %v2795, %v2794
      %v2817 = vpack.c.b16 %v2797, %v2796
      %v2818 = vpack.c.b16 %v2799, %v2798
      %v2819 = vpack.c.b16 %v2801, %v2800
      %v2820 = vpack.c.b16 %v2803, %v2802
      %v2821 = vpack.c.b16 %v2805, %v2804
      %2838 = vmatpush.bf16.msra.mxu0 %v2813
      %2839 = vmatpush.bf16.msra.mxu0 %v2812
      %2840 = vmatpush.bf16.msra.mxu0 %v2811
      %2841 = vmatpush.bf16.msra.mxu0 %v2810
      %2842 = vmatpush.bf16.msra.mxu0 %v2809
      %2843 = vmatpush.bf16.msra.mxu0 %v2808
      %2844 = vmatpush.bf16.msra.mxu0 %v2807
      %2845 = vmatpush.bf16.msra.mxu0 %v2806
      %2846 = vmatmul.bf16.gmra.mxu0 %v2734
      %v2847 = vpop.f32.mrf.mxu0
      %v2848 = vadd.f32 %v2713, %v2847
      %v2849 = vpop.f32.mrf.mxu0
      %v2850 = vadd.f32 %v2715, %v2849
      %2851 = vmatmul.bf16.gmra.mxu0 %v2736
      %v2852 = vpop.f32.mrf.mxu0
      %v2853 = vadd.f32 %v2718, %v2852
      %v2854 = vpop.f32.mrf.mxu0
      %v2855 = vadd.f32 %v2720, %v2854
      %2856 = vdwg.mxu0
      %2857 = vmatpush.bf16.msra.mxu0 %v2821
      %2858 = vmatpush.bf16.msra.mxu0 %v2820
      %2859 = vmatpush.bf16.msra.mxu0 %v2819
      %2860 = vmatpush.bf16.msra.mxu0 %v2818
      %2861 = vmatpush.bf16.msra.mxu0 %v2817
      %2862 = vmatpush.bf16.msra.mxu0 %v2816
      %2863 = vmatpush.bf16.msra.mxu0 %v2815
      %2864 = vmatpush.bf16.msra.mxu0 %v2814
      %2865 = vmatmul.bf16.gmra.mxu0 %v2735
      %v2866 = vpop.f32.mrf.mxu0
      %v2867 = vadd.f32 %v2848, %v2866
      %v2868 = vpop.f32.mrf.mxu0
      %v2869 = vadd.f32 %v2850, %v2868
      %2870 = vmatmul.bf16.gmra.mxu0 %v2737
      %v2871 = vpop.f32.mrf.mxu0
      %v2872 = vadd.f32 %v2853, %v2871
      %v2873 = vpop.f32.mrf.mxu0
      %v2874 = vadd.f32 %v2855, %v2873
      %2875 = vdwg.mxu0
      %s2876 = scalar_lea.vmem %s6, 256
      %v2877 = vld [vmem:[%s2876] sm:$0xf]
      %v2878 = vld [vmem:[%s2876 + $0x4] sm:$0xf]
      %v2879 = vld [vmem:[%s2876 + $0x8] sm:$0xf]
      %v2880 = vld [vmem:[%s2876 + $0xc] sm:$0xf]
      %v2881 = vld [vmem:[%s2876 + $0x10] sm:$0xf]
      %v2882 = vld [vmem:[%s2876 + $0x14] sm:$0xf]
      %v2883 = vld [vmem:[%s2876 + $0x18] sm:$0xf]
      %v2884 = vld [vmem:[%s2876 + $0x1c] sm:$0xf]
      %v2885 = vld [vmem:[%s2876 + $0x20] sm:$0xf]
      %v2886 = vld [vmem:[%s2876 + $0x24] sm:$0xf]
      %v2887 = vld [vmem:[%s2876 + $0x28] sm:$0xf]
      %v2888 = vld [vmem:[%s2876 + $0x2c] sm:$0xf]
      %v2889 = vld [vmem:[%s2876 + $0x30] sm:$0xf]
      %v2890 = vld [vmem:[%s2876 + $0x34] sm:$0xf]
      %v2891 = vld [vmem:[%s2876 + $0x38] sm:$0xf]
      %v2892 = vld [vmem:[%s2876 + $0x3c] sm:$0xf]
      %v2893 = vld [vmem:[%s2876 + $0x40] sm:$0xf]
      %v2894 = vld [vmem:[%s2876 + $0x44] sm:$0xf]
      %v2895 = vld [vmem:[%s2876 + $0x48] sm:$0xf]
      %v2896 = vld [vmem:[%s2876 + $0x4c] sm:$0xf]
      %v2897 = vld [vmem:[%s2876 + $0x50] sm:$0xf]
      %v2898 = vld [vmem:[%s2876 + $0x54] sm:$0xf]
      %v2899 = vld [vmem:[%s2876 + $0x58] sm:$0xf]
      %v2900 = vld [vmem:[%s2876 + $0x5c] sm:$0xf]
      %v2901 = vld [vmem:[%s2876 + $0x60] sm:$0xf]
      %v2902 = vld [vmem:[%s2876 + $0x64] sm:$0xf]
      %v2903 = vld [vmem:[%s2876 + $0x68] sm:$0xf]
      %v2904 = vld [vmem:[%s2876 + $0x6c] sm:$0xf]
      %v2905 = vld [vmem:[%s2876 + $0x70] sm:$0xf]
      %v2906 = vld [vmem:[%s2876 + $0x74] sm:$0xf]
      %v2907 = vld [vmem:[%s2876 + $0x78] sm:$0xf]
      %v2908 = vld [vmem:[%s2876 + $0x7c] sm:$0xf]
      %v2913 = vunpack.c.l.b16 %v2479
      %v2914 = vunpack.c.h.b16 %v2479
      %v2915 = vunpack.c.l.b16 %v2480
      %v2916 = vunpack.c.h.b16 %v2480
      %v2917 = vunpack.c.l.b16 %v2481
      %v2918 = vunpack.c.h.b16 %v2481
      %v2919 = vunpack.c.l.b16 %v2482
      %v2920 = vunpack.c.h.b16 %v2482
      %v2921 = vpack.c.b16 %v2915, %v2913
      %v2922 = vpack.c.b16 %v2916, %v2914
      %v2923 = vpack.c.b16 %v2919, %v2917
      %v2924 = vpack.c.b16 %v2920, %v2918
      %v2961 = vunpack.c.l.b16 %v2877
      %v2962 = vunpack.c.l.b16 %v2878
      %v2963 = vunpack.c.l.b16 %v2879
      %v2964 = vunpack.c.l.b16 %v2880
      %v2965 = vunpack.c.l.b16 %v2881
      %v2966 = vunpack.c.l.b16 %v2882
      %v2967 = vunpack.c.l.b16 %v2883
      %v2968 = vunpack.c.l.b16 %v2884
      %v2969 = vunpack.c.l.b16 %v2885
      %v2970 = vunpack.c.l.b16 %v2886
      %v2971 = vunpack.c.l.b16 %v2887
      %v2972 = vunpack.c.l.b16 %v2888
      %v2973 = vunpack.c.l.b16 %v2889
      %v2974 = vunpack.c.l.b16 %v2890
      %v2975 = vunpack.c.l.b16 %v2891
      %v2976 = vunpack.c.l.b16 %v2892
      %v2977 = vunpack.c.l.b16 %v2893
      %v2978 = vunpack.c.l.b16 %v2894
      %v2979 = vunpack.c.l.b16 %v2895
      %v2980 = vunpack.c.l.b16 %v2896
      %v2981 = vunpack.c.l.b16 %v2897
      %v2982 = vunpack.c.l.b16 %v2898
      %v2983 = vunpack.c.l.b16 %v2899
      %v2984 = vunpack.c.l.b16 %v2900
      %v2985 = vunpack.c.l.b16 %v2901
      %v2986 = vunpack.c.l.b16 %v2902
      %v2987 = vunpack.c.l.b16 %v2903
      %v2988 = vunpack.c.l.b16 %v2904
      %v2989 = vunpack.c.l.b16 %v2905
      %v2990 = vunpack.c.l.b16 %v2906
      %v2991 = vunpack.c.l.b16 %v2907
      %v2992 = vunpack.c.l.b16 %v2908
      %v2993 = vpack.c.b16 %v2962, %v2961
      %v2994 = vpack.c.b16 %v2964, %v2963
      %v2995 = vpack.c.b16 %v2966, %v2965
      %v2996 = vpack.c.b16 %v2968, %v2967
      %v2997 = vpack.c.b16 %v2970, %v2969
      %v2998 = vpack.c.b16 %v2972, %v2971
      %v2999 = vpack.c.b16 %v2974, %v2973
      %v3000 = vpack.c.b16 %v2976, %v2975
      %v3001 = vpack.c.b16 %v2978, %v2977
      %v3002 = vpack.c.b16 %v2980, %v2979
      %v3003 = vpack.c.b16 %v2982, %v2981
      %v3004 = vpack.c.b16 %v2984, %v2983
      %v3005 = vpack.c.b16 %v2986, %v2985
      %v3006 = vpack.c.b16 %v2988, %v2987
      %v3007 = vpack.c.b16 %v2990, %v2989
      %v3008 = vpack.c.b16 %v2992, %v2991
      %3025 = vmatpush.bf16.msra.mxu0 %v3000
      %3026 = vmatpush.bf16.msra.mxu0 %v2999
      %3027 = vmatpush.bf16.msra.mxu0 %v2998
      %3028 = vmatpush.bf16.msra.mxu0 %v2997
      %3029 = vmatpush.bf16.msra.mxu0 %v2996
      %3030 = vmatpush.bf16.msra.mxu0 %v2995
      %3031 = vmatpush.bf16.msra.mxu0 %v2994
      %3032 = vmatpush.bf16.msra.mxu0 %v2993
      %3033 = vmatmul.bf16.gmra.mxu0 %v2921
      %v3034 = vpop.f32.mrf.mxu0
      %v3035 = vadd.f32 0.0, %v3034
      %v3036 = vpop.f32.mrf.mxu0
      %v3037 = vadd.f32 0.0, %v3036
      %3038 = vmatmul.bf16.gmra.mxu0 %v2923
      %v3039 = vpop.f32.mrf.mxu0
      %v3040 = vadd.f32 0.0, %v3039
      %v3041 = vpop.f32.mrf.mxu0
      %v3042 = vadd.f32 0.0, %v3041
      %3043 = vdwg.mxu0
      %3044 = vmatpush.bf16.msra.mxu0 %v3008
      %3045 = vmatpush.bf16.msra.mxu0 %v3007
      %3046 = vmatpush.bf16.msra.mxu0 %v3006
      %3047 = vmatpush.bf16.msra.mxu0 %v3005
      %3048 = vmatpush.bf16.msra.mxu0 %v3004
      %3049 = vmatpush.bf16.msra.mxu0 %v3003
      %3050 = vmatpush.bf16.msra.mxu0 %v3002
      %3051 = vmatpush.bf16.msra.mxu0 %v3001
      %3052 = vmatmul.bf16.gmra.mxu0 %v2922
      %v3053 = vpop.f32.mrf.mxu0
      %v3054 = vadd.f32 %v3035, %v3053
      %v3055 = vpop.f32.mrf.mxu0
      %v3056 = vadd.f32 %v3037, %v3055
      %3057 = vmatmul.bf16.gmra.mxu0 %v2924
      %v3058 = vpop.f32.mrf.mxu0
      %v3059 = vadd.f32 %v3040, %v3058
      %v3060 = vpop.f32.mrf.mxu0
      %v3061 = vadd.f32 %v3042, %v3060
      %3062 = vdwg.mxu0
      %v3063 = vadd.f32 %v2867, %v3054
      %v3064 = vadd.f32 %v2869, %v3056
      %v3065 = vadd.f32 %v2872, %v3059
      %v3066 = vadd.f32 %v2874, %v3061
      %s3067 = scalar_lea.vmem %s6, 384
      %v3068 = vld [vmem:[%s3067] sm:$0xf]
      %v3069 = vld [vmem:[%s3067 + $0x4] sm:$0xf]
      %v3070 = vld [vmem:[%s3067 + $0x8] sm:$0xf]
      %v3071 = vld [vmem:[%s3067 + $0xc] sm:$0xf]
      %v3072 = vld [vmem:[%s3067 + $0x10] sm:$0xf]
      %v3073 = vld [vmem:[%s3067 + $0x14] sm:$0xf]
      %v3074 = vld [vmem:[%s3067 + $0x18] sm:$0xf]
      %v3075 = vld [vmem:[%s3067 + $0x1c] sm:$0xf]
      %v3076 = vld [vmem:[%s3067 + $0x20] sm:$0xf]
      %v3077 = vld [vmem:[%s3067 + $0x24] sm:$0xf]
      %v3078 = vld [vmem:[%s3067 + $0x28] sm:$0xf]
      %v3079 = vld [vmem:[%s3067 + $0x2c] sm:$0xf]
      %v3080 = vld [vmem:[%s3067 + $0x30] sm:$0xf]
      %v3081 = vld [vmem:[%s3067 + $0x34] sm:$0xf]
      %v3082 = vld [vmem:[%s3067 + $0x38] sm:$0xf]
      %v3083 = vld [vmem:[%s3067 + $0x3c] sm:$0xf]
      %v3084 = vld [vmem:[%s3067 + $0x40] sm:$0xf]
      %v3085 = vld [vmem:[%s3067 + $0x44] sm:$0xf]
      %v3086 = vld [vmem:[%s3067 + $0x48] sm:$0xf]
      %v3087 = vld [vmem:[%s3067 + $0x4c] sm:$0xf]
      %v3088 = vld [vmem:[%s3067 + $0x50] sm:$0xf]
      %v3089 = vld [vmem:[%s3067 + $0x54] sm:$0xf]
      %v3090 = vld [vmem:[%s3067 + $0x58] sm:$0xf]
      %v3091 = vld [vmem:[%s3067 + $0x5c] sm:$0xf]
      %v3092 = vld [vmem:[%s3067 + $0x60] sm:$0xf]
      %v3093 = vld [vmem:[%s3067 + $0x64] sm:$0xf]
      %v3094 = vld [vmem:[%s3067 + $0x68] sm:$0xf]
      %v3095 = vld [vmem:[%s3067 + $0x6c] sm:$0xf]
      %v3096 = vld [vmem:[%s3067 + $0x70] sm:$0xf]
      %v3097 = vld [vmem:[%s3067 + $0x74] sm:$0xf]
      %v3098 = vld [vmem:[%s3067 + $0x78] sm:$0xf]
      %v3099 = vld [vmem:[%s3067 + $0x7c] sm:$0xf]
      %v3104 = vunpack.c.l.b16 %v2483
      %v3105 = vunpack.c.h.b16 %v2483
      %v3106 = vunpack.c.l.b16 %v2484
      %v3107 = vunpack.c.h.b16 %v2484
      %v3108 = vunpack.c.l.b16 %v2485
      %v3109 = vunpack.c.h.b16 %v2485
      %v3110 = vunpack.c.l.b16 %v2486
      %v3111 = vunpack.c.h.b16 %v2486
      %v3112 = vpack.c.b16 %v3106, %v3104
      %v3113 = vpack.c.b16 %v3107, %v3105
      %v3114 = vpack.c.b16 %v3110, %v3108
      %v3115 = vpack.c.b16 %v3111, %v3109
      %v3152 = vunpack.c.l.b16 %v3068
      %v3153 = vunpack.c.l.b16 %v3069
      %v3154 = vunpack.c.l.b16 %v3070
      %v3155 = vunpack.c.l.b16 %v3071
      %v3156 = vunpack.c.l.b16 %v3072
      %v3157 = vunpack.c.l.b16 %v3073
      %v3158 = vunpack.c.l.b16 %v3074
      %v3159 = vunpack.c.l.b16 %v3075
      %v3160 = vunpack.c.l.b16 %v3076
      %v3161 = vunpack.c.l.b16 %v3077
      %v3162 = vunpack.c.l.b16 %v3078
      %v3163 = vunpack.c.l.b16 %v3079
      %v3164 = vunpack.c.l.b16 %v3080
      %v3165 = vunpack.c.l.b16 %v3081
      %v3166 = vunpack.c.l.b16 %v3082
      %v3167 = vunpack.c.l.b16 %v3083
      %v3168 = vunpack.c.l.b16 %v3084
      %v3169 = vunpack.c.l.b16 %v3085
      %v3170 = vunpack.c.l.b16 %v3086
      %v3171 = vunpack.c.l.b16 %v3087
      %v3172 = vunpack.c.l.b16 %v3088
      %v3173 = vunpack.c.l.b16 %v3089
      %v3174 = vunpack.c.l.b16 %v3090
      %v3175 = vunpack.c.l.b16 %v3091
      %v3176 = vunpack.c.l.b16 %v3092
      %v3177 = vunpack.c.l.b16 %v3093
      %v3178 = vunpack.c.l.b16 %v3094
      %v3179 = vunpack.c.l.b16 %v3095
      %v3180 = vunpack.c.l.b16 %v3096
      %v3181 = vunpack.c.l.b16 %v3097
      %v3182 = vunpack.c.l.b16 %v3098
      %v3183 = vunpack.c.l.b16 %v3099
      %v3184 = vpack.c.b16 %v3153, %v3152
      %v3185 = vpack.c.b16 %v3155, %v3154
      %v3186 = vpack.c.b16 %v3157, %v3156
      %v3187 = vpack.c.b16 %v3159, %v3158
      %v3188 = vpack.c.b16 %v3161, %v3160
      %v3189 = vpack.c.b16 %v3163, %v3162
      %v3190 = vpack.c.b16 %v3165, %v3164
      %v3191 = vpack.c.b16 %v3167, %v3166
      %v3192 = vpack.c.b16 %v3169, %v3168
      %v3193 = vpack.c.b16 %v3171, %v3170
      %v3194 = vpack.c.b16 %v3173, %v3172
      %v3195 = vpack.c.b16 %v3175, %v3174
      %v3196 = vpack.c.b16 %v3177, %v3176
      %v3197 = vpack.c.b16 %v3179, %v3178
      %v3198 = vpack.c.b16 %v3181, %v3180
      %v3199 = vpack.c.b16 %v3183, %v3182
      %3216 = vmatpush.bf16.msra.mxu0 %v3191
      %3217 = vmatpush.bf16.msra.mxu0 %v3190
      %3218 = vmatpush.bf16.msra.mxu0 %v3189
      %3219 = vmatpush.bf16.msra.mxu0 %v3188
      %3220 = vmatpush.bf16.msra.mxu0 %v3187
      %3221 = vmatpush.bf16.msra.mxu0 %v3186
      %3222 = vmatpush.bf16.msra.mxu0 %v3185
      %3223 = vmatpush.bf16.msra.mxu0 %v3184
      %3224 = vmatmul.bf16.gmra.mxu0 %v3112
      %v3225 = vpop.f32.mrf.mxu0
      %v3226 = vadd.f32 0.0, %v3225
      %v3227 = vpop.f32.mrf.mxu0
      %v3228 = vadd.f32 0.0, %v3227
      %3229 = vmatmul.bf16.gmra.mxu0 %v3114
      %v3230 = vpop.f32.mrf.mxu0
      %v3231 = vadd.f32 0.0, %v3230
      %v3232 = vpop.f32.mrf.mxu0
      %v3233 = vadd.f32 0.0, %v3232
      %3234 = vdwg.mxu0
      %3235 = vmatpush.bf16.msra.mxu0 %v3199
      %3236 = vmatpush.bf16.msra.mxu0 %v3198
      %3237 = vmatpush.bf16.msra.mxu0 %v3197
      %3238 = vmatpush.bf16.msra.mxu0 %v3196
      %3239 = vmatpush.bf16.msra.mxu0 %v3195
      %3240 = vmatpush.bf16.msra.mxu0 %v3194
      %3241 = vmatpush.bf16.msra.mxu0 %v3193
      %3242 = vmatpush.bf16.msra.mxu0 %v3192
      %3243 = vmatmul.bf16.gmra.mxu0 %v3113
      %v3244 = vpop.f32.mrf.mxu0
      %v3245 = vadd.f32 %v3226, %v3244
      %v3246 = vpop.f32.mrf.mxu0
      %v3247 = vadd.f32 %v3228, %v3246
      %3248 = vmatmul.bf16.gmra.mxu0 %v3115
      %v3249 = vpop.f32.mrf.mxu0
      %v3250 = vadd.f32 %v3231, %v3249
      %v3251 = vpop.f32.mrf.mxu0
      %v3252 = vadd.f32 %v3233, %v3251
      %3253 = vdwg.mxu0
      %v3254 = vadd.f32 %v3063, %v3245
      %v3255 = vadd.f32 %v3064, %v3247
      %v3256 = vadd.f32 %v3065, %v3250
      %v3257 = vadd.f32 %v3066, %v3252
      %s3258 = scalar_lea.vmem %s6, 512
      %v3259 = vld [vmem:[%s3258] sm:$0xf]
      %v3260 = vld [vmem:[%s3258 + $0x4] sm:$0xf]
      %v3261 = vld [vmem:[%s3258 + $0x8] sm:$0xf]
      %v3262 = vld [vmem:[%s3258 + $0xc] sm:$0xf]
      %v3263 = vld [vmem:[%s3258 + $0x10] sm:$0xf]
      %v3264 = vld [vmem:[%s3258 + $0x14] sm:$0xf]
      %v3265 = vld [vmem:[%s3258 + $0x18] sm:$0xf]
      %v3266 = vld [vmem:[%s3258 + $0x1c] sm:$0xf]
      %v3267 = vld [vmem:[%s3258 + $0x20] sm:$0xf]
      %v3268 = vld [vmem:[%s3258 + $0x24] sm:$0xf]
      %v3269 = vld [vmem:[%s3258 + $0x28] sm:$0xf]
      %v3270 = vld [vmem:[%s3258 + $0x2c] sm:$0xf]
      %v3271 = vld [vmem:[%s3258 + $0x30] sm:$0xf]
      %v3272 = vld [vmem:[%s3258 + $0x34] sm:$0xf]
      %v3273 = vld [vmem:[%s3258 + $0x38] sm:$0xf]
      %v3274 = vld [vmem:[%s3258 + $0x3c] sm:$0xf]
      %v3275 = vld [vmem:[%s3258 + $0x40] sm:$0xf]
      %v3276 = vld [vmem:[%s3258 + $0x44] sm:$0xf]
      %v3277 = vld [vmem:[%s3258 + $0x48] sm:$0xf]
      %v3278 = vld [vmem:[%s3258 + $0x4c] sm:$0xf]
      %v3279 = vld [vmem:[%s3258 + $0x50] sm:$0xf]
      %v3280 = vld [vmem:[%s3258 + $0x54] sm:$0xf]
      %v3281 = vld [vmem:[%s3258 + $0x58] sm:$0xf]
      %v3282 = vld [vmem:[%s3258 + $0x5c] sm:$0xf]
      %v3283 = vld [vmem:[%s3258 + $0x60] sm:$0xf]
      %v3284 = vld [vmem:[%s3258 + $0x64] sm:$0xf]
      %v3285 = vld [vmem:[%s3258 + $0x68] sm:$0xf]
      %v3286 = vld [vmem:[%s3258 + $0x6c] sm:$0xf]
      %v3287 = vld [vmem:[%s3258 + $0x70] sm:$0xf]
      %v3288 = vld [vmem:[%s3258 + $0x74] sm:$0xf]
      %v3289 = vld [vmem:[%s3258 + $0x78] sm:$0xf]
      %v3290 = vld [vmem:[%s3258 + $0x7c] sm:$0xf]
      %v3295 = vunpack.c.l.b16 %v2487
      %v3296 = vunpack.c.h.b16 %v2487
      %v3297 = vunpack.c.l.b16 %v2488
      %v3298 = vunpack.c.h.b16 %v2488
      %v3299 = vunpack.c.l.b16 %v2489
      %v3300 = vunpack.c.h.b16 %v2489
      %v3301 = vunpack.c.l.b16 %v2490
      %v3302 = vunpack.c.h.b16 %v2490
      %v3303 = vpack.c.b16 %v3297, %v3295
      %v3304 = vpack.c.b16 %v3298, %v3296
      %v3305 = vpack.c.b16 %v3301, %v3299
      %v3306 = vpack.c.b16 %v3302, %v3300
      %v3343 = vunpack.c.l.b16 %v3259
      %v3344 = vunpack.c.l.b16 %v3260
      %v3345 = vunpack.c.l.b16 %v3261
      %v3346 = vunpack.c.l.b16 %v3262
      %v3347 = vunpack.c.l.b16 %v3263
      %v3348 = vunpack.c.l.b16 %v3264
      %v3349 = vunpack.c.l.b16 %v3265
      %v3350 = vunpack.c.l.b16 %v3266
      %v3351 = vunpack.c.l.b16 %v3267
      %v3352 = vunpack.c.l.b16 %v3268
      %v3353 = vunpack.c.l.b16 %v3269
      %v3354 = vunpack.c.l.b16 %v3270
      %v3355 = vunpack.c.l.b16 %v3271
      %v3356 = vunpack.c.l.b16 %v3272
      %v3357 = vunpack.c.l.b16 %v3273
      %v3358 = vunpack.c.l.b16 %v3274
      %v3359 = vunpack.c.l.b16 %v3275
      %v3360 = vunpack.c.l.b16 %v3276
      %v3361 = vunpack.c.l.b16 %v3277
      %v3362 = vunpack.c.l.b16 %v3278
      %v3363 = vunpack.c.l.b16 %v3279
      %v3364 = vunpack.c.l.b16 %v3280
      %v3365 = vunpack.c.l.b16 %v3281
      %v3366 = vunpack.c.l.b16 %v3282
      %v3367 = vunpack.c.l.b16 %v3283
      %v3368 = vunpack.c.l.b16 %v3284
      %v3369 = vunpack.c.l.b16 %v3285
      %v3370 = vunpack.c.l.b16 %v3286
      %v3371 = vunpack.c.l.b16 %v3287
      %v3372 = vunpack.c.l.b16 %v3288
      %v3373 = vunpack.c.l.b16 %v3289
      %v3374 = vunpack.c.l.b16 %v3290
      %v3375 = vpack.c.b16 %v3344, %v3343
      %v3376 = vpack.c.b16 %v3346, %v3345
      %v3377 = vpack.c.b16 %v3348, %v3347
      %v3378 = vpack.c.b16 %v3350, %v3349
      %v3379 = vpack.c.b16 %v3352, %v3351
      %v3380 = vpack.c.b16 %v3354, %v3353
      %v3381 = vpack.c.b16 %v3356, %v3355
      %v3382 = vpack.c.b16 %v3358, %v3357
      %v3383 = vpack.c.b16 %v3360, %v3359
      %v3384 = vpack.c.b16 %v3362, %v3361
      %v3385 = vpack.c.b16 %v3364, %v3363
      %v3386 = vpack.c.b16 %v3366, %v3365
      %v3387 = vpack.c.b16 %v3368, %v3367
      %v3388 = vpack.c.b16 %v3370, %v3369
      %v3389 = vpack.c.b16 %v3372, %v3371
      %v3390 = vpack.c.b16 %v3374, %v3373
      %3407 = vmatpush.bf16.msra.mxu0 %v3382
      %3408 = vmatpush.bf16.msra.mxu0 %v3381
      %3409 = vmatpush.bf16.msra.mxu0 %v3380
      %3410 = vmatpush.bf16.msra.mxu0 %v3379
      %3411 = vmatpush.bf16.msra.mxu0 %v3378
      %3412 = vmatpush.bf16.msra.mxu0 %v3377
      %3413 = vmatpush.bf16.msra.mxu0 %v3376
      %3414 = vmatpush.bf16.msra.mxu0 %v3375
      %3415 = vmatmul.bf16.gmra.mxu0 %v3303
      %v3416 = vpop.f32.mrf.mxu0
      %v3417 = vadd.f32 0.0, %v3416
      %v3418 = vpop.f32.mrf.mxu0
      %v3419 = vadd.f32 0.0, %v3418
      %3420 = vmatmul.bf16.gmra.mxu0 %v3305
      %v3421 = vpop.f32.mrf.mxu0
      %v3422 = vadd.f32 0.0, %v3421
      %v3423 = vpop.f32.mrf.mxu0
      %v3424 = vadd.f32 0.0, %v3423
      %3425 = vdwg.mxu0
      %3426 = vmatpush.bf16.msra.mxu0 %v3390
      %3427 = vmatpush.bf16.msra.mxu0 %v3389
      %3428 = vmatpush.bf16.msra.mxu0 %v3388
      %3429 = vmatpush.bf16.msra.mxu0 %v3387
      %3430 = vmatpush.bf16.msra.mxu0 %v3386
      %3431 = vmatpush.bf16.msra.mxu0 %v3385
      %3432 = vmatpush.bf16.msra.mxu0 %v3384
      %3433 = vmatpush.bf16.msra.mxu0 %v3383
      %3434 = vmatmul.bf16.gmra.mxu0 %v3304
      %v3435 = vpop.f32.mrf.mxu0
      %v3436 = vadd.f32 %v3417, %v3435
      %v3437 = vpop.f32.mrf.mxu0
      %v3438 = vadd.f32 %v3419, %v3437
      %3439 = vmatmul.bf16.gmra.mxu0 %v3306
      %v3440 = vpop.f32.mrf.mxu0
      %v3441 = vadd.f32 %v3422, %v3440
      %v3442 = vpop.f32.mrf.mxu0
      %v3443 = vadd.f32 %v3424, %v3442
      %3444 = vdwg.mxu0
      %v3445 = vadd.f32 %v3254, %v3436
      %v3446 = vadd.f32 %v3255, %v3438
      %v3447 = vadd.f32 %v3256, %v3441
      %v3448 = vadd.f32 %v3257, %v3443
      %s3449 = scalar_lea.vmem %s6, 640
      %v3450 = vld [vmem:[%s3449] sm:$0xf]
      %v3451 = vld [vmem:[%s3449 + $0x4] sm:$0xf]
      %v3452 = vld [vmem:[%s3449 + $0x8] sm:$0xf]
      %v3453 = vld [vmem:[%s3449 + $0xc] sm:$0xf]
      %v3454 = vld [vmem:[%s3449 + $0x10] sm:$0xf]
      %v3455 = vld [vmem:[%s3449 + $0x14] sm:$0xf]
      %v3456 = vld [vmem:[%s3449 + $0x18] sm:$0xf]
      %v3457 = vld [vmem:[%s3449 + $0x1c] sm:$0xf]
      %v3458 = vld [vmem:[%s3449 + $0x20] sm:$0xf]
      %v3459 = vld [vmem:[%s3449 + $0x24] sm:$0xf]
      %v3460 = vld [vmem:[%s3449 + $0x28] sm:$0xf]
      %v3461 = vld [vmem:[%s3449 + $0x2c] sm:$0xf]
      %v3462 = vld [vmem:[%s3449 + $0x30] sm:$0xf]
      %v3463 = vld [vmem:[%s3449 + $0x34] sm:$0xf]
      %v3464 = vld [vmem:[%s3449 + $0x38] sm:$0xf]
      %v3465 = vld [vmem:[%s3449 + $0x3c] sm:$0xf]
      %v3466 = vld [vmem:[%s3449 + $0x40] sm:$0xf]
      %v3467 = vld [vmem:[%s3449 + $0x44] sm:$0xf]
      %v3468 = vld [vmem:[%s3449 + $0x48] sm:$0xf]
      %v3469 = vld [vmem:[%s3449 + $0x4c] sm:$0xf]
      %v3470 = vld [vmem:[%s3449 + $0x50] sm:$0xf]
      %v3471 = vld [vmem:[%s3449 + $0x54] sm:$0xf]
      %v3472 = vld [vmem:[%s3449 + $0x58] sm:$0xf]
      %v3473 = vld [vmem:[%s3449 + $0x5c] sm:$0xf]
      %v3474 = vld [vmem:[%s3449 + $0x60] sm:$0xf]
      %v3475 = vld [vmem:[%s3449 + $0x64] sm:$0xf]
      %v3476 = vld [vmem:[%s3449 + $0x68] sm:$0xf]
      %v3477 = vld [vmem:[%s3449 + $0x6c] sm:$0xf]
      %v3478 = vld [vmem:[%s3449 + $0x70] sm:$0xf]
      %v3479 = vld [vmem:[%s3449 + $0x74] sm:$0xf]
      %v3480 = vld [vmem:[%s3449 + $0x78] sm:$0xf]
      %v3481 = vld [vmem:[%s3449 + $0x7c] sm:$0xf]
      %v3486 = vunpack.c.l.b16 %v2491
      %v3487 = vunpack.c.h.b16 %v2491
      %v3488 = vunpack.c.l.b16 %v2492
      %v3489 = vunpack.c.h.b16 %v2492
      %v3490 = vunpack.c.l.b16 %v2493
      %v3491 = vunpack.c.h.b16 %v2493
      %v3492 = vunpack.c.l.b16 %v2494
      %v3493 = vunpack.c.h.b16 %v2494
      %v3494 = vpack.c.b16 %v3488, %v3486
      %v3495 = vpack.c.b16 %v3489, %v3487
      %v3496 = vpack.c.b16 %v3492, %v3490
      %v3497 = vpack.c.b16 %v3493, %v3491
      %v3534 = vunpack.c.l.b16 %v3450
      %v3535 = vunpack.c.l.b16 %v3451
      %v3536 = vunpack.c.l.b16 %v3452
      %v3537 = vunpack.c.l.b16 %v3453
      %v3538 = vunpack.c.l.b16 %v3454
      %v3539 = vunpack.c.l.b16 %v3455
      %v3540 = vunpack.c.l.b16 %v3456
      %v3541 = vunpack.c.l.b16 %v3457
      %v3542 = vunpack.c.l.b16 %v3458
      %v3543 = vunpack.c.l.b16 %v3459
      %v3544 = vunpack.c.l.b16 %v3460
      %v3545 = vunpack.c.l.b16 %v3461
      %v3546 = vunpack.c.l.b16 %v3462
      %v3547 = vunpack.c.l.b16 %v3463
      %v3548 = vunpack.c.l.b16 %v3464
      %v3549 = vunpack.c.l.b16 %v3465
      %v3550 = vunpack.c.l.b16 %v3466
      %v3551 = vunpack.c.l.b16 %v3467
      %v3552 = vunpack.c.l.b16 %v3468
      %v3553 = vunpack.c.l.b16 %v3469
      %v3554 = vunpack.c.l.b16 %v3470
      %v3555 = vunpack.c.l.b16 %v3471
      %v3556 = vunpack.c.l.b16 %v3472
      %v3557 = vunpack.c.l.b16 %v3473
      %v3558 = vunpack.c.l.b16 %v3474
      %v3559 = vunpack.c.l.b16 %v3475
      %v3560 = vunpack.c.l.b16 %v3476
      %v3561 = vunpack.c.l.b16 %v3477
      %v3562 = vunpack.c.l.b16 %v3478
      %v3563 = vunpack.c.l.b16 %v3479
      %v3564 = vunpack.c.l.b16 %v3480
      %v3565 = vunpack.c.l.b16 %v3481
      %v3566 = vpack.c.b16 %v3535, %v3534
      %v3567 = vpack.c.b16 %v3537, %v3536
      %v3568 = vpack.c.b16 %v3539, %v3538
      %v3569 = vpack.c.b16 %v3541, %v3540
      %v3570 = vpack.c.b16 %v3543, %v3542
      %v3571 = vpack.c.b16 %v3545, %v3544
      %v3572 = vpack.c.b16 %v3547, %v3546
      %v3573 = vpack.c.b16 %v3549, %v3548
      %v3574 = vpack.c.b16 %v3551, %v3550
      %v3575 = vpack.c.b16 %v3553, %v3552
      %v3576 = vpack.c.b16 %v3555, %v3554
      %v3577 = vpack.c.b16 %v3557, %v3556
      %v3578 = vpack.c.b16 %v3559, %v3558
      %v3579 = vpack.c.b16 %v3561, %v3560
      %v3580 = vpack.c.b16 %v3563, %v3562
      %v3581 = vpack.c.b16 %v3565, %v3564
      %3598 = vmatpush.bf16.msra.mxu0 %v3573
      %3599 = vmatpush.bf16.msra.mxu0 %v3572
      %3600 = vmatpush.bf16.msra.mxu0 %v3571
      %3601 = vmatpush.bf16.msra.mxu0 %v3570
      %3602 = vmatpush.bf16.msra.mxu0 %v3569
      %3603 = vmatpush.bf16.msra.mxu0 %v3568
      %3604 = vmatpush.bf16.msra.mxu0 %v3567
      %3605 = vmatpush.bf16.msra.mxu0 %v3566
      %3606 = vmatmul.bf16.gmra.mxu0 %v3494
      %v3607 = vpop.f32.mrf.mxu0
      %v3608 = vadd.f32 0.0, %v3607
      %v3609 = vpop.f32.mrf.mxu0
      %v3610 = vadd.f32 0.0, %v3609
      %3611 = vmatmul.bf16.gmra.mxu0 %v3496
      %v3612 = vpop.f32.mrf.mxu0
      %v3613 = vadd.f32 0.0, %v3612
      %v3614 = vpop.f32.mrf.mxu0
      %v3615 = vadd.f32 0.0, %v3614
      %3616 = vdwg.mxu0
      %3617 = vmatpush.bf16.msra.mxu0 %v3581
      %3618 = vmatpush.bf16.msra.mxu0 %v3580
      %3619 = vmatpush.bf16.msra.mxu0 %v3579
      %3620 = vmatpush.bf16.msra.mxu0 %v3578
      %3621 = vmatpush.bf16.msra.mxu0 %v3577
      %3622 = vmatpush.bf16.msra.mxu0 %v3576
      %3623 = vmatpush.bf16.msra.mxu0 %v3575
      %3624 = vmatpush.bf16.msra.mxu0 %v3574
      %3625 = vmatmul.bf16.gmra.mxu0 %v3495
      %v3626 = vpop.f32.mrf.mxu0
      %v3627 = vadd.f32 %v3608, %v3626
      %v3628 = vpop.f32.mrf.mxu0
      %v3629 = vadd.f32 %v3610, %v3628
      %3630 = vmatmul.bf16.gmra.mxu0 %v3497
      %v3631 = vpop.f32.mrf.mxu0
      %v3632 = vadd.f32 %v3613, %v3631
      %v3633 = vpop.f32.mrf.mxu0
      %v3634 = vadd.f32 %v3615, %v3633
      %3635 = vdwg.mxu0
      %v3636 = vadd.f32 %v3445, %v3627
      %v3637 = vadd.f32 %v3446, %v3629
      %v3638 = vadd.f32 %v3447, %v3632
      %v3639 = vadd.f32 %v3448, %v3634
      %s3640 = scalar_lea.vmem %s6, 768
      %v3641 = vld [vmem:[%s3640] sm:$0xf]
      %v3642 = vld [vmem:[%s3640 + $0x4] sm:$0xf]
      %v3643 = vld [vmem:[%s3640 + $0x8] sm:$0xf]
      %v3644 = vld [vmem:[%s3640 + $0xc] sm:$0xf]
      %v3645 = vld [vmem:[%s3640 + $0x10] sm:$0xf]
      %v3646 = vld [vmem:[%s3640 + $0x14] sm:$0xf]
      %v3647 = vld [vmem:[%s3640 + $0x18] sm:$0xf]
      %v3648 = vld [vmem:[%s3640 + $0x1c] sm:$0xf]
      %v3649 = vld [vmem:[%s3640 + $0x20] sm:$0xf]
      %v3650 = vld [vmem:[%s3640 + $0x24] sm:$0xf]
      %v3651 = vld [vmem:[%s3640 + $0x28] sm:$0xf]
      %v3652 = vld [vmem:[%s3640 + $0x2c] sm:$0xf]
      %v3653 = vld [vmem:[%s3640 + $0x30] sm:$0xf]
      %v3654 = vld [vmem:[%s3640 + $0x34] sm:$0xf]
      %v3655 = vld [vmem:[%s3640 + $0x38] sm:$0xf]
      %v3656 = vld [vmem:[%s3640 + $0x3c] sm:$0xf]
      %v3657 = vld [vmem:[%s3640 + $0x40] sm:$0xf]
      %v3658 = vld [vmem:[%s3640 + $0x44] sm:$0xf]
      %v3659 = vld [vmem:[%s3640 + $0x48] sm:$0xf]
      %v3660 = vld [vmem:[%s3640 + $0x4c] sm:$0xf]
      %v3661 = vld [vmem:[%s3640 + $0x50] sm:$0xf]
      %v3662 = vld [vmem:[%s3640 + $0x54] sm:$0xf]
      %v3663 = vld [vmem:[%s3640 + $0x58] sm:$0xf]
      %v3664 = vld [vmem:[%s3640 + $0x5c] sm:$0xf]
      %v3665 = vld [vmem:[%s3640 + $0x60] sm:$0xf]
      %v3666 = vld [vmem:[%s3640 + $0x64] sm:$0xf]
      %v3667 = vld [vmem:[%s3640 + $0x68] sm:$0xf]
      %v3668 = vld [vmem:[%s3640 + $0x6c] sm:$0xf]
      %v3669 = vld [vmem:[%s3640 + $0x70] sm:$0xf]
      %v3670 = vld [vmem:[%s3640 + $0x74] sm:$0xf]
      %v3671 = vld [vmem:[%s3640 + $0x78] sm:$0xf]
      %v3672 = vld [vmem:[%s3640 + $0x7c] sm:$0xf]
      %v3677 = vunpack.c.l.b16 %v2495
      %v3678 = vunpack.c.h.b16 %v2495
      %v3679 = vunpack.c.l.b16 %v2496
      %v3680 = vunpack.c.h.b16 %v2496
      %v3681 = vunpack.c.l.b16 %v2497
      %v3682 = vunpack.c.h.b16 %v2497
      %v3683 = vunpack.c.l.b16 %v2498
      %v3684 = vunpack.c.h.b16 %v2498
      %v3685 = vpack.c.b16 %v3679, %v3677
      %v3686 = vpack.c.b16 %v3680, %v3678
      %v3687 = vpack.c.b16 %v3683, %v3681
      %v3688 = vpack.c.b16 %v3684, %v3682
      %v3725 = vunpack.c.l.b16 %v3641
      %v3726 = vunpack.c.l.b16 %v3642
      %v3727 = vunpack.c.l.b16 %v3643
      %v3728 = vunpack.c.l.b16 %v3644
      %v3729 = vunpack.c.l.b16 %v3645
      %v3730 = vunpack.c.l.b16 %v3646
      %v3731 = vunpack.c.l.b16 %v3647
      %v3732 = vunpack.c.l.b16 %v3648
      %v3733 = vunpack.c.l.b16 %v3649
      %v3734 = vunpack.c.l.b16 %v3650
      %v3735 = vunpack.c.l.b16 %v3651
      %v3736 = vunpack.c.l.b16 %v3652
      %v3737 = vunpack.c.l.b16 %v3653
      %v3738 = vunpack.c.l.b16 %v3654
      %v3739 = vunpack.c.l.b16 %v3655
      %v3740 = vunpack.c.l.b16 %v3656
      %v3741 = vunpack.c.l.b16 %v3657
      %v3742 = vunpack.c.l.b16 %v3658
      %v3743 = vunpack.c.l.b16 %v3659
      %v3744 = vunpack.c.l.b16 %v3660
      %v3745 = vunpack.c.l.b16 %v3661
      %v3746 = vunpack.c.l.b16 %v3662
      %v3747 = vunpack.c.l.b16 %v3663
      %v3748 = vunpack.c.l.b16 %v3664
      %v3749 = vunpack.c.l.b16 %v3665
      %v3750 = vunpack.c.l.b16 %v3666
      %v3751 = vunpack.c.l.b16 %v3667
      %v3752 = vunpack.c.l.b16 %v3668
      %v3753 = vunpack.c.l.b16 %v3669
      %v3754 = vunpack.c.l.b16 %v3670
      %v3755 = vunpack.c.l.b16 %v3671
      %v3756 = vunpack.c.l.b16 %v3672
      %v3757 = vpack.c.b16 %v3726, %v3725
      %v3758 = vpack.c.b16 %v3728, %v3727
      %v3759 = vpack.c.b16 %v3730, %v3729
      %v3760 = vpack.c.b16 %v3732, %v3731
      %v3761 = vpack.c.b16 %v3734, %v3733
      %v3762 = vpack.c.b16 %v3736, %v3735
      %v3763 = vpack.c.b16 %v3738, %v3737
      %v3764 = vpack.c.b16 %v3740, %v3739
      %v3765 = vpack.c.b16 %v3742, %v3741
      %v3766 = vpack.c.b16 %v3744, %v3743
      %v3767 = vpack.c.b16 %v3746, %v3745
      %v3768 = vpack.c.b16 %v3748, %v3747
      %v3769 = vpack.c.b16 %v3750, %v3749
      %v3770 = vpack.c.b16 %v3752, %v3751
      %v3771 = vpack.c.b16 %v3754, %v3753
      %v3772 = vpack.c.b16 %v3756, %v3755
      %3789 = vmatpush.bf16.msra.mxu0 %v3764
      %3790 = vmatpush.bf16.msra.mxu0 %v3763
      %3791 = vmatpush.bf16.msra.mxu0 %v3762
      %3792 = vmatpush.bf16.msra.mxu0 %v3761
      %3793 = vmatpush.bf16.msra.mxu0 %v3760
      %3794 = vmatpush.bf16.msra.mxu0 %v3759
      %3795 = vmatpush.bf16.msra.mxu0 %v3758
      %3796 = vmatpush.bf16.msra.mxu0 %v3757
      %3797 = vmatmul.bf16.gmra.mxu0 %v3685
      %v3798 = vpop.f32.mrf.mxu0
      %v3799 = vadd.f32 0.0, %v3798
      %v3800 = vpop.f32.mrf.mxu0
      %v3801 = vadd.f32 0.0, %v3800
      %3802 = vmatmul.bf16.gmra.mxu0 %v3687
      %v3803 = vpop.f32.mrf.mxu0
      %v3804 = vadd.f32 0.0, %v3803
      %v3805 = vpop.f32.mrf.mxu0
      %v3806 = vadd.f32 0.0, %v3805
      %3807 = vdwg.mxu0
      %3808 = vmatpush.bf16.msra.mxu0 %v3772
      %3809 = vmatpush.bf16.msra.mxu0 %v3771
      %3810 = vmatpush.bf16.msra.mxu0 %v3770
      %3811 = vmatpush.bf16.msra.mxu0 %v3769
      %3812 = vmatpush.bf16.msra.mxu0 %v3768
      %3813 = vmatpush.bf16.msra.mxu0 %v3767
      %3814 = vmatpush.bf16.msra.mxu0 %v3766
      %3815 = vmatpush.bf16.msra.mxu0 %v3765
      %3816 = vmatmul.bf16.gmra.mxu0 %v3686
      %v3817 = vpop.f32.mrf.mxu0
      %v3818 = vadd.f32 %v3799, %v3817
      %v3819 = vpop.f32.mrf.mxu0
      %v3820 = vadd.f32 %v3801, %v3819
      %3821 = vmatmul.bf16.gmra.mxu0 %v3688
      %v3822 = vpop.f32.mrf.mxu0
      %v3823 = vadd.f32 %v3804, %v3822
      %v3824 = vpop.f32.mrf.mxu0
      %v3825 = vadd.f32 %v3806, %v3824
      %3826 = vdwg.mxu0
      %v3827 = vadd.f32 %v3636, %v3818
      %v3828 = vadd.f32 %v3637, %v3820
      %v3829 = vadd.f32 %v3638, %v3823
      %v3830 = vadd.f32 %v3639, %v3825
      %s3831 = scalar_lea.vmem %s6, 896
      %v3832 = vld [vmem:[%s3831] sm:$0xf]
      %v3833 = vld [vmem:[%s3831 + $0x4] sm:$0xf]
      %v3834 = vld [vmem:[%s3831 + $0x8] sm:$0xf]
      %v3835 = vld [vmem:[%s3831 + $0xc] sm:$0xf]
      %v3836 = vld [vmem:[%s3831 + $0x10] sm:$0xf]
      %v3837 = vld [vmem:[%s3831 + $0x14] sm:$0xf]
      %v3838 = vld [vmem:[%s3831 + $0x18] sm:$0xf]
      %v3839 = vld [vmem:[%s3831 + $0x1c] sm:$0xf]
      %v3840 = vld [vmem:[%s3831 + $0x20] sm:$0xf]
      %v3841 = vld [vmem:[%s3831 + $0x24] sm:$0xf]
      %v3842 = vld [vmem:[%s3831 + $0x28] sm:$0xf]
      %v3843 = vld [vmem:[%s3831 + $0x2c] sm:$0xf]
      %v3844 = vld [vmem:[%s3831 + $0x30] sm:$0xf]
      %v3845 = vld [vmem:[%s3831 + $0x34] sm:$0xf]
      %v3846 = vld [vmem:[%s3831 + $0x38] sm:$0xf]
      %v3847 = vld [vmem:[%s3831 + $0x3c] sm:$0xf]
      %v3848 = vld [vmem:[%s3831 + $0x40] sm:$0xf]
      %v3849 = vld [vmem:[%s3831 + $0x44] sm:$0xf]
      %v3850 = vld [vmem:[%s3831 + $0x48] sm:$0xf]
      %v3851 = vld [vmem:[%s3831 + $0x4c] sm:$0xf]
      %v3852 = vld [vmem:[%s3831 + $0x50] sm:$0xf]
      %v3853 = vld [vmem:[%s3831 + $0x54] sm:$0xf]
      %v3854 = vld [vmem:[%s3831 + $0x58] sm:$0xf]
      %v3855 = vld [vmem:[%s3831 + $0x5c] sm:$0xf]
      %v3856 = vld [vmem:[%s3831 + $0x60] sm:$0xf]
      %v3857 = vld [vmem:[%s3831 + $0x64] sm:$0xf]
      %v3858 = vld [vmem:[%s3831 + $0x68] sm:$0xf]
      %v3859 = vld [vmem:[%s3831 + $0x6c] sm:$0xf]
      %v3860 = vld [vmem:[%s3831 + $0x70] sm:$0xf]
      %v3861 = vld [vmem:[%s3831 + $0x74] sm:$0xf]
      %v3862 = vld [vmem:[%s3831 + $0x78] sm:$0xf]
      %v3863 = vld [vmem:[%s3831 + $0x7c] sm:$0xf]
      %v3868 = vunpack.c.l.b16 %v2499
      %v3869 = vunpack.c.h.b16 %v2499
      %v3870 = vunpack.c.l.b16 %v2500
      %v3871 = vunpack.c.h.b16 %v2500
      %v3872 = vunpack.c.l.b16 %v2501
      %v3873 = vunpack.c.h.b16 %v2501
      %v3874 = vunpack.c.l.b16 %v2502
      %v3875 = vunpack.c.h.b16 %v2502
      %v3876 = vpack.c.b16 %v3870, %v3868
      %v3877 = vpack.c.b16 %v3871, %v3869
      %v3878 = vpack.c.b16 %v3874, %v3872
      %v3879 = vpack.c.b16 %v3875, %v3873
      %v3916 = vunpack.c.l.b16 %v3832
      %v3917 = vunpack.c.l.b16 %v3833
      %v3918 = vunpack.c.l.b16 %v3834
      %v3919 = vunpack.c.l.b16 %v3835
      %v3920 = vunpack.c.l.b16 %v3836
      %v3921 = vunpack.c.l.b16 %v3837
      %v3922 = vunpack.c.l.b16 %v3838
      %v3923 = vunpack.c.l.b16 %v3839
      %v3924 = vunpack.c.l.b16 %v3840
      %v3925 = vunpack.c.l.b16 %v3841
      %v3926 = vunpack.c.l.b16 %v3842
      %v3927 = vunpack.c.l.b16 %v3843
      %v3928 = vunpack.c.l.b16 %v3844
      %v3929 = vunpack.c.l.b16 %v3845
      %v3930 = vunpack.c.l.b16 %v3846
      %v3931 = vunpack.c.l.b16 %v3847
      %v3932 = vunpack.c.l.b16 %v3848
      %v3933 = vunpack.c.l.b16 %v3849
      %v3934 = vunpack.c.l.b16 %v3850
      %v3935 = vunpack.c.l.b16 %v3851
      %v3936 = vunpack.c.l.b16 %v3852
      %v3937 = vunpack.c.l.b16 %v3853
      %v3938 = vunpack.c.l.b16 %v3854
      %v3939 = vunpack.c.l.b16 %v3855
      %v3940 = vunpack.c.l.b16 %v3856
      %v3941 = vunpack.c.l.b16 %v3857
      %v3942 = vunpack.c.l.b16 %v3858
      %v3943 = vunpack.c.l.b16 %v3859
      %v3944 = vunpack.c.l.b16 %v3860
      %v3945 = vunpack.c.l.b16 %v3861
      %v3946 = vunpack.c.l.b16 %v3862
      %v3947 = vunpack.c.l.b16 %v3863
      %v3948 = vpack.c.b16 %v3917, %v3916
      %v3949 = vpack.c.b16 %v3919, %v3918
      %v3950 = vpack.c.b16 %v3921, %v3920
      %v3951 = vpack.c.b16 %v3923, %v3922
      %v3952 = vpack.c.b16 %v3925, %v3924
      %v3953 = vpack.c.b16 %v3927, %v3926
      %v3954 = vpack.c.b16 %v3929, %v3928
      %v3955 = vpack.c.b16 %v3931, %v3930
      %v3956 = vpack.c.b16 %v3933, %v3932
      %v3957 = vpack.c.b16 %v3935, %v3934
      %v3958 = vpack.c.b16 %v3937, %v3936
      %v3959 = vpack.c.b16 %v3939, %v3938
      %v3960 = vpack.c.b16 %v3941, %v3940
      %v3961 = vpack.c.b16 %v3943, %v3942
      %v3962 = vpack.c.b16 %v3945, %v3944
      %v3963 = vpack.c.b16 %v3947, %v3946
      %3980 = vmatpush.bf16.msra.mxu0 %v3955
      %3981 = vmatpush.bf16.msra.mxu0 %v3954
      %3982 = vmatpush.bf16.msra.mxu0 %v3953
      %3983 = vmatpush.bf16.msra.mxu0 %v3952
      %3984 = vmatpush.bf16.msra.mxu0 %v3951
      %3985 = vmatpush.bf16.msra.mxu0 %v3950
      %3986 = vmatpush.bf16.msra.mxu0 %v3949
      %3987 = vmatpush.bf16.msra.mxu0 %v3948
      %3988 = vmatmul.bf16.gmra.mxu0 %v3876
      %v3989 = vpop.f32.mrf.mxu0
      %v3990 = vadd.f32 0.0, %v3989
      %v3991 = vpop.f32.mrf.mxu0
      %v3992 = vadd.f32 0.0, %v3991
      %3993 = vmatmul.bf16.gmra.mxu0 %v3878
      %v3994 = vpop.f32.mrf.mxu0
      %v3995 = vadd.f32 0.0, %v3994
      %v3996 = vpop.f32.mrf.mxu0
      %v3997 = vadd.f32 0.0, %v3996
      %3998 = vdwg.mxu0
      %3999 = vmatpush.bf16.msra.mxu0 %v3963
      %4000 = vmatpush.bf16.msra.mxu0 %v3962
      %4001 = vmatpush.bf16.msra.mxu0 %v3961
      %4002 = vmatpush.bf16.msra.mxu0 %v3960
      %4003 = vmatpush.bf16.msra.mxu0 %v3959
      %4004 = vmatpush.bf16.msra.mxu0 %v3958
      %4005 = vmatpush.bf16.msra.mxu0 %v3957
      %4006 = vmatpush.bf16.msra.mxu0 %v3956
      %4007 = vmatmul.bf16.gmra.mxu0 %v3877
      %v4008 = vpop.f32.mrf.mxu0
      %v4009 = vadd.f32 %v3990, %v4008
      %v4010 = vpop.f32.mrf.mxu0
      %v4011 = vadd.f32 %v3992, %v4010
      %4012 = vmatmul.bf16.gmra.mxu0 %v3879
      %v4013 = vpop.f32.mrf.mxu0
      %v4014 = vadd.f32 %v3995, %v4013
      %v4015 = vpop.f32.mrf.mxu0
      %v4016 = vadd.f32 %v3997, %v4015
      %4017 = vdwg.mxu0
      %v4018 = vadd.f32 %v3827, %v4009
      %v4019 = vadd.f32 %v3828, %v4011
      %v4020 = vadd.f32 %v3829, %v4014
      %v4021 = vadd.f32 %v3830, %v4016
      %v4022 = vld [vmem:[%s7] sm:$0x1]
      %v4024 = vperm.slane %v4022, 0
      %v4026 = vadd.f32 %v4018, %v4024
      %v4027 = vadd.f32 %v4019, %v4024
      %v4028 = vadd.f32 %v4020, %v4024
      %v4029 = vadd.f32 %v4021, %v4024
      %v4030 = vmax.f32 %v4026, 0.0
      %v4031 = vmax.f32 %v4027, 0.0
      %v4032 = vmax.f32 %v4028, 0.0
      %v4033 = vmax.f32 %v4029, 0.0
      %v4034 = vpack.c.bf16 %v4031, %v4030
      %v4035 = vpack.c.bf16 %v4033, %v4032
      %v4036 = vld [vmem:[%s8] sm:$0xf]
      %v4037 = vld [vmem:[%s8 + $0x4] sm:$0xf]
      %v4038 = vld [vmem:[%s8 + $0x8] sm:$0xf]
      %v4039 = vld [vmem:[%s8 + $0xc] sm:$0xf]
      %v4040 = vld [vmem:[%s8 + $0x10] sm:$0xf]
      %v4041 = vld [vmem:[%s8 + $0x14] sm:$0xf]
      %v4042 = vld [vmem:[%s8 + $0x18] sm:$0xf]
      %v4043 = vld [vmem:[%s8 + $0x1c] sm:$0xf]
      %v4044 = vld [vmem:[%s8 + $0x20] sm:$0xf]
      %v4045 = vld [vmem:[%s8 + $0x24] sm:$0xf]
      %v4046 = vld [vmem:[%s8 + $0x28] sm:$0xf]
      %v4047 = vld [vmem:[%s8 + $0x2c] sm:$0xf]
      %v4048 = vld [vmem:[%s8 + $0x30] sm:$0xf]
      %v4049 = vld [vmem:[%s8 + $0x34] sm:$0xf]
      %v4050 = vld [vmem:[%s8 + $0x38] sm:$0xf]
      %v4051 = vld [vmem:[%s8 + $0x3c] sm:$0xf]
      %v4052 = vld [vmem:[%s9] sm:$0x1]
      %v4054 = vperm.slane %v4052, 0
      %v4072 = vunpack.c.l.b16 %v4036
      %v4073 = vunpack.c.l.b16 %v4037
      %v4074 = vunpack.c.l.b16 %v4038
      %v4075 = vunpack.c.l.b16 %v4039
      %v4076 = vunpack.c.l.b16 %v4040
      %v4077 = vunpack.c.l.b16 %v4041
      %v4078 = vunpack.c.l.b16 %v4042
      %v4079 = vunpack.c.l.b16 %v4043
      %v4080 = vunpack.c.l.b16 %v4044
      %v4081 = vunpack.c.l.b16 %v4045
      %v4082 = vunpack.c.l.b16 %v4046
      %v4083 = vunpack.c.l.b16 %v4047
      %v4084 = vunpack.c.l.b16 %v4048
      %v4085 = vunpack.c.l.b16 %v4049
      %v4086 = vunpack.c.l.b16 %v4050
      %v4087 = vunpack.c.l.b16 %v4051
      %v4088 = vpack.c.b16 %v4073, %v4072
      %v4089 = vpack.c.b16 %v4075, %v4074
      %v4090 = vpack.c.b16 %v4077, %v4076
      %v4091 = vpack.c.b16 %v4079, %v4078
      %v4092 = vpack.c.b16 %v4081, %v4080
      %v4093 = vpack.c.b16 %v4083, %v4082
      %v4094 = vpack.c.b16 %v4085, %v4084
      %v4095 = vpack.c.b16 %v4087, %v4086
      %4104 = vmatpush.bf16.msra.mxu0 %v4095
      %4105 = vmatpush.bf16.msra.mxu0 %v4094
      %4106 = vmatpush.bf16.msra.mxu0 %v4093
      %4107 = vmatpush.bf16.msra.mxu0 %v4092
      %4108 = vmatpush.bf16.msra.mxu0 %v4091
      %4109 = vmatpush.bf16.msra.mxu0 %v4090
      %4110 = vmatpush.bf16.msra.mxu0 %v4089
      %4111 = vmatpush.bf16.msra.mxu0 %v4088
      %4112 = vmatmul.bf16.gmra.mxu0 %v4034
      %v4113 = vpop.f32.mrf.mxu0
      %v4114 = vadd.f32 %v4054, %v4113
      %v4115 = vpop.f32.mrf.mxu0
      %v4116 = vadd.f32 %v4054, %v4115
      %4117 = vmatmul.bf16.gmra.mxu0 %v4035
      %v4118 = vpop.f32.mrf.mxu0
      %v4119 = vadd.f32 %v4054, %v4118
      %v4120 = vpop.f32.mrf.mxu0
      %v4121 = vadd.f32 %v4054, %v4120
      %4122 = vdwg.mxu0
      %v4123 = vxor.u32 %v4114, 2147483648
      %v4124 = vxor.u32 %v4116, 2147483648
      %v4125 = vxor.u32 %v4119, 2147483648
      %v4126 = vxor.u32 %v4121, 2147483648
      %v4127 = vmul.f32 %v4123, 1.442695
      %v4128 = vpow.pop %v4127
      %v4129 = vmul.f32 %v4124, 1.442695
      %v4130 = vpow.pop %v4129
      %v4131 = vmul.f32 %v4125, 1.442695
      %v4132 = vpow.pop %v4131
      %v4133 = vmul.f32 %v4126, 1.442695
      %v4134 = vpow.pop %v4133
      %v4135 = vadd.f32 %v4128, 1.0
      %v4136 = vadd.f32 %v4130, 1.0
      %v4137 = vadd.f32 %v4132, 1.0
      %v4138 = vadd.f32 %v4134, 1.0
      %v4139 = vrcp.pop %v4135
      %v4140 = vmul.f32 %v4135, %v4139
      %v4141 = vsub.f32 1.0, %v4140
      %v4142 = vmul.f32 %v4139, %v4141
      %v4143 = vadd.f32 %v4139, %v4142
      %vm4144 = vweird.f32 %v4135
      %vm4145 = vweird.f32 %v4139
      %vm4146 = vmor %vm4144, %vm4145
      %v4147 = vsel %vm4146, %v4139, %v4143
      %v4148 = vand.u32 2147483647, %v4135
      %vm4149 = vcmp.eq.f32.partialorder %v4148, 8.507059e+37
      %v4150 = vand.u32 %v4135, 2147483648
      %v4151 = vor.u32 1.1754944e-38, %v4150
      %v4152 = vsel %vm4149, %v4151, %v4147
      %v4153 = vmul.f32 1.0, %v4152
      %v4154 = vrcp.pop %v4136
      %v4155 = vmul.f32 %v4136, %v4154
      %v4156 = vsub.f32 1.0, %v4155
      %v4157 = vmul.f32 %v4154, %v4156
      %v4158 = vadd.f32 %v4154, %v4157
      %vm4159 = vweird.f32 %v4136
      %vm4160 = vweird.f32 %v4154
      %vm4161 = vmor %vm4159, %vm4160
      %v4162 = vsel %vm4161, %v4154, %v4158
      %v4163 = vand.u32 2147483647, %v4136
      %vm4164 = vcmp.eq.f32.partialorder %v4163, 8.507059e+37
      %v4165 = vand.u32 %v4136, 2147483648
      %v4166 = vor.u32 1.1754944e-38, %v4165
      %v4167 = vsel %vm4164, %v4166, %v4162
      %v4168 = vmul.f32 1.0, %v4167
      %v4169 = vrcp.pop %v4137
      %v4170 = vmul.f32 %v4137, %v4169
      %v4171 = vsub.f32 1.0, %v4170
      %v4172 = vmul.f32 %v4169, %v4171
      %v4173 = vadd.f32 %v4169, %v4172
      %vm4174 = vweird.f32 %v4137
      %vm4175 = vweird.f32 %v4169
      %vm4176 = vmor %vm4174, %vm4175
      %v4177 = vsel %vm4176, %v4169, %v4173
      %v4178 = vand.u32 2147483647, %v4137
      %vm4179 = vcmp.eq.f32.partialorder %v4178, 8.507059e+37
      %v4180 = vand.u32 %v4137, 2147483648
      %v4181 = vor.u32 1.1754944e-38, %v4180
      %v4182 = vsel %vm4179, %v4181, %v4177
      %v4183 = vmul.f32 1.0, %v4182
      %v4184 = vrcp.pop %v4138
      %v4185 = vmul.f32 %v4138, %v4184
      %v4186 = vsub.f32 1.0, %v4185
      %v4187 = vmul.f32 %v4184, %v4186
      %v4188 = vadd.f32 %v4184, %v4187
      %vm4189 = vweird.f32 %v4138
      %vm4190 = vweird.f32 %v4184
      %vm4191 = vmor %vm4189, %vm4190
      %v4192 = vsel %vm4191, %v4184, %v4188
      %v4193 = vand.u32 2147483647, %v4138
      %vm4194 = vcmp.eq.f32.partialorder %v4193, 8.507059e+37
      %v4195 = vand.u32 %v4138, 2147483648
      %v4196 = vor.u32 1.1754944e-38, %v4195
      %v4197 = vsel %vm4194, %v4196, %v4192
      %v4198 = vmul.f32 1.0, %v4197
      %4199 = vst [vmem:[%s379] sm:$0xff] %v4153
      %4200 = vst [vmem:[%s379 + $0x8] sm:$0xff] %v4168
      %4201 = vst [vmem:[%s379 + $0x10] sm:$0xff] %v4183
      %4202 = vst [vmem:[%s379 + $0x18] sm:$0xff] %v4198
      %s4203 = smul.u32 4, %s21
      %p4204 = scmp.lt.s32.totalorder %s4203, 7
      %s4205 = scalar_select %p4204, %s4203, 7
      %s4206 = smul.addr %s4205, 8
      %s4207 = scalar_lea.vmem %s10, %s4206
      // Predicated region
      $region61: #{gcn_forward.1} parent=59 // pred_check
        %p4208 = pneg %p259
      $region62: #{gcn_forward.1} parent=59 // pred_check_branch
        %4210 = sbr.rel (%p4208) target = $region64
      $region63: #{gcn_forward.1} parent=59 // pred_region
        %s4211 = smul.u32 4, %s21
      $region64: #{gcn_forward.1} parent=59 // pred_fallthru
        _
    $region60: #{gcn_forward.1} parent=5 // pred_fallthru
      _
    %p4212 = scmp.le.s32.totalorder 2, %s16
    // Predicated region
    $region65: #{gcn_forward.1} parent=5 // pred_check
      %p4213 = pneg %p4212
    $region66: #{gcn_forward.1} parent=5 // pred_check_branch
      %4215 = sbr.rel (%p4213) target = $region68
    $region67: #{gcn_forward.1} parent=5 // pred_region
      %s4216 = ssub.s32 %s16, 2
      // Predicated region
      $region69: #{gcn_forward.1} parent=67 // pred_check
        %p4217 = pneg %p265
      $region70: #{gcn_forward.1} parent=67 // pred_check_branch
        %4219 = sbr.rel (%p4217) target = $region72
      $region71: #{gcn_forward.1} parent=67 // pred_region
        %s4220 = smul.u32 4, %s22
        %p4221 = scmp.lt.s32.totalorder %s4220, 7
        %s4222 = scalar_select %p4221, %s4220, 7
        %s4223 = smul.addr %s4222, 8
        %s4224 = scalar_lea.vmem %s10, %s4223
      $region72: #{gcn_forward.1} parent=67 // pred_fallthru
        _
    $region68: #{gcn_forward.1} parent=5 // pred_fallthru
      _
  $region6: #{gcn_forward.1} parent=0 // loop_footer
    %s20 = sadd.s32 1, %s16
  $region7: #{gcn_forward.1} parent=0 // loop_footer_branch
    %15 = sbr.rel target = $region3
  $region8: #{gcn_forward.1} parent=0 // loop_exit
    _

</llo_original>
